<compile_context>
chip_gen: v6e
topology: v6e:2x2x1
jax: 0.10.0
libtpu: 0.0.40
codegen_flags: <defaults>
</compile_context>

<pallas_src>
import functools
import math

import jax
import jax.numpy as jnp
from jax.experimental import pallas as pl
from jax.experimental.pallas import tpu as pltpu  # noqa: F401  (TPU backend)

# ----------------------------- config ---------------------------------------
D_MODEL = 32
N_HEAD = 4
D_HID = 64
SEQ = 8          # text sequence length
IMG_SEQ = 16     # image-memory sequence length
BATCH = 2
EPS = 1e-5       # nn.LayerNorm default eps
HD = D_MODEL // N_HEAD

# lane offsets into the (32, 384) bf16 weight slab
W_QKV_S = 0          # width 3*D : fused self-attn [Q|K|V]  (Q pre-scaled)
W_O_S = 96           # width D
W_Q_C = 128          # width D   (pre-scaled)
W_KV_C = 160         # width 2*D : fused cross-attn [K|V]
W_O_C = 224          # width D
W_G_X = 256          # width D   gate fc, text-feature half
W_G_C = 288          # width D   gate fc, image-feature half
W_FF1 = 320          # width D_HID
W_LANES = 384        # total = 3 * 128 lanes (lane-dense)

# row indices into the (20, 32) f32 bias / LayerNorm slab
(G1, B1, G2, B2, G3, B3, GG, GB,
 BQ_S, BK_S, BV_S, BO_S, BQ_C, BK_C, BV_C, BO_C,
 BG, BF1A, BF1B, BF2) = range(20)


# --------------------------- exact GELU helpers -------------------------------
def _erf(z):
    # Abramowitz & Stegun 7.1.26 polynomial, |error| <= 1.5e-7 (f32-exact).
    # Avoids relying on a lax.erf lowering inside Mosaic.
    a1, a2, a3, a4, a5 = 0.254829592, -0.284496736, 1.421413741, -1.453152027, 1.061405429
    pp = 0.3275911
    az = jnp.abs(z)
    t = 1.0 / (1.0 + pp * az)
    poly = ((((a5 * t + a4) * t + a3) * t + a2) * t + a1) * t
    e = 1.0 - poly * jnp.exp(-az * az)
    return jnp.where(z >= 0, e, -e)


def _gelu_exact(x):
    # Matches PyTorch nn.GELU() default (exact erf formulation).
    return 0.5 * x * (1.0 + _erf(x * (1.0 / math.sqrt(2.0))))


# ------------------------------- kernel --------------------------------------
@functools.lru_cache(maxsize=None)
def _make_kernel(B, S, Si, has_mask):
    D, H, hd = D_MODEL, N_HEAD, HD
    bf16, f32 = jnp.bfloat16, jnp.float32

    def kernel(*refs):
        if has_mask:
            x_ref, img_ref, mask_ref, w_ref, w2_ref, b_ref, out_ref = refs
            self_mask = mask_ref[...]                 # (S, S) additive float mask
        else:
            x_ref, img_ref, w_ref, w2_ref, b_ref, out_ref = refs
            self_mask = None

        def wcols(off, width):                        # (D, width) bf16 weight block
            return w_ref[:, off:off + width]

        def brow(i):                                  # (1, D) f32 bias / LN row
            return b_ref[i:i + 1, :]

        def layernorm(v, gi, bi):
            mu = jnp.mean(v, axis=-1, keepdims=True)
            c = v - mu
            var = jnp.mean(c * c, axis=-1, keepdims=True)
            return c * jax.lax.rsqrt(var + EPS) * brow(gi) + brow(bi)

        def softmax_last(s):
            s = s - jnp.max(s, axis=-1, keepdims=True)
            p = jnp.exp(s)
            return p / jnp.sum(p, axis=-1, keepdims=True)

        def attention(q, k, v, kv_len, wo_off, bo_idx, mask):
            # q: (B*S, D) f32; k, v: (B*kv_len, D) f32. q-scale already folded
            # into Wq/bq in pack_params.
            q3 = q.reshape(B, S, D).astype(bf16)
            k3 = k.reshape(B, kv_len, D).astype(bf16)
            v3 = v.reshape(B, kv_len, D).astype(bf16)
            heads = []
            for h in range(H):                        # tiny static head loop
                lo = h * hd
                s = jnp.einsum('bqd,bkd->bqk',
                               q3[:, :, lo:lo + hd], k3[:, :, lo:lo + hd],
                               preferred_element_type=f32)
                if mask is not None:
                    s = s + mask
                p = softmax_last(s)
                heads.append(jnp.einsum('bqk,bkd->bqd',
                                        p.astype(bf16), v3[:, :, lo:lo + hd],
                                        preferred_element_type=f32))
            # Lane-concat heads (PyTorch head ordering) -> ONE output projection.
            o = jnp.concatenate(heads, axis=-1).reshape(B * S, D)
            out = jnp.dot(o.astype(bf16), wcols(wo_off, D),
                          preferred_element_type=f32)
            return out + brow(bo_idx)

        x = x_ref[...].astype(f32)                    # (B*S, D)
        img = img_ref[...].astype(f32)                # (B*Si, D)

        # ---------------- self attention (pre-norm), fused QKV ----------------
        xn1 = layernorm(x, G1, B1)
        qkv = jnp.dot(xn1.astype(bf16), wcols(W_QKV_S, 3 * D),
                      preferred_element_type=f32)     # (B*S, 96)
        sa = attention(qkv[:, 0:D] + brow(BQ_S),
                       qkv[:, D:2 * D] + brow(BK_S),
                       qkv[:, 2 * D:3 * D] + brow(BV_S),
                       S, W_O_S, BO_S, self_mask)
        x = x + sa                                    # dropout: eval -> identity

        # ---------------- cross attention + dynamic gating ----------------
        xn2 = layernorm(x, G2, B2)
        xn2_bf = xn2.astype(bf16)
        qc = jnp.dot(xn2_bf, wcols(W_Q_C, D), preferred_element_type=f32) + brow(BQ_C)
        kv = jnp.dot(img.astype(bf16), wcols(W_KV_C, 2 * D),
                     preferred_element_type=f32)      # (B*Si, 64) fused K|V
        ca = attention(qc,
                       kv[:, 0:D] + brow(BK_C),
                       kv[:, D:2 * D] + brow(BV_C),
                       Si, W_O_C, BO_C, None)
        # gate = sigmoid(cat([xn2, ca]) @ Wg + bg) == sigmoid(xn2@Wg_x + ca@Wg_c + bg)
        gate = jax.nn.sigmoid(
            jnp.dot(xn2_bf, wcols(W_G_X, D), preferred_element_type=f32)
            + jnp.dot(ca.astype(bf16), wcols(W_G_C, D), preferred_element_type=f32)
            + brow(BG))
        fused = gate * xn2 + (1.0 - gate) * ca
        fused = layernorm(fused, GG, GB)
        x = x + fused

        # ---------------- feed forward (exact-erf GELU) ----------------
        xn3 = layernorm(x, G3, B3)
        bf1 = jnp.concatenate([brow(BF1A), brow(BF1B)], axis=-1)   # (1, D_HID)
        h = jnp.dot(xn3.astype(bf16), wcols(W_FF1, D_HID),
                    preferred_element_type=f32) + bf1
        h = _gelu_exact(h)
        ff = jnp.dot(h.astype(bf16), w2_ref[...], preferred_element_type=f32) + brow(BF2)
        x = x + ff

        out_ref[...] = x.astype(out_ref.dtype)

    return kernel


# ------------------------------- wrapper --------------------------------------
def pack_params(p):
    """Pack parameters into lane-dense slabs (done ONCE, outside the call path).

    Returns (w_slab bf16 (32,384), w2_slab bf16 (64,32), b_slab f32 (20,32)).
    The 1/sqrt(head_dim) attention scale is folded into Wq / bq.
    """
    D = D_MODEL
    scale = 1.0 / math.sqrt(HD)
    wq_s, bq_s = p["wq_s"] * scale, p["bq_s"] * scale
    wq_c, bq_c = p["wq_c"] * scale, p["bq_c"] * scale

    w_blocks = [
        wq_s, p["wk_s"], p["wv_s"],          # lanes   0..95  fused self QKV
        p["wo_s"],                           # lanes  96..127
        wq_c,                                # lanes 128..159
        p["wk_c"], p["wv_c"],                # lanes 160..223 fused cross KV
        p["wo_c"],                           # lanes 224..255
        p["wg"][:D, :], p["wg"][D:, :],      # lanes 256..319 gate (text / image)
        p["w1"],                             # lanes 320..383 FFN first layer
    ]
    w_slab = jnp.concatenate(w_blocks, axis=1).astype(jnp.bfloat16)   # (32, 384)
    w2_slab = p["w2"].astype(jnp.bfloat16)                            # (64, 32)

    b_rows = [
        p["g1"], p["b1"], p["g2"], p["b2"], p["g3"], p["b3"],
        p["gg"], p["gb"],
        bq_s, p["bk_s"], p["bv_s"], p["bo_s"],
        bq_c, p["bk_c"], p["bv_c"], p["bo_c"],
        p["bg"],
        p["bf1"][:, :D], p["bf1"][:, D:],
        p["bf2"],
    ]
    b_slab = jnp.concatenate(b_rows, axis=0).astype(jnp.float32)      # (20, 32)
    return w_slab, w2_slab, b_slab


@functools.lru_cache(maxsize=None)
def _get_forward(B, S, Si, has_mask, out_dtype_name):
    """Build (once per shape-config) a jitted forward using a cached kernel."""
    kernel = _make_kernel(B, S, Si, has_mask)
    out_dtype = jnp.dtype(out_dtype_name)
    D = D_MODEL

    def fwd(tgt, image_memory, mask, w_slab, w2_slab, b_slab):
        x_flat = tgt.reshape(B * S, D)
        img_flat = image_memory.reshape(B * Si, D)
        inputs = [x_flat, img_flat]
        if has_mask:
            inputs.append(mask)
        inputs += [w_slab, w2_slab, b_slab]
        out = pl.pallas_call(
            kernel,
            out_shape=jax.ShapeDtypeStruct((B * S, D), out_dtype),
            in_specs=[pl.BlockSpec(a.shape, lambda *_: (0, 0)) for a in inputs],
            out_specs=pl.BlockSpec((B * S, D), lambda *_: (0, 0)),
        )(*inputs)
        return out.reshape(B, S, D)

    return jax.jit(fwd)


def multimodal_decoder_layer(tgt, image_memory, packed_params, attn_mask=None):
    """Forward pass of MultimodalDecoderLayer (eval mode).

    packed_params = pack_params(params), computed once outside the call path.
    attn_mask: optional (S, S) additive-float or boolean self-attention mask
    (broadcast over batch). key_padding_mask is not supported.
    """
    B, S, D = tgt.shape
    Si = image_memory.shape[1]
    assert D == D_MODEL and D % N_HEAD == 0
    w_slab, w2_slab, b_slab = packed_params

    has_mask = attn_mask is not None
    mask = None
    if has_mask:
        m = attn_mask
        assert m.shape == (S, S), "only a (S, S) mask broadcast over batch is supported"
        if m.dtype == jnp.bool_:
            m = jnp.where(m, jnp.float32(-1e30), jnp.float32(0.0))
        mask = m.astype(jnp.float32)

    fwd = _get_forward(B, S, Si, has_mask, jnp.dtype(tgt.dtype).name)
    return fwd(tgt, image_memory, mask, w_slab, w2_slab, b_slab)


def init_params(key, d_model, n_head, d_hid):
    ks = jax.random.split(key, 24)
    std = 0.02
    nrm = lambda k, shape: jax.random.normal(k, shape, jnp.float32) * std
    D = d_model
    p = {
        # layer norms (gamma=1, beta=0, like nn.LayerNorm init)
        "g1": jnp.ones((1, D), jnp.float32), "b1": jnp.zeros((1, D), jnp.float32),
        "g2": jnp.ones((1, D), jnp.float32), "b2": jnp.zeros((1, D), jnp.float32),
        "g3": jnp.ones((1, D), jnp.float32), "b3": jnp.zeros((1, D), jnp.float32),
        # self-attention projections (pre-transposed: x @ W + b)
        "wq_s": nrm(ks[0], (D, D)), "bq_s": nrm(ks[1], (1, D)),
        "wk_s": nrm(ks[2], (D, D)), "bk_s": nrm(ks[3], (1, D)),
        "wv_s": nrm(ks[4], (D, D)), "bv_s": nrm(ks[5], (1, D)),
        "wo_s": nrm(ks[6], (D, D)), "bo_s": nrm(ks[7], (1, D)),
        # cross-attention projections
        "wq_c": nrm(ks[8], (D, D)), "bq_c": nrm(ks[9], (1, D)),
        "wk_c": nrm(ks[10], (D, D)), "bk_c": nrm(ks[11], (1, D)),
        "wv_c": nrm(ks[12], (D, D)), "bv_c": nrm(ks[13], (1, D)),
        "wo_c": nrm(ks[14], (D, D)), "bo_c": nrm(ks[15], (1, D)),
        # dynamic gating (gate_fc over cat([text, image]))
        "wg": nrm(ks[16], (2 * D, D)), "bg": nrm(ks[17], (1, D)),
        "gg": jnp.ones((1, D), jnp.float32), "gb": jnp.zeros((1, D), jnp.float32),
        # feed-forward
        "w1": nrm(ks[18], (D, d_hid)), "bf1": nrm(ks[19], (1, d_hid)),
        "w2": nrm(ks[20], (d_hid, D)), "bf2": nrm(ks[21], (1, D)),
    }
    return p


if __name__ == "__main__":
    key = jax.random.PRNGKey(0)
    k_tgt, k_img, k_par = jax.random.split(key, 3)

    tgt = jax.random.normal(k_tgt, (BATCH, SEQ, D_MODEL), jnp.float32)
    image_memory = jax.random.normal(k_img, (BATCH, IMG_SEQ, D_MODEL), jnp.float32)
    params = init_params(k_par, D_MODEL, N_HEAD, D_HID)

    # Pack parameters ONCE (hoisted out of the per-call path).
    packed = pack_params(params)

    # forward(tgt, image_memory, tgt_mask=None, tgt_key_padding_mask=None,
    #         return_first_layer=False) -> no self-attention mask.
    # TODO(synk): key_padding_mask / return_first_layer local-window path not supported.
    out = multimodal_decoder_layer(tgt, image_memory, packed, attn_mask=None)
    out = jax.block_until_ready(out)
    assert out.shape == (BATCH, SEQ, D_MODEL)

    # Second call hits the lru_cache'd kernel + jit/pallas compile cache.
    out2 = multimodal_decoder_layer(tgt, image_memory, packed)
    out2 = jax.block_until_ready(out2)
    assert out2.shape == (BATCH, SEQ, D_MODEL)
    print("KERNEL_OK")
</pallas_src>

<mosaic_0001>
module attributes {stable_mosaic.version = 11 : i64} {
  func.func @kernel(%arg0: memref<16x32xf32, #tpu.memory_space<vmem>>, %arg1: memref<32x32xf32, #tpu.memory_space<vmem>>, %arg2: memref<32x384xbf16, #tpu.memory_space<vmem>>, %arg3: memref<64x32xbf16, #tpu.memory_space<vmem>>, %arg4: memref<20x32xf32, #tpu.memory_space<vmem>>, %arg5: memref<16x32xf32, #tpu.memory_space<vmem>>) attributes {dimension_semantics = [], scalar_prefetch = 0 : i64, scratch_operands = 0 : i64, tpu.core_type = #tpu.core_type<tc>} {
    %c0 = arith.constant 0 : index
    %c0_0 = arith.constant 0 : index
    %0 = vector.load %arg0[%c0, %c0_0] : memref<16x32xf32, #tpu.memory_space<vmem>>, vector<16x32xf32>
    %c0_1 = arith.constant 0 : index
    %c0_2 = arith.constant 0 : index
    %1 = vector.load %arg1[%c0_1, %c0_2] : memref<32x32xf32, #tpu.memory_space<vmem>>, vector<32x32xf32>
    %cst = arith.constant dense<0.000000e+00> : vector<16xf32>
    %2 = vector.multi_reduction <add>, %0, %cst [1] : vector<16x32xf32> to vector<16xf32>
    %3 = vector.shape_cast %2 : vector<16xf32> to vector<16x1xf32>
    %cst_3 = arith.constant 3.200000e+01 : f32
    %4 = vector.broadcast %cst_3 : f32 to vector<16x1xf32>
    %5 = arith.divf %3, %4 : vector<16x1xf32>
    %6 = vector.broadcast %5 : vector<16x1xf32> to vector<16x32xf32>
    %7 = arith.subf %0, %6 : vector<16x32xf32>
    %8 = arith.mulf %7, %7 : vector<16x32xf32>
    %cst_4 = arith.constant dense<0.000000e+00> : vector<16xf32>
    %9 = vector.multi_reduction <add>, %8, %cst_4 [1] : vector<16x32xf32> to vector<16xf32>
    %10 = vector.shape_cast %9 : vector<16xf32> to vector<16x1xf32>
    %cst_5 = arith.constant 3.200000e+01 : f32
    %11 = vector.broadcast %cst_5 : f32 to vector<16x1xf32>
    %12 = arith.divf %10, %11 : vector<16x1xf32>
    %cst_6 = arith.constant 9.99999974E-6 : f32
    %13 = vector.broadcast %cst_6 : f32 to vector<16x1xf32>
    %14 = arith.addf %12, %13 : vector<16x1xf32>
    %15 = math.rsqrt %14 : vector<16x1xf32>
    %16 = vector.broadcast %15 : vector<16x1xf32> to vector<16x32xf32>
    %17 = arith.mulf %7, %16 : vector<16x32xf32>
    %c0_7 = arith.constant 0 : index
    %c0_8 = arith.constant 0 : index
    %18 = vector.load %arg4[%c0_7, %c0_8] : memref<20x32xf32, #tpu.memory_space<vmem>>, vector<1x32xf32>
    %19 = vector.broadcast %18 : vector<1x32xf32> to vector<16x32xf32>
    %20 = arith.mulf %17, %19 : vector<16x32xf32>
    %c1 = arith.constant 1 : index
    %c0_9 = arith.constant 0 : index
    %21 = vector.load %arg4[%c1, %c0_9] : memref<20x32xf32, #tpu.memory_space<vmem>>, vector<1x32xf32>
    %22 = vector.broadcast %21 : vector<1x32xf32> to vector<16x32xf32>
    %23 = arith.addf %20, %22 : vector<16x32xf32>
    %24 = arith.truncf %23 : vector<16x32xf32> to vector<16x32xbf16>
    %c0_10 = arith.constant 0 : index
    %c0_11 = arith.constant 0 : index
    %25 = vector.load %arg2[%c0_10, %c0_11] : memref<32x384xbf16, #tpu.memory_space<vmem>>, vector<32x96xbf16>
    %cst_12 = arith.constant dense<0.000000e+00> : vector<16x96xf32>
    %26 = tpu.matmul %24, %25, %cst_12 {dimension_numbers = #tpu.dot_dimension_numbers<[1], [0], [0], [1], [0, 0, 1, 1], [], []>} : vector<16x32xbf16>, vector<32x96xbf16>, vector<16x96xf32> -> vector<16x96xf32>
    %27 = vector.extract_strided_slice %26 {offsets = [0, 0], sizes = [16, 32], strides = [1, 1]} : vector<16x96xf32> to vector<16x32xf32>
    %c8 = arith.constant 8 : index
    %c0_13 = arith.constant 0 : index
    %28 = vector.load %arg4[%c8, %c0_13] : memref<20x32xf32, #tpu.memory_space<vmem>>, vector<1x32xf32>
    %29 = vector.broadcast %28 : vector<1x32xf32> to vector<16x32xf32>
    %30 = arith.addf %27, %29 : vector<16x32xf32>
    %31 = vector.extract_strided_slice %26 {offsets = [0, 32], sizes = [16, 32], strides = [1, 1]} : vector<16x96xf32> to vector<16x32xf32>
    %c9 = arith.constant 9 : index
    %c0_14 = arith.constant 0 : index
    %32 = vector.load %arg4[%c9, %c0_14] : memref<20x32xf32, #tpu.memory_space<vmem>>, vector<1x32xf32>
    %33 = vector.broadcast %32 : vector<1x32xf32> to vector<16x32xf32>
    %34 = arith.addf %31, %33 : vector<16x32xf32>
    %35 = vector.extract_strided_slice %26 {offsets = [0, 64], sizes = [16, 32], strides = [1, 1]} : vector<16x96xf32> to vector<16x32xf32>
    %c10 = arith.constant 10 : index
    %c0_15 = arith.constant 0 : index
    %36 = vector.load %arg4[%c10, %c0_15] : memref<20x32xf32, #tpu.memory_space<vmem>>, vector<1x32xf32>
    %37 = vector.broadcast %36 : vector<1x32xf32> to vector<16x32xf32>
    %38 = arith.addf %35, %37 : vector<16x32xf32>
    %39 = vector.shape_cast %30 : vector<16x32xf32> to vector<2x8x32xf32>
    %40 = arith.truncf %39 : vector<2x8x32xf32> to vector<2x8x32xbf16>
    %41 = vector.shape_cast %34 : vector<16x32xf32> to vector<2x8x32xf32>
    %42 = arith.truncf %41 : vector<2x8x32xf32> to vector<2x8x32xbf16>
    %43 = vector.shape_cast %38 : vector<16x32xf32> to vector<2x8x32xf32>
    %44 = arith.truncf %43 : vector<2x8x32xf32> to vector<2x8x32xbf16>
    %45 = vector.extract_strided_slice %40 {offsets = [0, 0, 0], sizes = [2, 8, 8], strides = [1, 1, 1]} : vector<2x8x32xbf16> to vector<2x8x8xbf16>
    %46 = vector.extract_strided_slice %42 {offsets = [0, 0, 0], sizes = [2, 8, 8], strides = [1, 1, 1]} : vector<2x8x32xbf16> to vector<2x8x8xbf16>
    "tpu.trace_start"() <{level = 10 : i32, message = "bqd,bkd->bqk"}> : () -> ()
    %cst_16 = arith.constant dense<0.000000e+00> : vector<2x8x8xf32>
    %47 = tpu.matmul %45, %46, %cst_16 {dimension_numbers = #tpu.dot_dimension_numbers<[2], [2], [1], [1], [0, 0, 0, 1, 1, 1], [0], [0]>} : vector<2x8x8xbf16>, vector<2x8x8xbf16>, vector<2x8x8xf32> -> vector<2x8x8xf32>
    "tpu.trace_stop"() : () -> ()
    %cst_17 = arith.constant dense<0xFF800000> : vector<2x8xf32>
    %48 = vector.multi_reduction <maximumf>, %47, %cst_17 [2] : vector<2x8x8xf32> to vector<2x8xf32>
    %49 = vector.shape_cast %48 : vector<2x8xf32> to vector<2x8x1xf32>
    %50 = vector.broadcast %49 : vector<2x8x1xf32> to vector<2x8x8xf32>
    %51 = arith.subf %47, %50 : vector<2x8x8xf32>
    %52 = math.exp %51 : vector<2x8x8xf32>
    %cst_18 = arith.constant dense<0.000000e+00> : vector<2x8xf32>
    %53 = vector.multi_reduction <add>, %52, %cst_18 [2] : vector<2x8x8xf32> to vector<2x8xf32>
    %54 = vector.shape_cast %53 : vector<2x8xf32> to vector<2x8x1xf32>
    %55 = vector.broadcast %54 : vector<2x8x1xf32> to vector<2x8x8xf32>
    %56 = arith.divf %52, %55 : vector<2x8x8xf32>
    %57 = arith.truncf %56 : vector<2x8x8xf32> to vector<2x8x8xbf16>
    %58 = vector.extract_strided_slice %44 {offsets = [0, 0, 0], sizes = [2, 8, 8], strides = [1, 1, 1]} : vector<2x8x32xbf16> to vector<2x8x8xbf16>
    "tpu.trace_start"() <{level = 10 : i32, message = "bqk,bkd->bqd"}> : () -> ()
    %cst_19 = arith.constant dense<0.000000e+00> : vector<2x8x8xf32>
    %59 = tpu.matmul %57, %58, %cst_19 {dimension_numbers = #tpu.dot_dimension_numbers<[2], [1], [1], [2], [0, 0, 0, 1, 1, 2], [0], [0]>} : vector<2x8x8xbf16>, vector<2x8x8xbf16>, vector<2x8x8xf32> -> vector<2x8x8xf32>
    "tpu.trace_stop"() : () -> ()
    %60 = vector.extract_strided_slice %40 {offsets = [0, 0, 8], sizes = [2, 8, 8], strides = [1, 1, 1]} : vector<2x8x32xbf16> to vector<2x8x8xbf16>
    %61 = vector.extract_strided_slice %42 {offsets = [0, 0, 8], sizes = [2, 8, 8], strides = [1, 1, 1]} : vector<2x8x32xbf16> to vector<2x8x8xbf16>
    "tpu.trace_start"() <{level = 10 : i32, message = "bqd,bkd->bqk"}> : () -> ()
    %cst_20 = arith.constant dense<0.000000e+00> : vector<2x8x8xf32>
    %62 = tpu.matmul %60, %61, %cst_20 {dimension_numbers = #tpu.dot_dimension_numbers<[2], [2], [1], [1], [0, 0, 0, 1, 1, 1], [0], [0]>} : vector<2x8x8xbf16>, vector<2x8x8xbf16>, vector<2x8x8xf32> -> vector<2x8x8xf32>
    "tpu.trace_stop"() : () -> ()
    %cst_21 = arith.constant dense<0xFF800000> : vector<2x8xf32>
    %63 = vector.multi_reduction <maximumf>, %62, %cst_21 [2] : vector<2x8x8xf32> to vector<2x8xf32>
    %64 = vector.shape_cast %63 : vector<2x8xf32> to vector<2x8x1xf32>
    %65 = vector.broadcast %64 : vector<2x8x1xf32> to vector<2x8x8xf32>
    %66 = arith.subf %62, %65 : vector<2x8x8xf32>
    %67 = math.exp %66 : vector<2x8x8xf32>
    %cst_22 = arith.constant dense<0.000000e+00> : vector<2x8xf32>
    %68 = vector.multi_reduction <add>, %67, %cst_22 [2] : vector<2x8x8xf32> to vector<2x8xf32>
    %69 = vector.shape_cast %68 : vector<2x8xf32> to vector<2x8x1xf32>
    %70 = vector.broadcast %69 : vector<2x8x1xf32> to vector<2x8x8xf32>
    %71 = arith.divf %67, %70 : vector<2x8x8xf32>
    %72 = arith.truncf %71 : vector<2x8x8xf32> to vector<2x8x8xbf16>
    %73 = vector.extract_strided_slice %44 {offsets = [0, 0, 8], sizes = [2, 8, 8], strides = [1, 1, 1]} : vector<2x8x32xbf16> to vector<2x8x8xbf16>
    "tpu.trace_start"() <{level = 10 : i32, message = "bqk,bkd->bqd"}> : () -> ()
    %cst_23 = arith.constant dense<0.000000e+00> : vector<2x8x8xf32>
    %74 = tpu.matmul %72, %73, %cst_23 {dimension_numbers = #tpu.dot_dimension_numbers<[2], [1], [1], [2], [0, 0, 0, 1, 1, 2], [0], [0]>} : vector<2x8x8xbf16>, vector<2x8x8xbf16>, vector<2x8x8xf32> -> vector<2x8x8xf32>
    "tpu.trace_stop"() : () -> ()
    %75 = vector.extract_strided_slice %40 {offsets = [0, 0, 16], sizes = [2, 8, 8], strides = [1, 1, 1]} : vector<2x8x32xbf16> to vector<2x8x8xbf16>
    %76 = vector.extract_strided_slice %42 {offsets = [0, 0, 16], sizes = [2, 8, 8], strides = [1, 1, 1]} : vector<2x8x32xbf16> to vector<2x8x8xbf16>
    "tpu.trace_start"() <{level = 10 : i32, message = "bqd,bkd->bqk"}> : () -> ()
    %cst_24 = arith.constant dense<0.000000e+00> : vector<2x8x8xf32>
    %77 = tpu.matmul %75, %76, %cst_24 {dimension_numbers = #tpu.dot_dimension_numbers<[2], [2], [1], [1], [0, 0, 0, 1, 1, 1], [0], [0]>} : vector<2x8x8xbf16>, vector<2x8x8xbf16>, vector<2x8x8xf32> -> vector<2x8x8xf32>
    "tpu.trace_stop"() : () -> ()
    %cst_25 = arith.constant dense<0xFF800000> : vector<2x8xf32>
    %78 = vector.multi_reduction <maximumf>, %77, %cst_25 [2] : vector<2x8x8xf32> to vector<2x8xf32>
    %79 = vector.shape_cast %78 : vector<2x8xf32> to vector<2x8x1xf32>
    %80 = vector.broadcast %79 : vector<2x8x1xf32> to vector<2x8x8xf32>
    %81 = arith.subf %77, %80 : vector<2x8x8xf32>
    %82 = math.exp %81 : vector<2x8x8xf32>
    %cst_26 = arith.constant dense<0.000000e+00> : vector<2x8xf32>
    %83 = vector.multi_reduction <add>, %82, %cst_26 [2] : vector<2x8x8xf32> to vector<2x8xf32>
    %84 = vector.shape_cast %83 : vector<2x8xf32> to vector<2x8x1xf32>
    %85 = vector.broadcast %84 : vector<2x8x1xf32> to vector<2x8x8xf32>
    %86 = arith.divf %82, %85 : vector<2x8x8xf32>
    %87 = arith.truncf %86 : vector<2x8x8xf32> to vector<2x8x8xbf16>
    %88 = vector.extract_strided_slice %44 {offsets = [0, 0, 16], sizes = [2, 8, 8], strides = [1, 1, 1]} : vector<2x8x32xbf16> to vector<2x8x8xbf16>
    "tpu.trace_start"() <{level = 10 : i32, message = "bqk,bkd->bqd"}> : () -> ()
    %cst_27 = arith.constant dense<0.000000e+00> : vector<2x8x8xf32>
    %89 = tpu.matmul %87, %88, %cst_27 {dimension_numbers = #tpu.dot_dimension_numbers<[2], [1], [1], [2], [0, 0, 0, 1, 1, 2], [0], [0]>} : vector<2x8x8xbf16>, vector<2x8x8xbf16>, vector<2x8x8xf32> -> vector<2x8x8xf32>
    "tpu.trace_stop"() : () -> ()
    %90 = vector.extract_strided_slice %40 {offsets = [0, 0, 24], sizes = [2, 8, 8], strides = [1, 1, 1]} : vector<2x8x32xbf16> to vector<2x8x8xbf16>
    %91 = vector.extract_strided_slice %42 {offsets = [0, 0, 24], sizes = [2, 8, 8], strides = [1, 1, 1]} : vector<2x8x32xbf16> to vector<2x8x8xbf16>
    "tpu.trace_start"() <{level = 10 : i32, message = "bqd,bkd->bqk"}> : () -> ()
    %cst_28 = arith.constant dense<0.000000e+00> : vector<2x8x8xf32>
    %92 = tpu.matmul %90, %91, %cst_28 {dimension_numbers = #tpu.dot_dimension_numbers<[2], [2], [1], [1], [0, 0, 0, 1, 1, 1], [0], [0]>} : vector<2x8x8xbf16>, vector<2x8x8xbf16>, vector<2x8x8xf32> -> vector<2x8x8xf32>
    "tpu.trace_stop"() : () -> ()
    %cst_29 = arith.constant dense<0xFF800000> : vector<2x8xf32>
    %93 = vector.multi_reduction <maximumf>, %92, %cst_29 [2] : vector<2x8x8xf32> to vector<2x8xf32>
    %94 = vector.shape_cast %93 : vector<2x8xf32> to vector<2x8x1xf32>
    %95 = vector.broadcast %94 : vector<2x8x1xf32> to vector<2x8x8xf32>
    %96 = arith.subf %92, %95 : vector<2x8x8xf32>
    %97 = math.exp %96 : vector<2x8x8xf32>
    %cst_30 = arith.constant dense<0.000000e+00> : vector<2x8xf32>
    %98 = vector.multi_reduction <add>, %97, %cst_30 [2] : vector<2x8x8xf32> to vector<2x8xf32>
    %99 = vector.shape_cast %98 : vector<2x8xf32> to vector<2x8x1xf32>
    %100 = vector.broadcast %99 : vector<2x8x1xf32> to vector<2x8x8xf32>
    %101 = arith.divf %97, %100 : vector<2x8x8xf32>
    %102 = arith.truncf %101 : vector<2x8x8xf32> to vector<2x8x8xbf16>
    %103 = vector.extract_strided_slice %44 {offsets = [0, 0, 24], sizes = [2, 8, 8], strides = [1, 1, 1]} : vector<2x8x32xbf16> to vector<2x8x8xbf16>
    "tpu.trace_start"() <{level = 10 : i32, message = "bqk,bkd->bqd"}> : () -> ()
    %cst_31 = arith.constant dense<0.000000e+00> : vector<2x8x8xf32>
    %104 = tpu.matmul %102, %103, %cst_31 {dimension_numbers = #tpu.dot_dimension_numbers<[2], [1], [1], [2], [0, 0, 0, 1, 1, 2], [0], [0]>} : vector<2x8x8xbf16>, vector<2x8x8xbf16>, vector<2x8x8xf32> -> vector<2x8x8xf32>
    "tpu.trace_stop"() : () -> ()
    %105 = tpu.concatenate %59, %74, %89, %104 in 2 : vector<2x8x8xf32>, vector<2x8x8xf32>, vector<2x8x8xf32>, vector<2x8x8xf32> -> vector<2x8x32xf32>
    %106 = vector.shape_cast %105 : vector<2x8x32xf32> to vector<16x32xf32>
    %107 = arith.truncf %106 : vector<16x32xf32> to vector<16x32xbf16>
    %c0_32 = arith.constant 0 : index
    %c96 = arith.constant 96 : index
    %108 = vector.load %arg2[%c0_32, %c96] : memref<32x384xbf16, #tpu.memory_space<vmem>>, vector<32x32xbf16>
    %cst_33 = arith.constant dense<0.000000e+00> : vector<16x32xf32>
    %109 = tpu.matmul %107, %108, %cst_33 {dimension_numbers = #tpu.dot_dimension_numbers<[1], [0], [0], [1], [0, 0, 1, 1], [], []>} : vector<16x32xbf16>, vector<32x32xbf16>, vector<16x32xf32> -> vector<16x32xf32>
    %c11 = arith.constant 11 : index
    %c0_34 = arith.constant 0 : index
    %110 = vector.load %arg4[%c11, %c0_34] : memref<20x32xf32, #tpu.memory_space<vmem>>, vector<1x32xf32>
    %111 = vector.broadcast %110 : vector<1x32xf32> to vector<16x32xf32>
    %112 = arith.addf %109, %111 : vector<16x32xf32>
    %113 = arith.addf %0, %112 : vector<16x32xf32>
    %cst_35 = arith.constant dense<0.000000e+00> : vector<16xf32>
    %114 = vector.multi_reduction <add>, %113, %cst_35 [1] : vector<16x32xf32> to vector<16xf32>
    %115 = vector.shape_cast %114 : vector<16xf32> to vector<16x1xf32>
    %cst_36 = arith.constant 3.200000e+01 : f32
    %116 = vector.broadcast %cst_36 : f32 to vector<16x1xf32>
    %117 = arith.divf %115, %116 : vector<16x1xf32>
    %118 = vector.broadcast %117 : vector<16x1xf32> to vector<16x32xf32>
    %119 = arith.subf %113, %118 : vector<16x32xf32>
    %120 = arith.mulf %119, %119 : vector<16x32xf32>
    %cst_37 = arith.constant dense<0.000000e+00> : vector<16xf32>
    %121 = vector.multi_reduction <add>, %120, %cst_37 [1] : vector<16x32xf32> to vector<16xf32>
    %122 = vector.shape_cast %121 : vector<16xf32> to vector<16x1xf32>
    %cst_38 = arith.constant 3.200000e+01 : f32
    %123 = vector.broadcast %cst_38 : f32 to vector<16x1xf32>
    %124 = arith.divf %122, %123 : vector<16x1xf32>
    %cst_39 = arith.constant 9.99999974E-6 : f32
    %125 = vector.broadcast %cst_39 : f32 to vector<16x1xf32>
    %126 = arith.addf %124, %125 : vector<16x1xf32>
    %127 = math.rsqrt %126 : vector<16x1xf32>
    %128 = vector.broadcast %127 : vector<16x1xf32> to vector<16x32xf32>
    %129 = arith.mulf %119, %128 : vector<16x32xf32>
    %c2 = arith.constant 2 : index
    %c0_40 = arith.constant 0 : index
    %130 = vector.load %arg4[%c2, %c0_40] : memref<20x32xf32, #tpu.memory_space<vmem>>, vector<1x32xf32>
    %131 = vector.broadcast %130 : vector<1x32xf32> to vector<16x32xf32>
    %132 = arith.mulf %129, %131 : vector<16x32xf32>
    %c3 = arith.constant 3 : index
    %c0_41 = arith.constant 0 : index
    %133 = vector.load %arg4[%c3, %c0_41] : memref<20x32xf32, #tpu.memory_space<vmem>>, vector<1x32xf32>
    %134 = vector.broadcast %133 : vector<1x32xf32> to vector<16x32xf32>
    %135 = arith.addf %132, %134 : vector<16x32xf32>
    %136 = arith.truncf %135 : vector<16x32xf32> to vector<16x32xbf16>
    %c0_42 = arith.constant 0 : index
    %c128 = arith.constant 128 : index
    %137 = vector.load %arg2[%c0_42, %c128] : memref<32x384xbf16, #tpu.memory_space<vmem>>, vector<32x32xbf16>
    %cst_43 = arith.constant dense<0.000000e+00> : vector<16x32xf32>
    %138 = tpu.matmul %136, %137, %cst_43 {dimension_numbers = #tpu.dot_dimension_numbers<[1], [0], [0], [1], [0, 0, 1, 1], [], []>} : vector<16x32xbf16>, vector<32x32xbf16>, vector<16x32xf32> -> vector<16x32xf32>
    %c12 = arith.constant 12 : index
    %c0_44 = arith.constant 0 : index
    %139 = vector.load %arg4[%c12, %c0_44] : memref<20x32xf32, #tpu.memory_space<vmem>>, vector<1x32xf32>
    %140 = vector.broadcast %139 : vector<1x32xf32> to vector<16x32xf32>
    %141 = arith.addf %138, %140 : vector<16x32xf32>
    %142 = arith.truncf %1 : vector<32x32xf32> to vector<32x32xbf16>
    %c0_45 = arith.constant 0 : index
    %c160 = arith.constant 160 : index
    %143 = vector.load %arg2[%c0_45, %c160] : memref<32x384xbf16, #tpu.memory_space<vmem>>, vector<32x64xbf16>
    %cst_46 = arith.constant dense<0.000000e+00> : vector<32x64xf32>
    %144 = tpu.matmul %142, %143, %cst_46 {dimension_numbers = #tpu.dot_dimension_numbers<[1], [0], [0], [1], [0, 0, 1, 1], [], []>} : vector<32x32xbf16>, vector<32x64xbf16>, vector<32x64xf32> -> vector<32x64xf32>
    %145 = vector.extract_strided_slice %144 {offsets = [0, 0], sizes = [32, 32], strides = [1, 1]} : vector<32x64xf32> to vector<32x32xf32>
    %c13 = arith.constant 13 : index
    %c0_47 = arith.constant 0 : index
    %146 = vector.load %arg4[%c13, %c0_47] : memref<20x32xf32, #tpu.memory_space<vmem>>, vector<1x32xf32>
    %147 = vector.broadcast %146 : vector<1x32xf32> to vector<32x32xf32>
    %148 = arith.addf %145, %147 : vector<32x32xf32>
    %149 = vector.extract_strided_slice %144 {offsets = [0, 32], sizes = [32, 32], strides = [1, 1]} : vector<32x64xf32> to vector<32x32xf32>
    %c14 = arith.constant 14 : index
    %c0_48 = arith.constant 0 : index
    %150 = vector.load %arg4[%c14, %c0_48] : memref<20x32xf32, #tpu.memory_space<vmem>>, vector<1x32xf32>
    %151 = vector.broadcast %150 : vector<1x32xf32> to vector<32x32xf32>
    %152 = arith.addf %149, %151 : vector<32x32xf32>
    %153 = vector.shape_cast %141 : vector<16x32xf32> to vector<2x8x32xf32>
    %154 = arith.truncf %153 : vector<2x8x32xf32> to vector<2x8x32xbf16>
    %155 = vector.shape_cast %148 : vector<32x32xf32> to vector<2x16x32xf32>
    %156 = arith.truncf %155 : vector<2x16x32xf32> to vector<2x16x32xbf16>
    %157 = vector.shape_cast %152 : vector<32x32xf32> to vector<2x16x32xf32>
    %158 = arith.truncf %157 : vector<2x16x32xf32> to vector<2x16x32xbf16>
    %159 = vector.extract_strided_slice %154 {offsets = [0, 0, 0], sizes = [2, 8, 8], strides = [1, 1, 1]} : vector<2x8x32xbf16> to vector<2x8x8xbf16>
    %160 = vector.extract_strided_slice %156 {offsets = [0, 0, 0], sizes = [2, 16, 8], strides = [1, 1, 1]} : vector<2x16x32xbf16> to vector<2x16x8xbf16>
    "tpu.trace_start"() <{level = 10 : i32, message = "bqd,bkd->bqk"}> : () -> ()
    %cst_49 = arith.constant dense<0.000000e+00> : vector<2x8x16xf32>
    %161 = tpu.matmul %159, %160, %cst_49 {dimension_numbers = #tpu.dot_dimension_numbers<[2], [2], [1], [1], [0, 0, 0, 1, 1, 1], [0], [0]>} : vector<2x8x8xbf16>, vector<2x16x8xbf16>, vector<2x8x16xf32> -> vector<2x8x16xf32>
    "tpu.trace_stop"() : () -> ()
    %cst_50 = arith.constant dense<0xFF800000> : vector<2x8xf32>
    %162 = vector.multi_reduction <maximumf>, %161, %cst_50 [2] : vector<2x8x16xf32> to vector<2x8xf32>
    %163 = vector.shape_cast %162 : vector<2x8xf32> to vector<2x8x1xf32>
    %164 = vector.broadcast %163 : vector<2x8x1xf32> to vector<2x8x16xf32>
    %165 = arith.subf %161, %164 : vector<2x8x16xf32>
    %166 = math.exp %165 : vector<2x8x16xf32>
    %cst_51 = arith.constant dense<0.000000e+00> : vector<2x8xf32>
    %167 = vector.multi_reduction <add>, %166, %cst_51 [2] : vector<2x8x16xf32> to vector<2x8xf32>
    %168 = vector.shape_cast %167 : vector<2x8xf32> to vector<2x8x1xf32>
    %169 = vector.broadcast %168 : vector<2x8x1xf32> to vector<2x8x16xf32>
    %170 = arith.divf %166, %169 : vector<2x8x16xf32>
    %171 = arith.truncf %170 : vector<2x8x16xf32> to vector<2x8x16xbf16>
    %172 = vector.extract_strided_slice %158 {offsets = [0, 0, 0], sizes = [2, 16, 8], strides = [1, 1, 1]} : vector<2x16x32xbf16> to vector<2x16x8xbf16>
    "tpu.trace_start"() <{level = 10 : i32, message = "bqk,bkd->bqd"}> : () -> ()
    %cst_52 = arith.constant dense<0.000000e+00> : vector<2x8x8xf32>
    %173 = tpu.matmul %171, %172, %cst_52 {dimension_numbers = #tpu.dot_dimension_numbers<[2], [1], [1], [2], [0, 0, 0, 1, 1, 2], [0], [0]>} : vector<2x8x16xbf16>, vector<2x16x8xbf16>, vector<2x8x8xf32> -> vector<2x8x8xf32>
    "tpu.trace_stop"() : () -> ()
    %174 = vector.extract_strided_slice %154 {offsets = [0, 0, 8], sizes = [2, 8, 8], strides = [1, 1, 1]} : vector<2x8x32xbf16> to vector<2x8x8xbf16>
    %175 = vector.extract_strided_slice %156 {offsets = [0, 0, 8], sizes = [2, 16, 8], strides = [1, 1, 1]} : vector<2x16x32xbf16> to vector<2x16x8xbf16>
    "tpu.trace_start"() <{level = 10 : i32, message = "bqd,bkd->bqk"}> : () -> ()
    %cst_53 = arith.constant dense<0.000000e+00> : vector<2x8x16xf32>
    %176 = tpu.matmul %174, %175, %cst_53 {dimension_numbers = #tpu.dot_dimension_numbers<[2], [2], [1], [1], [0, 0, 0, 1, 1, 1], [0], [0]>} : vector<2x8x8xbf16>, vector<2x16x8xbf16>, vector<2x8x16xf32> -> vector<2x8x16xf32>
    "tpu.trace_stop"() : () -> ()
    %cst_54 = arith.constant dense<0xFF800000> : vector<2x8xf32>
    %177 = vector.multi_reduction <maximumf>, %176, %cst_54 [2] : vector<2x8x16xf32> to vector<2x8xf32>
    %178 = vector.shape_cast %177 : vector<2x8xf32> to vector<2x8x1xf32>
    %179 = vector.broadcast %178 : vector<2x8x1xf32> to vector<2x8x16xf32>
    %180 = arith.subf %176, %179 : vector<2x8x16xf32>
    %181 = math.exp %180 : vector<2x8x16xf32>
    %cst_55 = arith.constant dense<0.000000e+00> : vector<2x8xf32>
    %182 = vector.multi_reduction <add>, %181, %cst_55 [2] : vector<2x8x16xf32> to vector<2x8xf32>
    %183 = vector.shape_cast %182 : vector<2x8xf32> to vector<2x8x1xf32>
    %184 = vector.broadcast %183 : vector<2x8x1xf32> to vector<2x8x16xf32>
    %185 = arith.divf %181, %184 : vector<2x8x16xf32>
    %186 = arith.truncf %185 : vector<2x8x16xf32> to vector<2x8x16xbf16>
    %187 = vector.extract_strided_slice %158 {offsets = [0, 0, 8], sizes = [2, 16, 8], strides = [1, 1, 1]} : vector<2x16x32xbf16> to vector<2x16x8xbf16>
    "tpu.trace_start"() <{level = 10 : i32, message = "bqk,bkd->bqd"}> : () -> ()
    %cst_56 = arith.constant dense<0.000000e+00> : vector<2x8x8xf32>
    %188 = tpu.matmul %186, %187, %cst_56 {dimension_numbers = #tpu.dot_dimension_numbers<[2], [1], [1], [2], [0, 0, 0, 1, 1, 2], [0], [0]>} : vector<2x8x16xbf16>, vector<2x16x8xbf16>, vector<2x8x8xf32> -> vector<2x8x8xf32>
    "tpu.trace_stop"() : () -> ()
    %189 = vector.extract_strided_slice %154 {offsets = [0, 0, 16], sizes = [2, 8, 8], strides = [1, 1, 1]} : vector<2x8x32xbf16> to vector<2x8x8xbf16>
    %190 = vector.extract_strided_slice %156 {offsets = [0, 0, 16], sizes = [2, 16, 8], strides = [1, 1, 1]} : vector<2x16x32xbf16> to vector<2x16x8xbf16>
    "tpu.trace_start"() <{level = 10 : i32, message = "bqd,bkd->bqk"}> : () -> ()
    %cst_57 = arith.constant dense<0.000000e+00> : vector<2x8x16xf32>
    %191 = tpu.matmul %189, %190, %cst_57 {dimension_numbers = #tpu.dot_dimension_numbers<[2], [2], [1], [1], [0, 0, 0, 1, 1, 1], [0], [0]>} : vector<2x8x8xbf16>, vector<2x16x8xbf16>, vector<2x8x16xf32> -> vector<2x8x16xf32>
    "tpu.trace_stop"() : () -> ()
    %cst_58 = arith.constant dense<0xFF800000> : vector<2x8xf32>
    %192 = vector.multi_reduction <maximumf>, %191, %cst_58 [2] : vector<2x8x16xf32> to vector<2x8xf32>
    %193 = vector.shape_cast %192 : vector<2x8xf32> to vector<2x8x1xf32>
    %194 = vector.broadcast %193 : vector<2x8x1xf32> to vector<2x8x16xf32>
    %195 = arith.subf %191, %194 : vector<2x8x16xf32>
    %196 = math.exp %195 : vector<2x8x16xf32>
    %cst_59 = arith.constant dense<0.000000e+00> : vector<2x8xf32>
    %197 = vector.multi_reduction <add>, %196, %cst_59 [2] : vector<2x8x16xf32> to vector<2x8xf32>
    %198 = vector.shape_cast %197 : vector<2x8xf32> to vector<2x8x1xf32>
    %199 = vector.broadcast %198 : vector<2x8x1xf32> to vector<2x8x16xf32>
    %200 = arith.divf %196, %199 : vector<2x8x16xf32>
    %201 = arith.truncf %200 : vector<2x8x16xf32> to vector<2x8x16xbf16>
    %202 = vector.extract_strided_slice %158 {offsets = [0, 0, 16], sizes = [2, 16, 8], strides = [1, 1, 1]} : vector<2x16x32xbf16> to vector<2x16x8xbf16>
    "tpu.trace_start"() <{level = 10 : i32, message = "bqk,bkd->bqd"}> : () -> ()
    %cst_60 = arith.constant dense<0.000000e+00> : vector<2x8x8xf32>
    %203 = tpu.matmul %201, %202, %cst_60 {dimension_numbers = #tpu.dot_dimension_numbers<[2], [1], [1], [2], [0, 0, 0, 1, 1, 2], [0], [0]>} : vector<2x8x16xbf16>, vector<2x16x8xbf16>, vector<2x8x8xf32> -> vector<2x8x8xf32>
    "tpu.trace_stop"() : () -> ()
    %204 = vector.extract_strided_slice %154 {offsets = [0, 0, 24], sizes = [2, 8, 8], strides = [1, 1, 1]} : vector<2x8x32xbf16> to vector<2x8x8xbf16>
    %205 = vector.extract_strided_slice %156 {offsets = [0, 0, 24], sizes = [2, 16, 8], strides = [1, 1, 1]} : vector<2x16x32xbf16> to vector<2x16x8xbf16>
    "tpu.trace_start"() <{level = 10 : i32, message = "bqd,bkd->bqk"}> : () -> ()
    %cst_61 = arith.constant dense<0.000000e+00> : vector<2x8x16xf32>
    %206 = tpu.matmul %204, %205, %cst_61 {dimension_numbers = #tpu.dot_dimension_numbers<[2], [2], [1], [1], [0, 0, 0, 1, 1, 1], [0], [0]>} : vector<2x8x8xbf16>, vector<2x16x8xbf16>, vector<2x8x16xf32> -> vector<2x8x16xf32>
    "tpu.trace_stop"() : () -> ()
    %cst_62 = arith.constant dense<0xFF800000> : vector<2x8xf32>
    %207 = vector.multi_reduction <maximumf>, %206, %cst_62 [2] : vector<2x8x16xf32> to vector<2x8xf32>
    %208 = vector.shape_cast %207 : vector<2x8xf32> to vector<2x8x1xf32>
    %209 = vector.broadcast %208 : vector<2x8x1xf32> to vector<2x8x16xf32>
    %210 = arith.subf %206, %209 : vector<2x8x16xf32>
    %211 = math.exp %210 : vector<2x8x16xf32>
    %cst_63 = arith.constant dense<0.000000e+00> : vector<2x8xf32>
    %212 = vector.multi_reduction <add>, %211, %cst_63 [2] : vector<2x8x16xf32> to vector<2x8xf32>
    %213 = vector.shape_cast %212 : vector<2x8xf32> to vector<2x8x1xf32>
    %214 = vector.broadcast %213 : vector<2x8x1xf32> to vector<2x8x16xf32>
    %215 = arith.divf %211, %214 : vector<2x8x16xf32>
    %216 = arith.truncf %215 : vector<2x8x16xf32> to vector<2x8x16xbf16>
    %217 = vector.extract_strided_slice %158 {offsets = [0, 0, 24], sizes = [2, 16, 8], strides = [1, 1, 1]} : vector<2x16x32xbf16> to vector<2x16x8xbf16>
    "tpu.trace_start"() <{level = 10 : i32, message = "bqk,bkd->bqd"}> : () -> ()
    %cst_64 = arith.constant dense<0.000000e+00> : vector<2x8x8xf32>
    %218 = tpu.matmul %216, %217, %cst_64 {dimension_numbers = #tpu.dot_dimension_numbers<[2], [1], [1], [2], [0, 0, 0, 1, 1, 2], [0], [0]>} : vector<2x8x16xbf16>, vector<2x16x8xbf16>, vector<2x8x8xf32> -> vector<2x8x8xf32>
    "tpu.trace_stop"() : () -> ()
    %219 = tpu.concatenate %173, %188, %203, %218 in 2 : vector<2x8x8xf32>, vector<2x8x8xf32>, vector<2x8x8xf32>, vector<2x8x8xf32> -> vector<2x8x32xf32>
    %220 = vector.shape_cast %219 : vector<2x8x32xf32> to vector<16x32xf32>
    %221 = arith.truncf %220 : vector<16x32xf32> to vector<16x32xbf16>
    %c0_65 = arith.constant 0 : index
    %c224 = arith.constant 224 : index
    %222 = vector.load %arg2[%c0_65, %c224] : memref<32x384xbf16, #tpu.memory_space<vmem>>, vector<32x32xbf16>
    %cst_66 = arith.constant dense<0.000000e+00> : vector<16x32xf32>
    %223 = tpu.matmul %221, %222, %cst_66 {dimension_numbers = #tpu.dot_dimension_numbers<[1], [0], [0], [1], [0, 0, 1, 1], [], []>} : vector<16x32xbf16>, vector<32x32xbf16>, vector<16x32xf32> -> vector<16x32xf32>
    %c15 = arith.constant 15 : index
    %c0_67 = arith.constant 0 : index
    %224 = vector.load %arg4[%c15, %c0_67] : memref<20x32xf32, #tpu.memory_space<vmem>>, vector<1x32xf32>
    %225 = vector.broadcast %224 : vector<1x32xf32> to vector<16x32xf32>
    %226 = arith.addf %223, %225 : vector<16x32xf32>
    %c0_68 = arith.constant 0 : index
    %c256 = arith.constant 256 : index
    %227 = vector.load %arg2[%c0_68, %c256] : memref<32x384xbf16, #tpu.memory_space<vmem>>, vector<32x32xbf16>
    %cst_69 = arith.constant dense<0.000000e+00> : vector<16x32xf32>
    %228 = tpu.matmul %136, %227, %cst_69 {dimension_numbers = #tpu.dot_dimension_numbers<[1], [0], [0], [1], [0, 0, 1, 1], [], []>} : vector<16x32xbf16>, vector<32x32xbf16>, vector<16x32xf32> -> vector<16x32xf32>
    %229 = arith.truncf %226 : vector<16x32xf32> to vector<16x32xbf16>
    %c0_70 = arith.constant 0 : index
    %c288 = arith.constant 288 : index
    %230 = vector.load %arg2[%c0_70, %c288] : memref<32x384xbf16, #tpu.memory_space<vmem>>, vector<32x32xbf16>
    %cst_71 = arith.constant dense<0.000000e+00> : vector<16x32xf32>
    %231 = tpu.matmul %229, %230, %cst_71 {dimension_numbers = #tpu.dot_dimension_numbers<[1], [0], [0], [1], [0, 0, 1, 1], [], []>} : vector<16x32xbf16>, vector<32x32xbf16>, vector<16x32xf32> -> vector<16x32xf32>
    %232 = arith.addf %228, %231 : vector<16x32xf32>
    %c16 = arith.constant 16 : index
    %c0_72 = arith.constant 0 : index
    %233 = vector.load %arg4[%c16, %c0_72] : memref<20x32xf32, #tpu.memory_space<vmem>>, vector<1x32xf32>
    %234 = vector.broadcast %233 : vector<1x32xf32> to vector<16x32xf32>
    %235 = arith.addf %232, %234 : vector<16x32xf32>
    %236 = arith.negf %235 : vector<16x32xf32>
    %237 = math.exp %236 : vector<16x32xf32>
    %cst_73 = arith.constant 1.000000e+00 : f32
    %238 = vector.broadcast %cst_73 : f32 to vector<16x32xf32>
    %239 = arith.addf %238, %237 : vector<16x32xf32>
    %240 = arith.divf %238, %239 : vector<16x32xf32>
    %241 = arith.mulf %240, %135 : vector<16x32xf32>
    %cst_74 = arith.constant 1.000000e+00 : f32
    %242 = vector.broadcast %cst_74 : f32 to vector<16x32xf32>
    %243 = arith.subf %242, %240 : vector<16x32xf32>
    %244 = arith.mulf %243, %226 : vector<16x32xf32>
    %245 = arith.addf %241, %244 : vector<16x32xf32>
    %cst_75 = arith.constant dense<0.000000e+00> : vector<16xf32>
    %246 = vector.multi_reduction <add>, %245, %cst_75 [1] : vector<16x32xf32> to vector<16xf32>
    %247 = vector.shape_cast %246 : vector<16xf32> to vector<16x1xf32>
    %cst_76 = arith.constant 3.200000e+01 : f32
    %248 = vector.broadcast %cst_76 : f32 to vector<16x1xf32>
    %249 = arith.divf %247, %248 : vector<16x1xf32>
    %250 = vector.broadcast %249 : vector<16x1xf32> to vector<16x32xf32>
    %251 = arith.subf %245, %250 : vector<16x32xf32>
    %252 = arith.mulf %251, %251 : vector<16x32xf32>
    %cst_77 = arith.constant dense<0.000000e+00> : vector<16xf32>
    %253 = vector.multi_reduction <add>, %252, %cst_77 [1] : vector<16x32xf32> to vector<16xf32>
    %254 = vector.shape_cast %253 : vector<16xf32> to vector<16x1xf32>
    %cst_78 = arith.constant 3.200000e+01 : f32
    %255 = vector.broadcast %cst_78 : f32 to vector<16x1xf32>
    %256 = arith.divf %254, %255 : vector<16x1xf32>
    %cst_79 = arith.constant 9.99999974E-6 : f32
    %257 = vector.broadcast %cst_79 : f32 to vector<16x1xf32>
    %258 = arith.addf %256, %257 : vector<16x1xf32>
    %259 = math.rsqrt %258 : vector<16x1xf32>
    %260 = vector.broadcast %259 : vector<16x1xf32> to vector<16x32xf32>
    %261 = arith.mulf %251, %260 : vector<16x32xf32>
    %c6 = arith.constant 6 : index
    %c0_80 = arith.constant 0 : index
    %262 = vector.load %arg4[%c6, %c0_80] : memref<20x32xf32, #tpu.memory_space<vmem>>, vector<1x32xf32>
    %263 = vector.broadcast %262 : vector<1x32xf32> to vector<16x32xf32>
    %264 = arith.mulf %261, %263 : vector<16x32xf32>
    %c7 = arith.constant 7 : index
    %c0_81 = arith.constant 0 : index
    %265 = vector.load %arg4[%c7, %c0_81] : memref<20x32xf32, #tpu.memory_space<vmem>>, vector<1x32xf32>
    %266 = vector.broadcast %265 : vector<1x32xf32> to vector<16x32xf32>
    %267 = arith.addf %264, %266 : vector<16x32xf32>
    %268 = arith.addf %113, %267 : vector<16x32xf32>
    %cst_82 = arith.constant dense<0.000000e+00> : vector<16xf32>
    %269 = vector.multi_reduction <add>, %268, %cst_82 [1] : vector<16x32xf32> to vector<16xf32>
    %270 = vector.shape_cast %269 : vector<16xf32> to vector<16x1xf32>
    %cst_83 = arith.constant 3.200000e+01 : f32
    %271 = vector.broadcast %cst_83 : f32 to vector<16x1xf32>
    %272 = arith.divf %270, %271 : vector<16x1xf32>
    %273 = vector.broadcast %272 : vector<16x1xf32> to vector<16x32xf32>
    %274 = arith.subf %268, %273 : vector<16x32xf32>
    %275 = arith.mulf %274, %274 : vector<16x32xf32>
    %cst_84 = arith.constant dense<0.000000e+00> : vector<16xf32>
    %276 = vector.multi_reduction <add>, %275, %cst_84 [1] : vector<16x32xf32> to vector<16xf32>
    %277 = vector.shape_cast %276 : vector<16xf32> to vector<16x1xf32>
    %cst_85 = arith.constant 3.200000e+01 : f32
    %278 = vector.broadcast %cst_85 : f32 to vector<16x1xf32>
    %279 = arith.divf %277, %278 : vector<16x1xf32>
    %cst_86 = arith.constant 9.99999974E-6 : f32
    %280 = vector.broadcast %cst_86 : f32 to vector<16x1xf32>
    %281 = arith.addf %279, %280 : vector<16x1xf32>
    %282 = math.rsqrt %281 : vector<16x1xf32>
    %283 = vector.broadcast %282 : vector<16x1xf32> to vector<16x32xf32>
    %284 = arith.mulf %274, %283 : vector<16x32xf32>
    %c4 = arith.constant 4 : index
    %c0_87 = arith.constant 0 : index
    %285 = vector.load %arg4[%c4, %c0_87] : memref<20x32xf32, #tpu.memory_space<vmem>>, vector<1x32xf32>
    %286 = vector.broadcast %285 : vector<1x32xf32> to vector<16x32xf32>
    %287 = arith.mulf %284, %286 : vector<16x32xf32>
    %c5 = arith.constant 5 : index
    %c0_88 = arith.constant 0 : index
    %288 = vector.load %arg4[%c5, %c0_88] : memref<20x32xf32, #tpu.memory_space<vmem>>, vector<1x32xf32>
    %289 = vector.broadcast %288 : vector<1x32xf32> to vector<16x32xf32>
    %290 = arith.addf %287, %289 : vector<16x32xf32>
    %c17 = arith.constant 17 : index
    %c0_89 = arith.constant 0 : index
    %291 = vector.load %arg4[%c17, %c0_89] : memref<20x32xf32, #tpu.memory_space<vmem>>, vector<1x32xf32>
    %c18 = arith.constant 18 : index
    %c0_90 = arith.constant 0 : index
    %292 = vector.load %arg4[%c18, %c0_90] : memref<20x32xf32, #tpu.memory_space<vmem>>, vector<1x32xf32>
    %293 = tpu.concatenate %291, %292 in 1 : vector<1x32xf32>, vector<1x32xf32> -> vector<1x64xf32>
    %294 = arith.truncf %290 : vector<16x32xf32> to vector<16x32xbf16>
    %c0_91 = arith.constant 0 : index
    %c320 = arith.constant 320 : index
    %295 = vector.load %arg2[%c0_91, %c320] : memref<32x384xbf16, #tpu.memory_space<vmem>>, vector<32x64xbf16>
    %cst_92 = arith.constant dense<0.000000e+00> : vector<16x64xf32>
    %296 = tpu.matmul %294, %295, %cst_92 {dimension_numbers = #tpu.dot_dimension_numbers<[1], [0], [0], [1], [0, 0, 1, 1], [], []>} : vector<16x32xbf16>, vector<32x64xbf16>, vector<16x64xf32> -> vector<16x64xf32>
    %297 = vector.broadcast %293 : vector<1x64xf32> to vector<16x64xf32>
    %298 = arith.addf %296, %297 : vector<16x64xf32>
    %cst_93 = arith.constant 5.000000e-01 : f32
    %299 = vector.broadcast %cst_93 : f32 to vector<16x64xf32>
    %300 = arith.mulf %299, %298 : vector<16x64xf32>
    %cst_94 = arith.constant 0.707106769 : f32
    %301 = vector.broadcast %cst_94 : f32 to vector<16x64xf32>
    %302 = arith.mulf %298, %301 : vector<16x64xf32>
    %303 = math.absf %302 : vector<16x64xf32>
    %cst_95 = arith.constant 0.327591091 : f32
    %304 = vector.broadcast %cst_95 : f32 to vector<16x64xf32>
    %305 = arith.mulf %304, %303 : vector<16x64xf32>
    %cst_96 = arith.constant 1.000000e+00 : f32
    %306 = vector.broadcast %cst_96 : f32 to vector<16x64xf32>
    %307 = arith.addf %306, %305 : vector<16x64xf32>
    %cst_97 = arith.constant 1.000000e+00 : f32
    %308 = vector.broadcast %cst_97 : f32 to vector<16x64xf32>
    %309 = arith.divf %308, %307 : vector<16x64xf32>
    %cst_98 = arith.constant 1.06140542 : f32
    %310 = vector.broadcast %cst_98 : f32 to vector<16x64xf32>
    %311 = arith.mulf %310, %309 : vector<16x64xf32>
    %cst_99 = arith.constant -1.45315206 : f32
    %312 = vector.broadcast %cst_99 : f32 to vector<16x64xf32>
    %313 = arith.addf %311, %312 : vector<16x64xf32>
    %314 = arith.mulf %313, %309 : vector<16x64xf32>
    %cst_100 = arith.constant 1.42141378 : f32
    %315 = vector.broadcast %cst_100 : f32 to vector<16x64xf32>
    %316 = arith.addf %314, %315 : vector<16x64xf32>
    %317 = arith.mulf %316, %309 : vector<16x64xf32>
    %cst_101 = arith.constant -0.284496725 : f32
    %318 = vector.broadcast %cst_101 : f32 to vector<16x64xf32>
    %319 = arith.addf %317, %318 : vector<16x64xf32>
    %320 = arith.mulf %319, %309 : vector<16x64xf32>
    %cst_102 = arith.constant 0.254829586 : f32
    %321 = vector.broadcast %cst_102 : f32 to vector<16x64xf32>
    %322 = arith.addf %320, %321 : vector<16x64xf32>
    %323 = arith.mulf %322, %309 : vector<16x64xf32>
    %cst_103 = arith.constant 0.000000e+00 : f32
    %324 = vector.broadcast %cst_103 : f32 to vector<16x64xf32>
    %325 = arith.subf %324, %303 : vector<16x64xf32>
    %326 = arith.mulf %325, %303 : vector<16x64xf32>
    %327 = math.exp %326 : vector<16x64xf32>
    %328 = arith.mulf %323, %327 : vector<16x64xf32>
    %cst_104 = arith.constant 1.000000e+00 : f32
    %329 = vector.broadcast %cst_104 : f32 to vector<16x64xf32>
    %330 = arith.subf %329, %328 : vector<16x64xf32>
    %cst_105 = arith.constant 0.000000e+00 : f32
    %331 = vector.broadcast %cst_105 : f32 to vector<16x64xf32>
    %332 = arith.cmpf oge, %302, %331 : vector<16x64xf32>
    %cst_106 = arith.constant 0.000000e+00 : f32
    %333 = vector.broadcast %cst_106 : f32 to vector<16x64xf32>
    %334 = arith.subf %333, %330 : vector<16x64xf32>
    %335 = arith.select %332, %330, %334 : vector<16x64xi1>, vector<16x64xf32>
    %cst_107 = arith.constant 1.000000e+00 : f32
    %336 = vector.broadcast %cst_107 : f32 to vector<16x64xf32>
    %337 = arith.addf %336, %335 : vector<16x64xf32>
    %338 = arith.mulf %300, %337 : vector<16x64xf32>
    %339 = arith.truncf %338 : vector<16x64xf32> to vector<16x64xbf16>
    %c0_108 = arith.constant 0 : index
    %c0_109 = arith.constant 0 : index
    %340 = vector.load %arg3[%c0_108, %c0_109] : memref<64x32xbf16, #tpu.memory_space<vmem>>, vector<64x32xbf16>
    %cst_110 = arith.constant dense<0.000000e+00> : vector<16x32xf32>
    %341 = tpu.matmul %339, %340, %cst_110 {dimension_numbers = #tpu.dot_dimension_numbers<[1], [0], [0], [1], [0, 0, 1, 1], [], []>} : vector<16x64xbf16>, vector<64x32xbf16>, vector<16x32xf32> -> vector<16x32xf32>
    %c19 = arith.constant 19 : index
    %c0_111 = arith.constant 0 : index
    %342 = vector.load %arg4[%c19, %c0_111] : memref<20x32xf32, #tpu.memory_space<vmem>>, vector<1x32xf32>
    %343 = vector.broadcast %342 : vector<1x32xf32> to vector<16x32xf32>
    %344 = arith.addf %341, %343 : vector<16x32xf32>
    %345 = arith.addf %268, %344 : vector<16x32xf32>
    %c0_112 = arith.constant 0 : index
    %c0_113 = arith.constant 0 : index
    %346 = vector.load %arg5[%c0_112, %c0_113] : memref<16x32xf32, #tpu.memory_space<vmem>>, vector<16x32xf32>
    tpu.vector_store %arg5[%c0_112, %c0_113], %345 {strides = array<i32>} : memref<16x32xf32, #tpu.memory_space<vmem>>, vector<16x32xf32>,
    return
  }
}

</mosaic_0001>

<llo_original>
// kernel: fwd.1
$region0: #{fwd.1}
  #allocation0 [shape = 'u32[]', space=smem, size = 0x4, offset = 0x4, fixed_abs, tag = 'smem constant byte address 0x4 - core index']
  #allocation1 [shape = 'u32[144,128]{1,0:T(1,128)}', space=vmem, size = 0x12000, scoped, tag = 'internal scratch']
  %s0 = inlined_call_operand.hbm [shape: f32[16,32], index: 0, kind: input, shape index: {}]
  %s1 = inlined_call_operand.hbm [shape: f32[32,32], index: 1, kind: input, shape index: {}]
  %s2 = inlined_call_operand.vmem [shape: bf16[32,384], index: 2, kind: input, shape index: {}]
  %s3 = inlined_call_operand.vmem [shape: bf16[64,32], index: 3, kind: input, shape index: {}]
  %s4 = inlined_call_operand.hbm [shape: f32[20,32], index: 4, kind: input, shape index: {}]
  %s5 = inlined_call_operand.hbm [shape: f32[16,32], index: 5, kind: output, shape index: {}]
  %s6 = sld [smem:[#allocation0]]
  $region42: #{fwd.1} parent=0
    _
  %s8 = ssub.s32 1, %s6
  %s9 = scalar_select 0, %s8, %s6
  $region1: #{fwd.1} parent=0
    #allocation2 [shape = 'u8[8192]{0}', space=vmem, size = 0x2000, scoped, tag = 'input window, operand 0, single buffered']
    #allocation3 [shape = 's32[1]{0}', space=sflag, size = 0x4, scoped, tag = 'scoped memory for fwd.1']
    #allocation4 [shape = 's32[1]{0}', space=sflag, size = 0x4, scoped, tag = 'scoped memory for fwd.1']
    #allocation5 [shape = 'u8[16384]{0}', space=vmem, size = 0x4000, scoped, tag = 'input window, operand 1, single buffered']
    #allocation6 [shape = 's32[1]{0}', space=sflag, size = 0x4, scoped, tag = 'scoped memory for fwd.1']
    #allocation7 [shape = 'u8[12288]{0}', space=vmem, size = 0x3000, scoped, tag = 'input window, operand 4, single buffered']
    #allocation8 [shape = 'u8[8192]{0}', space=vmem, size = 0x2000, scoped, tag = 'output window, operand 0, single buffered']
    %10 = vsyncpa [#allocation3], 0
    %11 = vsyncpa [#allocation6], 0
    %12 = vsyncpa [#allocation4], 0
    // Predicated region
    $region2: #{fwd.1} parent=1 // pred_check
      _
    $region3: #{fwd.1} parent=1 // pred_check_branch
      %14 = sbr.rel (0) target = $region5
    $region4: #{fwd.1} parent=1 // pred_region
      %s16 = ssub.s32 256, 256
      %17 = vsyncadd [#allocation3], %s16
      %s18 = sshll.u32 [#allocation2], 4
      %s19 = int_to_ptr.vmem [resolvable:$true] %s18
      %24 = dma.hbm_to_vmem [thread:$0]  %s0, 256, %s19, [#allocation3], 128, 128, 8
    $region5: #{fwd.1} parent=1 // pred_fallthru
      _
    // Predicated region
    $region6: #{fwd.1} parent=1 // pred_check
      _
    $region7: #{fwd.1} parent=1 // pred_check_branch
      %26 = sbr.rel (0) target = $region9
    $region8: #{fwd.1} parent=1 // pred_region
      %s28 = ssub.s32 512, 512
      %29 = vsyncadd [#allocation6], %s28
      %s30 = sshll.u32 [#allocation5], 4
      %s31 = int_to_ptr.vmem [resolvable:$true] %s30
      %36 = dma.hbm_to_vmem [thread:$0]  %s1, 512, %s31, [#allocation6], 128, 128, 8
    $region9: #{fwd.1} parent=1 // pred_fallthru
      _
    // Predicated region
    $region10: #{fwd.1} parent=1 // pred_check
      _
    $region11: #{fwd.1} parent=1 // pred_check_branch
      %38 = sbr.rel (0) target = $region13
    $region12: #{fwd.1} parent=1 // pred_region
      _
    $region13: #{fwd.1} parent=1 // pred_fallthru
      _
    // Predicated region
    $region14: #{fwd.1} parent=1 // pred_check
      _
    $region15: #{fwd.1} parent=1 // pred_check_branch
      %40 = sbr.rel (0) target = $region17
    $region16: #{fwd.1} parent=1 // pred_region
      _
    $region17: #{fwd.1} parent=1 // pred_fallthru
      _
    // Predicated region
    $region18: #{fwd.1} parent=1 // pred_check
      _
    $region19: #{fwd.1} parent=1 // pred_check_branch
      %42 = sbr.rel (0) target = $region21
    $region20: #{fwd.1} parent=1 // pred_region
      %s44 = ssub.s32 384, 384
      %45 = vsyncadd [#allocation6], %s44
      %s46 = sshll.u32 [#allocation7], 4
      %s47 = int_to_ptr.vmem [resolvable:$true] %s46
      %52 = dma.hbm_to_vmem [thread:$0]  %s4, 384, %s47, [#allocation6], 128, 128, 8
    $region21: #{fwd.1} parent=1 // pred_fallthru
      _
    // Predicated region
    $region22: #{fwd.1} parent=1 // pred_check
      _
    $region23: #{fwd.1} parent=1 // pred_check_branch
      %54 = sbr.rel (0) target = $region25
    $region24: #{fwd.1} parent=1 // pred_region
      %55 = dma.done [#allocation3], 256
    $region25: #{fwd.1} parent=1 // pred_fallthru
      _
    // Predicated region
    $region26: #{fwd.1} parent=1 // pred_check
      _
    $region27: #{fwd.1} parent=1 // pred_check_branch
      %57 = sbr.rel (0) target = $region29
    $region28: #{fwd.1} parent=1 // pred_region
      %58 = dma.done [#allocation6], 512
    $region29: #{fwd.1} parent=1 // pred_fallthru
      _
    // Predicated region
    $region30: #{fwd.1} parent=1 // pred_check
      _
    $region31: #{fwd.1} parent=1 // pred_check_branch
      %60 = sbr.rel (0) target = $region33
    $region32: #{fwd.1} parent=1 // pred_region
      %61 = dma.done [#allocation6], 384
    $region33: #{fwd.1} parent=1 // pred_fallthru
      _
    %v63 = vld [vmem:[#allocation2] sm:$0xff]
    %v64 = vld [vmem:[#allocation2 + $0x8] sm:$0xff]
    %v65 = vld [vmem:[#allocation5] sm:$0xff]
    %v66 = vld [vmem:[#allocation5 + $0x8] sm:$0xff]
    %v67 = vld [vmem:[#allocation5 + $0x10] sm:$0xff]
    %v68 = vld [vmem:[#allocation5 + $0x18] sm:$0xff]
    %vm69 = vcmask 261120
    %v70 = vsel %vm69, %v63, 0.0
    %71 = vadd.xlane.f32.xlu0 %v70
    %v72 = vpop.xlane.xlu0 %71
    %v73 = vsel %vm69, %v64, 0.0
    %74 = vadd.xlane.f32.xlu0 %v73
    %v75 = vpop.xlane.xlu0 %74
    %v76 = vrcp.pop 32.0
    %v77 = vmul.f32 %v72, %v76
    %v78 = vmul.f32 %v75, %v76
    %v79 = vsub.f32 %v63, %v77
    %v80 = vsub.f32 %v64, %v78
    %v81 = vmul.f32 %v79, %v79
    %v82 = vmul.f32 %v80, %v80
    %v83 = vsel %vm69, %v81, 0.0
    %84 = vadd.xlane.f32.xlu0 %v83
    %v85 = vpop.xlane.xlu0 %84
    %v86 = vsel %vm69, %v82, 0.0
    %87 = vadd.xlane.f32.xlu0 %v86
    %v88 = vpop.xlane.xlu0 %87
    %v89 = vmul.f32 %v85, %v76
    %v90 = vmul.f32 %v88, %v76
    %v91 = vadd.f32 %v89, 1e-05
    %v92 = vadd.f32 %v90, 1e-05
    %v93 = vrsqrt.pop %v91
    %v94 = vrsqrt.pop %v92
    %v95 = vmul.f32 %v79, %v93
    %v96 = vmul.f32 %v80, %v94
    %v97 = vld [vmem:[#allocation7] sm:$0x1]
    %v98 = vlaneseq
    %v99 = vshrl.u32 %v98, 7
    %v100 = vsub.s32 0, %v99
    %v101 = vrot.slane %v97, %v100
    %v102 = vmul.f32 %v95, %v101
    %v103 = vmul.f32 %v96, %v101
    %v104 = vld [vmem:[#allocation7 + $0x1] sm:$0x1]
    %v105 = vlaneseq
    %v106 = vshrl.u32 %v105, 7
    %v107 = vsub.s32 0, %v106
    %v108 = vrot.slane %v104, %v107
    %v109 = vadd.f32 %v102, %v108
    %v110 = vadd.f32 %v103, %v108
    %v111 = vpack.c.bf16 %v110, %v109
    %v112 = vld [vmem:[%s2] sm:$0xf]
    %v113 = vld [vmem:[%s2 + $0xc] sm:$0xf]
    %v114 = vld [vmem:[%s2 + $0x18] sm:$0xf]
    %v115 = vld [vmem:[%s2 + $0x24] sm:$0xf]
    %v120 = vunpack.c.l.b16 %v112
    %v121 = vunpack.c.l.b16 %v113
    %v122 = vunpack.c.l.b16 %v114
    %v123 = vunpack.c.l.b16 %v115
    %v124 = vpack.c.b16 %v121, %v120
    %v125 = vpack.c.b16 %v123, %v122
    %v129 = vsel %vm69, %v111, 0
    %131 = vmatprep.subr.bf16.mxu0 0
    %132 = vmatpush1.bf16.msra.mxu0 0
    %133 = vmatprep.subr.bf16.mxu0 0
    %134 = vmatpush1.bf16.msra.mxu0 0
    %135 = vmatprep.subr.bf16.mxu0 0
    %136 = vmatpush1.bf16.msra.mxu0 0
    %137 = vmatprep.subr.bf16.mxu0 0
    %138 = vmatpush1.bf16.msra.mxu0 0
    %139 = vmatprep.subr.bf16.mxu0 0
    %140 = vmatpush1.bf16.msra.mxu0 0
    %141 = vmatprep.subr.bf16.mxu0 0
    %142 = vmatpush1.bf16.msra.mxu0 0
    %143 = vmatprep.subr.bf16.mxu0 0
    %144 = vmatpush1.bf16.msra.mxu0 %v125
    %145 = vmatprep.subr.bf16.mxu0 0
    %146 = vmatpush1.bf16.msra.mxu0 %v124
    %147 = vmatprep.subr.bf16.mxu0 0
    %148 = vmatpush2.bf16.msra.mxu0 0
    %149 = vmatprep.subr.bf16.mxu0 0
    %150 = vmatpush2.bf16.msra.mxu0 0
    %151 = vmatprep.subr.bf16.mxu0 0
    %152 = vmatpush2.bf16.msra.mxu0 0
    %153 = vmatprep.subr.bf16.mxu0 0
    %154 = vmatpush2.bf16.msra.mxu0 0
    %155 = vmatprep.subr.bf16.mxu0 0
    %156 = vmatpush2.bf16.msra.mxu0 0
    %157 = vmatprep.subr.bf16.mxu0 0
    %158 = vmatpush2.bf16.msra.mxu0 0
    %159 = vmatprep.subr.bf16.mxu0 0
    %160 = vmatpush2.bf16.msra.mxu0 0
    %161 = vmatprep.subr.bf16.mxu0 0
    %162 = vmatpush2.bf16.msra.mxu0 0
    %163 = vmatprep.mubr.bf16.mxu0 0
    %164 = vmatmul.mubr.bf16.gmra.mxu0 %v129
    %v165 = vpop.f32.mrf.mxu0
    %v166 = vadd.f32 0.0, %v165
    %v167 = vpop.f32.mrf.mxu0
    %v168 = vpop.f32.mrf.mxu0
    %v169 = vadd.f32 0.0, %v168
    %v170 = vpop.f32.mrf.mxu0
    %171 = vdwg.mxu0
    %v172 = vld [vmem:[#allocation7 + $0x8] sm:$0x1]
    %v173 = vlaneseq
    %v174 = vshrl.u32 %v173, 7
    %v175 = vsub.s32 0, %v174
    %v176 = vrot.slane %v172, %v175
    %v177 = vadd.f32 %v166, %v176
    %v178 = vadd.f32 %v169, %v176
    %v179 = vld [vmem:[#allocation7 + $0x9] sm:$0x1]
    %v180 = vlaneseq
    %v181 = vshrl.u32 %v180, 7
    %v182 = vsub.s32 0, %v181
    %v183 = vrot.slane %v179, %v182
    %185 = vrot.lane.b32.xlu0 %v183, 32
    %v186 = vpop.permute.xlu0 %185
    %v188 = vadd.f32 %v166, %v186
    %v189 = vadd.f32 %v169, %v186
    %v190 = vld [vmem:[#allocation7 + $0xa] sm:$0x1]
    %v191 = vlaneseq
    %v192 = vshrl.u32 %v191, 7
    %v193 = vsub.s32 0, %v192
    %v194 = vrot.slane %v190, %v193
    %196 = vrot.lane.b32.xlu0 %v194, 64
    %v197 = vpop.permute.xlu0 %196
    %v199 = vadd.f32 %v166, %v197
    %v200 = vadd.f32 %v169, %v197
    %v201 = vpack.c.bf16 %v177, %v177
    %v202 = vpack.c.bf16 %v178, %v178
    %v203 = vpack.c.bf16 %v188, %v188
    %v204 = vpack.c.bf16 %v189, %v189
    %v205 = vpack.c.bf16 %v199, %v199
    %v206 = vpack.c.bf16 %v200, %v200
    %208 = vrot.lane.b32.xlu0 %v203, 96
    %v209 = vpop.permute.xlu0 %208
    %vm210 = vcmask 64512
    %v212 = vsel %vm210, %v201, 0
    %v215 = vsel %vm210, %v209, 0
    %217 = vmatprep.subr.bf16.mxu0 0
    %218 = vmatpush1.bf16.xpose.msra.mxu0 0
    %219 = vmatprep.subr.bf16.mxu0 0
    %220 = vmatpush1.bf16.xpose.msra.mxu0 0
    %221 = vmatprep.subr.bf16.mxu0 0
    %222 = vmatpush1.bf16.xpose.msra.mxu0 0
    %223 = vmatprep.subr.bf16.mxu0 0
    %224 = vmatpush1.bf16.xpose.msra.mxu0 0
    %225 = vmatprep.subr.bf16.mxu0 0
    %226 = vmatpush1.bf16.xpose.msra.mxu0 0
    %227 = vmatprep.subr.bf16.mxu0 0
    %228 = vmatpush1.bf16.xpose.msra.mxu0 0
    %229 = vmatprep.subr.bf16.mxu0 0
    %230 = vmatpush1.bf16.xpose.msra.mxu0 0
    %231 = vmatprep.subr.bf16.mxu0 0
    %232 = vmatpush1.bf16.xpose.msra.mxu0 %v215
    %233 = vmatprep.subr.bf16.mxu0 0
    %234 = vmatpush2.bf16.xpose.msra.mxu0 0
    %235 = vmatprep.subr.bf16.mxu0 0
    %236 = vmatpush2.bf16.xpose.msra.mxu0 0
    %237 = vmatprep.subr.bf16.mxu0 0
    %238 = vmatpush2.bf16.xpose.msra.mxu0 0
    %239 = vmatprep.subr.bf16.mxu0 0
    %240 = vmatpush2.bf16.xpose.msra.mxu0 0
    %241 = vmatprep.subr.bf16.mxu0 0
    %242 = vmatpush2.bf16.xpose.msra.mxu0 0
    %243 = vmatprep.subr.bf16.mxu0 0
    %244 = vmatpush2.bf16.xpose.msra.mxu0 0
    %245 = vmatprep.subr.bf16.mxu0 0
    %246 = vmatpush2.bf16.xpose.msra.mxu0 0
    %247 = vmatprep.subr.bf16.mxu0 0
    %248 = vmatpush2.bf16.xpose.msra.mxu0 0
    %249 = vmatprep.mubr.bf16.mxu0 0
    %250 = vmatmul.mubr.bf16.gmra.mxu0 %v212
    %v251 = vpop.f32.mrf.mxu0
    %v252 = vadd.f32 0.0, %v251
    %v253 = vpop.f32.mrf.mxu0
    %v254 = vpop.f32.mrf.mxu0
    %v255 = vpop.f32.mrf.mxu0
    %256 = vdwg.mxu0
    %258 = vrot.lane.b32.xlu0 %v204, 96
    %v259 = vpop.permute.xlu0 %258
    %v261 = vsel %vm210, %v202, 0
    %v264 = vsel %vm210, %v259, 0
    %266 = vmatprep.subr.bf16.mxu0 0
    %267 = vmatpush1.bf16.xpose.msra.mxu0 0
    %268 = vmatprep.subr.bf16.mxu0 0
    %269 = vmatpush1.bf16.xpose.msra.mxu0 0
    %270 = vmatprep.subr.bf16.mxu0 0
    %271 = vmatpush1.bf16.xpose.msra.mxu0 0
    %272 = vmatprep.subr.bf16.mxu0 0
    %273 = vmatpush1.bf16.xpose.msra.mxu0 0
    %274 = vmatprep.subr.bf16.mxu0 0
    %275 = vmatpush1.bf16.xpose.msra.mxu0 0
    %276 = vmatprep.subr.bf16.mxu0 0
    %277 = vmatpush1.bf16.xpose.msra.mxu0 0
    %278 = vmatprep.subr.bf16.mxu0 0
    %279 = vmatpush1.bf16.xpose.msra.mxu0 0
    %280 = vmatprep.subr.bf16.mxu0 0
    %281 = vmatpush1.bf16.xpose.msra.mxu0 %v264
    %282 = vmatprep.subr.bf16.mxu0 0
    %283 = vmatpush2.bf16.xpose.msra.mxu0 0
    %284 = vmatprep.subr.bf16.mxu0 0
    %285 = vmatpush2.bf16.xpose.msra.mxu0 0
    %286 = vmatprep.subr.bf16.mxu0 0
    %287 = vmatpush2.bf16.xpose.msra.mxu0 0
    %288 = vmatprep.subr.bf16.mxu0 0
    %289 = vmatpush2.bf16.xpose.msra.mxu0 0
    %290 = vmatprep.subr.bf16.mxu0 0
    %291 = vmatpush2.bf16.xpose.msra.mxu0 0
    %292 = vmatprep.subr.bf16.mxu0 0
    %293 = vmatpush2.bf16.xpose.msra.mxu0 0
    %294 = vmatprep.subr.bf16.mxu0 0
    %295 = vmatpush2.bf16.xpose.msra.mxu0 0
    %296 = vmatprep.subr.bf16.mxu0 0
    %297 = vmatpush2.bf16.xpose.msra.mxu0 0
    %298 = vmatprep.mubr.bf16.mxu0 0
    %299 = vmatmul.mubr.bf16.gmra.mxu0 %v261
    %v300 = vpop.f32.mrf.mxu0
    %v301 = vadd.f32 0.0, %v300
    %v302 = vpop.f32.mrf.mxu0
    %v303 = vpop.f32.mrf.mxu0
    %v304 = vpop.f32.mrf.mxu0
    %305 = vdwg.mxu0
    %v306 = vsel %vm210, %v252, -inf
    %307 = vmax.xlane.f32.xlu0 %v306
    %v308 = vpop.xlane.xlu0 %307
    %v309 = vsel %vm210, %v301, -inf
    %310 = vmax.xlane.f32.xlu0 %v309
    %v311 = vpop.xlane.xlu0 %310
    %v312 = vsub.f32 %v252, %v308
    %v313 = vsub.f32 %v301, %v311
    %v314 = vmul.f32 %v312, 1.442695
    %v315 = vpow.pop %v314
    %v316 = vmul.f32 %v313, 1.442695
    %v317 = vpow.pop %v316
    %v318 = vsel %vm210, %v315, 0.0
    %319 = vadd.xlane.f32.xlu0 %v318
    %v320 = vpop.xlane.xlu0 %319
    %v321 = vsel %vm210, %v317, 0.0
    %322 = vadd.xlane.f32.xlu0 %v321
    %v323 = vpop.xlane.xlu0 %322
    %v324 = vrcp.pop %v320
    %v325 = vmul.f32 %v315, %v324
    %v326 = vrcp.pop %v323
    %v327 = vmul.f32 %v317, %v326
    %v328 = vpack.c.bf16 %v325, %v325
    %v329 = vpack.c.bf16 %v327, %v327
    %331 = vrot.lane.b32.xlu0 %v205, 64
    %v332 = vpop.permute.xlu0 %331
    %v334 = vsel %vm210, %v328, 0
    %vm336 = vcmask 1043456
    %v338 = vsel %vm336, %v332, 0
    %340 = vmatprep.subr.bf16.mxu0 0
    %341 = vmatpush1.bf16.msra.mxu0 0
    %342 = vmatprep.subr.bf16.mxu0 0
    %343 = vmatpush1.bf16.msra.mxu0 0
    %344 = vmatprep.subr.bf16.mxu0 0
    %345 = vmatpush1.bf16.msra.mxu0 0
    %346 = vmatprep.subr.bf16.mxu0 0
    %347 = vmatpush1.bf16.msra.mxu0 0
    %348 = vmatprep.subr.bf16.mxu0 0
    %349 = vmatpush1.bf16.msra.mxu0 0
    %350 = vmatprep.subr.bf16.mxu0 0
    %351 = vmatpush1.bf16.msra.mxu0 0
    %352 = vmatprep.subr.bf16.mxu0 0
    %353 = vmatpush1.bf16.msra.mxu0 0
    %354 = vmatprep.subr.bf16.mxu0 0
    %355 = vmatpush1.bf16.msra.mxu0 %v338
    %356 = vmatprep.subr.bf16.mxu0 0
    %357 = vmatpush2.bf16.msra.mxu0 0
    %358 = vmatprep.subr.bf16.mxu0 0
    %359 = vmatpush2.bf16.msra.mxu0 0
    %360 = vmatprep.subr.bf16.mxu0 0
    %361 = vmatpush2.bf16.msra.mxu0 0
    %362 = vmatprep.subr.bf16.mxu0 0
    %363 = vmatpush2.bf16.msra.mxu0 0
    %364 = vmatprep.subr.bf16.mxu0 0
    %365 = vmatpush2.bf16.msra.mxu0 0
    %366 = vmatprep.subr.bf16.mxu0 0
    %367 = vmatpush2.bf16.msra.mxu0 0
    %368 = vmatprep.subr.bf16.mxu0 0
    %369 = vmatpush2.bf16.msra.mxu0 0
    %370 = vmatprep.subr.bf16.mxu0 0
    %371 = vmatpush2.bf16.msra.mxu0 0
    %372 = vmatprep.mubr.bf16.mxu0 0
    %373 = vmatmul.mubr.bf16.gmra.mxu0 %v334
    %v374 = vpop.f32.mrf.mxu0
    %v375 = vadd.f32 0.0, %v374
    %v376 = vpop.f32.mrf.mxu0
    %v377 = vpop.f32.mrf.mxu0
    %v378 = vpop.f32.mrf.mxu0
    %379 = vdwg.mxu0
    %381 = vrot.lane.b32.xlu0 %v206, 64
    %v382 = vpop.permute.xlu0 %381
    %v384 = vsel %vm210, %v329, 0
    %v387 = vsel %vm336, %v382, 0
    %389 = vmatprep.subr.bf16.mxu0 0
    %390 = vmatpush1.bf16.msra.mxu0 0
    %391 = vmatprep.subr.bf16.mxu0 0
    %392 = vmatpush1.bf16.msra.mxu0 0
    %393 = vmatprep.subr.bf16.mxu0 0
    %394 = vmatpush1.bf16.msra.mxu0 0
    %395 = vmatprep.subr.bf16.mxu0 0
    %396 = vmatpush1.bf16.msra.mxu0 0
    %397 = vmatprep.subr.bf16.mxu0 0
    %398 = vmatpush1.bf16.msra.mxu0 0
    %399 = vmatprep.subr.bf16.mxu0 0
    %400 = vmatpush1.bf16.msra.mxu0 0
    %401 = vmatprep.subr.bf16.mxu0 0
    %402 = vmatpush1.bf16.msra.mxu0 0
    %403 = vmatprep.subr.bf16.mxu0 0
    %404 = vmatpush1.bf16.msra.mxu0 %v387
    %405 = vmatprep.subr.bf16.mxu0 0
    %406 = vmatpush2.bf16.msra.mxu0 0
    %407 = vmatprep.subr.bf16.mxu0 0
    %408 = vmatpush2.bf16.msra.mxu0 0
    %409 = vmatprep.subr.bf16.mxu0 0
    %410 = vmatpush2.bf16.msra.mxu0 0
    %411 = vmatprep.subr.bf16.mxu0 0
    %412 = vmatpush2.bf16.msra.mxu0 0
    %413 = vmatprep.subr.bf16.mxu0 0
    %414 = vmatpush2.bf16.msra.mxu0 0
    %415 = vmatprep.subr.bf16.mxu0 0
    %416 = vmatpush2.bf16.msra.mxu0 0
    %417 = vmatprep.subr.bf16.mxu0 0
    %418 = vmatpush2.bf16.msra.mxu0 0
    %419 = vmatprep.subr.bf16.mxu0 0
    %420 = vmatpush2.bf16.msra.mxu0 0
    %421 = vmatprep.mubr.bf16.mxu0 0
    %422 = vmatmul.mubr.bf16.gmra.mxu0 %v384
    %v423 = vpop.f32.mrf.mxu0
    %v424 = vadd.f32 0.0, %v423
    %v425 = vpop.f32.mrf.mxu0
    %v426 = vpop.f32.mrf.mxu0
    %v427 = vpop.f32.mrf.mxu0
    %428 = vdwg.mxu0
    %430 = vrot.lane.b32.xlu0 %v201, 120
    %v431 = vpop.permute.xlu0 %430
    %432 = vrot.lane.b32.xlu0 %v203, 88
    %v433 = vpop.permute.xlu0 %432
    %v435 = vsel %vm210, %v431, 0
    %v438 = vsel %vm210, %v433, 0
    %440 = vmatprep.subr.bf16.mxu0 0
    %441 = vmatpush1.bf16.xpose.msra.mxu0 0
    %442 = vmatprep.subr.bf16.mxu0 0
    %443 = vmatpush1.bf16.xpose.msra.mxu0 0
    %444 = vmatprep.subr.bf16.mxu0 0
    %445 = vmatpush1.bf16.xpose.msra.mxu0 0
    %446 = vmatprep.subr.bf16.mxu0 0
    %447 = vmatpush1.bf16.xpose.msra.mxu0 0
    %448 = vmatprep.subr.bf16.mxu0 0
    %449 = vmatpush1.bf16.xpose.msra.mxu0 0
    %450 = vmatprep.subr.bf16.mxu0 0
    %451 = vmatpush1.bf16.xpose.msra.mxu0 0
    %452 = vmatprep.subr.bf16.mxu0 0
    %453 = vmatpush1.bf16.xpose.msra.mxu0 0
    %454 = vmatprep.subr.bf16.mxu0 0
    %455 = vmatpush1.bf16.xpose.msra.mxu0 %v438
    %456 = vmatprep.subr.bf16.mxu0 0
    %457 = vmatpush2.bf16.xpose.msra.mxu0 0
    %458 = vmatprep.subr.bf16.mxu0 0
    %459 = vmatpush2.bf16.xpose.msra.mxu0 0
    %460 = vmatprep.subr.bf16.mxu0 0
    %461 = vmatpush2.bf16.xpose.msra.mxu0 0
    %462 = vmatprep.subr.bf16.mxu0 0
    %463 = vmatpush2.bf16.xpose.msra.mxu0 0
    %464 = vmatprep.subr.bf16.mxu0 0
    %465 = vmatpush2.bf16.xpose.msra.mxu0 0
    %466 = vmatprep.subr.bf16.mxu0 0
    %467 = vmatpush2.bf16.xpose.msra.mxu0 0
    %468 = vmatprep.subr.bf16.mxu0 0
    %469 = vmatpush2.bf16.xpose.msra.mxu0 0
    %470 = vmatprep.subr.bf16.mxu0 0
    %471 = vmatpush2.bf16.xpose.msra.mxu0 0
    %472 = vmatprep.mubr.bf16.mxu0 0
    %473 = vmatmul.mubr.bf16.gmra.mxu0 %v435
    %v474 = vpop.f32.mrf.mxu0
    %v475 = vadd.f32 0.0, %v474
    %v476 = vpop.f32.mrf.mxu0
    %v477 = vpop.f32.mrf.mxu0
    %v478 = vpop.f32.mrf.mxu0
    %479 = vdwg.mxu0
    %481 = vrot.lane.b32.xlu0 %v202, 120
    %v482 = vpop.permute.xlu0 %481
    %483 = vrot.lane.b32.xlu0 %v204, 88
    %v484 = vpop.permute.xlu0 %483
    %v486 = vsel %vm210, %v482, 0
    %v489 = vsel %vm210, %v484, 0
    %491 = vmatprep.subr.bf16.mxu0 0
    %492 = vmatpush1.bf16.xpose.msra.mxu0 0
    %493 = vmatprep.subr.bf16.mxu0 0
    %494 = vmatpush1.bf16.xpose.msra.mxu0 0
    %495 = vmatprep.subr.bf16.mxu0 0
    %496 = vmatpush1.bf16.xpose.msra.mxu0 0
    %497 = vmatprep.subr.bf16.mxu0 0
    %498 = vmatpush1.bf16.xpose.msra.mxu0 0
    %499 = vmatprep.subr.bf16.mxu0 0
    %500 = vmatpush1.bf16.xpose.msra.mxu0 0
    %501 = vmatprep.subr.bf16.mxu0 0
    %502 = vmatpush1.bf16.xpose.msra.mxu0 0
    %503 = vmatprep.subr.bf16.mxu0 0
    %504 = vmatpush1.bf16.xpose.msra.mxu0 0
    %505 = vmatprep.subr.bf16.mxu0 0
    %506 = vmatpush1.bf16.xpose.msra.mxu0 %v489
    %507 = vmatprep.subr.bf16.mxu0 0
    %508 = vmatpush2.bf16.xpose.msra.mxu0 0
    %509 = vmatprep.subr.bf16.mxu0 0
    %510 = vmatpush2.bf16.xpose.msra.mxu0 0
    %511 = vmatprep.subr.bf16.mxu0 0
    %512 = vmatpush2.bf16.xpose.msra.mxu0 0
    %513 = vmatprep.subr.bf16.mxu0 0
    %514 = vmatpush2.bf16.xpose.msra.mxu0 0
    %515 = vmatprep.subr.bf16.mxu0 0
    %516 = vmatpush2.bf16.xpose.msra.mxu0 0
    %517 = vmatprep.subr.bf16.mxu0 0
    %518 = vmatpush2.bf16.xpose.msra.mxu0 0
    %519 = vmatprep.subr.bf16.mxu0 0
    %520 = vmatpush2.bf16.xpose.msra.mxu0 0
    %521 = vmatprep.subr.bf16.mxu0 0
    %522 = vmatpush2.bf16.xpose.msra.mxu0 0
    %523 = vmatprep.mubr.bf16.mxu0 0
    %524 = vmatmul.mubr.bf16.gmra.mxu0 %v486
    %v525 = vpop.f32.mrf.mxu0
    %v526 = vadd.f32 0.0, %v525
    %v527 = vpop.f32.mrf.mxu0
    %v528 = vpop.f32.mrf.mxu0
    %v529 = vpop.f32.mrf.mxu0
    %530 = vdwg.mxu0
    %v531 = vsel %vm210, %v475, -inf
    %532 = vmax.xlane.f32.xlu0 %v531
    %v533 = vpop.xlane.xlu0 %532
    %v534 = vsel %vm210, %v526, -inf
    %535 = vmax.xlane.f32.xlu0 %v534
    %v536 = vpop.xlane.xlu0 %535
    %v537 = vsub.f32 %v475, %v533
    %v538 = vsub.f32 %v526, %v536
    %v539 = vmul.f32 %v537, 1.442695
    %v540 = vpow.pop %v539
    %v541 = vmul.f32 %v538, 1.442695
    %v542 = vpow.pop %v541
    %v543 = vsel %vm210, %v540, 0.0
    %544 = vadd.xlane.f32.xlu0 %v543
    %v545 = vpop.xlane.xlu0 %544
    %v546 = vsel %vm210, %v542, 0.0
    %547 = vadd.xlane.f32.xlu0 %v546
    %v548 = vpop.xlane.xlu0 %547
    %v549 = vrcp.pop %v545
    %v550 = vmul.f32 %v540, %v549
    %v551 = vrcp.pop %v548
    %v552 = vmul.f32 %v542, %v551
    %v553 = vpack.c.bf16 %v550, %v550
    %v554 = vpack.c.bf16 %v552, %v552
    %555 = vrot.lane.b32.xlu0 %v205, 56
    %v556 = vpop.permute.xlu0 %555
    %v558 = vsel %vm210, %v553, 0
    %v561 = vsel %vm336, %v556, 0
    %563 = vmatprep.subr.bf16.mxu0 0
    %564 = vmatpush1.bf16.msra.mxu0 0
    %565 = vmatprep.subr.bf16.mxu0 0
    %566 = vmatpush1.bf16.msra.mxu0 0
    %567 = vmatprep.subr.bf16.mxu0 0
    %568 = vmatpush1.bf16.msra.mxu0 0
    %569 = vmatprep.subr.bf16.mxu0 0
    %570 = vmatpush1.bf16.msra.mxu0 0
    %571 = vmatprep.subr.bf16.mxu0 0
    %572 = vmatpush1.bf16.msra.mxu0 0
    %573 = vmatprep.subr.bf16.mxu0 0
    %574 = vmatpush1.bf16.msra.mxu0 0
    %575 = vmatprep.subr.bf16.mxu0 0
    %576 = vmatpush1.bf16.msra.mxu0 0
    %577 = vmatprep.subr.bf16.mxu0 0
    %578 = vmatpush1.bf16.msra.mxu0 %v561
    %579 = vmatprep.subr.bf16.mxu0 0
    %580 = vmatpush2.bf16.msra.mxu0 0
    %581 = vmatprep.subr.bf16.mxu0 0
    %582 = vmatpush2.bf16.msra.mxu0 0
    %583 = vmatprep.subr.bf16.mxu0 0
    %584 = vmatpush2.bf16.msra.mxu0 0
    %585 = vmatprep.subr.bf16.mxu0 0
    %586 = vmatpush2.bf16.msra.mxu0 0
    %587 = vmatprep.subr.bf16.mxu0 0
    %588 = vmatpush2.bf16.msra.mxu0 0
    %589 = vmatprep.subr.bf16.mxu0 0
    %590 = vmatpush2.bf16.msra.mxu0 0
    %591 = vmatprep.subr.bf16.mxu0 0
    %592 = vmatpush2.bf16.msra.mxu0 0
    %593 = vmatprep.subr.bf16.mxu0 0
    %594 = vmatpush2.bf16.msra.mxu0 0
    %595 = vmatprep.mubr.bf16.mxu0 0
    %596 = vmatmul.mubr.bf16.gmra.mxu0 %v558
    %v597 = vpop.f32.mrf.mxu0
    %v598 = vadd.f32 0.0, %v597
    %v599 = vpop.f32.mrf.mxu0
    %v600 = vpop.f32.mrf.mxu0
    %v601 = vpop.f32.mrf.mxu0
    %602 = vdwg.mxu0
    %603 = vrot.lane.b32.xlu0 %v206, 56
    %v604 = vpop.permute.xlu0 %603
    %v606 = vsel %vm210, %v554, 0
    %v609 = vsel %vm336, %v604, 0
    %611 = vmatprep.subr.bf16.mxu0 0
    %612 = vmatpush1.bf16.msra.mxu0 0
    %613 = vmatprep.subr.bf16.mxu0 0
    %614 = vmatpush1.bf16.msra.mxu0 0
    %615 = vmatprep.subr.bf16.mxu0 0
    %616 = vmatpush1.bf16.msra.mxu0 0
    %617 = vmatprep.subr.bf16.mxu0 0
    %618 = vmatpush1.bf16.msra.mxu0 0
    %619 = vmatprep.subr.bf16.mxu0 0
    %620 = vmatpush1.bf16.msra.mxu0 0
    %621 = vmatprep.subr.bf16.mxu0 0
    %622 = vmatpush1.bf16.msra.mxu0 0
    %623 = vmatprep.subr.bf16.mxu0 0
    %624 = vmatpush1.bf16.msra.mxu0 0
    %625 = vmatprep.subr.bf16.mxu0 0
    %626 = vmatpush1.bf16.msra.mxu0 %v609
    %627 = vmatprep.subr.bf16.mxu0 0
    %628 = vmatpush2.bf16.msra.mxu0 0
    %629 = vmatprep.subr.bf16.mxu0 0
    %630 = vmatpush2.bf16.msra.mxu0 0
    %631 = vmatprep.subr.bf16.mxu0 0
    %632 = vmatpush2.bf16.msra.mxu0 0
    %633 = vmatprep.subr.bf16.mxu0 0
    %634 = vmatpush2.bf16.msra.mxu0 0
    %635 = vmatprep.subr.bf16.mxu0 0
    %636 = vmatpush2.bf16.msra.mxu0 0
    %637 = vmatprep.subr.bf16.mxu0 0
    %638 = vmatpush2.bf16.msra.mxu0 0
    %639 = vmatprep.subr.bf16.mxu0 0
    %640 = vmatpush2.bf16.msra.mxu0 0
    %641 = vmatprep.subr.bf16.mxu0 0
    %642 = vmatpush2.bf16.msra.mxu0 0
    %643 = vmatprep.mubr.bf16.mxu0 0
    %644 = vmatmul.mubr.bf16.gmra.mxu0 %v606
    %v645 = vpop.f32.mrf.mxu0
    %v646 = vadd.f32 0.0, %v645
    %v647 = vpop.f32.mrf.mxu0
    %v648 = vpop.f32.mrf.mxu0
    %v649 = vpop.f32.mrf.mxu0
    %650 = vdwg.mxu0
    %651 = vrot.lane.b32.xlu0 %v201, 112
    %v652 = vpop.permute.xlu0 %651
    %653 = vrot.lane.b32.xlu0 %v203, 80
    %v654 = vpop.permute.xlu0 %653
    %v656 = vsel %vm210, %v652, 0
    %v659 = vsel %vm210, %v654, 0
    %661 = vmatprep.subr.bf16.mxu0 0
    %662 = vmatpush1.bf16.xpose.msra.mxu0 0
    %663 = vmatprep.subr.bf16.mxu0 0
    %664 = vmatpush1.bf16.xpose.msra.mxu0 0
    %665 = vmatprep.subr.bf16.mxu0 0
    %666 = vmatpush1.bf16.xpose.msra.mxu0 0
    %667 = vmatprep.subr.bf16.mxu0 0
    %668 = vmatpush1.bf16.xpose.msra.mxu0 0
    %669 = vmatprep.subr.bf16.mxu0 0
    %670 = vmatpush1.bf16.xpose.msra.mxu0 0
    %671 = vmatprep.subr.bf16.mxu0 0
    %672 = vmatpush1.bf16.xpose.msra.mxu0 0
    %673 = vmatprep.subr.bf16.mxu0 0
    %674 = vmatpush1.bf16.xpose.msra.mxu0 0
    %675 = vmatprep.subr.bf16.mxu0 0
    %676 = vmatpush1.bf16.xpose.msra.mxu0 %v659
    %677 = vmatprep.subr.bf16.mxu0 0
    %678 = vmatpush2.bf16.xpose.msra.mxu0 0
    %679 = vmatprep.subr.bf16.mxu0 0
    %680 = vmatpush2.bf16.xpose.msra.mxu0 0
    %681 = vmatprep.subr.bf16.mxu0 0
    %682 = vmatpush2.bf16.xpose.msra.mxu0 0
    %683 = vmatprep.subr.bf16.mxu0 0
    %684 = vmatpush2.bf16.xpose.msra.mxu0 0
    %685 = vmatprep.subr.bf16.mxu0 0
    %686 = vmatpush2.bf16.xpose.msra.mxu0 0
    %687 = vmatprep.subr.bf16.mxu0 0
    %688 = vmatpush2.bf16.xpose.msra.mxu0 0
    %689 = vmatprep.subr.bf16.mxu0 0
    %690 = vmatpush2.bf16.xpose.msra.mxu0 0
    %691 = vmatprep.subr.bf16.mxu0 0
    %692 = vmatpush2.bf16.xpose.msra.mxu0 0
    %693 = vmatprep.mubr.bf16.mxu0 0
    %694 = vmatmul.mubr.bf16.gmra.mxu0 %v656
    %v695 = vpop.f32.mrf.mxu0
    %v696 = vadd.f32 0.0, %v695
    %v697 = vpop.f32.mrf.mxu0
    %v698 = vpop.f32.mrf.mxu0
    %v699 = vpop.f32.mrf.mxu0
    %700 = vdwg.mxu0
    %701 = vrot.lane.b32.xlu0 %v202, 112
    %v702 = vpop.permute.xlu0 %701
    %703 = vrot.lane.b32.xlu0 %v204, 80
    %v704 = vpop.permute.xlu0 %703
    %v706 = vsel %vm210, %v702, 0
    %v709 = vsel %vm210, %v704, 0
    %711 = vmatprep.subr.bf16.mxu0 0
    %712 = vmatpush1.bf16.xpose.msra.mxu0 0
    %713 = vmatprep.subr.bf16.mxu0 0
    %714 = vmatpush1.bf16.xpose.msra.mxu0 0
    %715 = vmatprep.subr.bf16.mxu0 0
    %716 = vmatpush1.bf16.xpose.msra.mxu0 0
    %717 = vmatprep.subr.bf16.mxu0 0
    %718 = vmatpush1.bf16.xpose.msra.mxu0 0
    %719 = vmatprep.subr.bf16.mxu0 0
    %720 = vmatpush1.bf16.xpose.msra.mxu0 0
    %721 = vmatprep.subr.bf16.mxu0 0
    %722 = vmatpush1.bf16.xpose.msra.mxu0 0
    %723 = vmatprep.subr.bf16.mxu0 0
    %724 = vmatpush1.bf16.xpose.msra.mxu0 0
    %725 = vmatprep.subr.bf16.mxu0 0
    %726 = vmatpush1.bf16.xpose.msra.mxu0 %v709
    %727 = vmatprep.subr.bf16.mxu0 0
    %728 = vmatpush2.bf16.xpose.msra.mxu0 0
    %729 = vmatprep.subr.bf16.mxu0 0
    %730 = vmatpush2.bf16.xpose.msra.mxu0 0
    %731 = vmatprep.subr.bf16.mxu0 0
    %732 = vmatpush2.bf16.xpose.msra.mxu0 0
    %733 = vmatprep.subr.bf16.mxu0 0
    %734 = vmatpush2.bf16.xpose.msra.mxu0 0
    %735 = vmatprep.subr.bf16.mxu0 0
    %736 = vmatpush2.bf16.xpose.msra.mxu0 0
    %737 = vmatprep.subr.bf16.mxu0 0
    %738 = vmatpush2.bf16.xpose.msra.mxu0 0
    %739 = vmatprep.subr.bf16.mxu0 0
    %740 = vmatpush2.bf16.xpose.msra.mxu0 0
    %741 = vmatprep.subr.bf16.mxu0 0
    %742 = vmatpush2.bf16.xpose.msra.mxu0 0
    %743 = vmatprep.mubr.bf16.mxu0 0
    %744 = vmatmul.mubr.bf16.gmra.mxu0 %v706
    %v745 = vpop.f32.mrf.mxu0
    %v746 = vadd.f32 0.0, %v745
    %v747 = vpop.f32.mrf.mxu0
    %v748 = vpop.f32.mrf.mxu0
    %v749 = vpop.f32.mrf.mxu0
    %750 = vdwg.mxu0
    %v751 = vsel %vm210, %v696, -inf
    %752 = vmax.xlane.f32.xlu0 %v751
    %v753 = vpop.xlane.xlu0 %752
    %v754 = vsel %vm210, %v746, -inf
    %755 = vmax.xlane.f32.xlu0 %v754
    %v756 = vpop.xlane.xlu0 %755
    %v757 = vsub.f32 %v696, %v753
    %v758 = vsub.f32 %v746, %v756
    %v759 = vmul.f32 %v757, 1.442695
    %v760 = vpow.pop %v759
    %v761 = vmul.f32 %v758, 1.442695
    %v762 = vpow.pop %v761
    %v763 = vsel %vm210, %v760, 0.0
    %764 = vadd.xlane.f32.xlu0 %v763
    %v765 = vpop.xlane.xlu0 %764
    %v766 = vsel %vm210, %v762, 0.0
    %767 = vadd.xlane.f32.xlu0 %v766
    %v768 = vpop.xlane.xlu0 %767
    %v769 = vrcp.pop %v765
    %v770 = vmul.f32 %v760, %v769
    %v771 = vrcp.pop %v768
    %v772 = vmul.f32 %v762, %v771
    %v773 = vpack.c.bf16 %v770, %v770
    %v774 = vpack.c.bf16 %v772, %v772
    %775 = vrot.lane.b32.xlu0 %v205, 48
    %v776 = vpop.permute.xlu0 %775
    %v778 = vsel %vm210, %v773, 0
    %v781 = vsel %vm336, %v776, 0
    %783 = vmatprep.subr.bf16.mxu0 0
    %784 = vmatpush1.bf16.msra.mxu0 0
    %785 = vmatprep.subr.bf16.mxu0 0
    %786 = vmatpush1.bf16.msra.mxu0 0
    %787 = vmatprep.subr.bf16.mxu0 0
    %788 = vmatpush1.bf16.msra.mxu0 0
    %789 = vmatprep.subr.bf16.mxu0 0
    %790 = vmatpush1.bf16.msra.mxu0 0
    %791 = vmatprep.subr.bf16.mxu0 0
    %792 = vmatpush1.bf16.msra.mxu0 0
    %793 = vmatprep.subr.bf16.mxu0 0
    %794 = vmatpush1.bf16.msra.mxu0 0
    %795 = vmatprep.subr.bf16.mxu0 0
    %796 = vmatpush1.bf16.msra.mxu0 0
    %797 = vmatprep.subr.bf16.mxu0 0
    %798 = vmatpush1.bf16.msra.mxu0 %v781
    %799 = vmatprep.subr.bf16.mxu0 0
    %800 = vmatpush2.bf16.msra.mxu0 0
    %801 = vmatprep.subr.bf16.mxu0 0
    %802 = vmatpush2.bf16.msra.mxu0 0
    %803 = vmatprep.subr.bf16.mxu0 0
    %804 = vmatpush2.bf16.msra.mxu0 0
    %805 = vmatprep.subr.bf16.mxu0 0
    %806 = vmatpush2.bf16.msra.mxu0 0
    %807 = vmatprep.subr.bf16.mxu0 0
    %808 = vmatpush2.bf16.msra.mxu0 0
    %809 = vmatprep.subr.bf16.mxu0 0
    %810 = vmatpush2.bf16.msra.mxu0 0
    %811 = vmatprep.subr.bf16.mxu0 0
    %812 = vmatpush2.bf16.msra.mxu0 0
    %813 = vmatprep.subr.bf16.mxu0 0
    %814 = vmatpush2.bf16.msra.mxu0 0
    %815 = vmatprep.mubr.bf16.mxu0 0
    %816 = vmatmul.mubr.bf16.gmra.mxu0 %v778
    %v817 = vpop.f32.mrf.mxu0
    %v818 = vadd.f32 0.0, %v817
    %v819 = vpop.f32.mrf.mxu0
    %v820 = vpop.f32.mrf.mxu0
    %v821 = vpop.f32.mrf.mxu0
    %822 = vdwg.mxu0
    %823 = vrot.lane.b32.xlu0 %v206, 48
    %v824 = vpop.permute.xlu0 %823
    %v826 = vsel %vm210, %v774, 0
    %v829 = vsel %vm336, %v824, 0
    %831 = vmatprep.subr.bf16.mxu0 0
    %832 = vmatpush1.bf16.msra.mxu0 0
    %833 = vmatprep.subr.bf16.mxu0 0
    %834 = vmatpush1.bf16.msra.mxu0 0
    %835 = vmatprep.subr.bf16.mxu0 0
    %836 = vmatpush1.bf16.msra.mxu0 0
    %837 = vmatprep.subr.bf16.mxu0 0
    %838 = vmatpush1.bf16.msra.mxu0 0
    %839 = vmatprep.subr.bf16.mxu0 0
    %840 = vmatpush1.bf16.msra.mxu0 0
    %841 = vmatprep.subr.bf16.mxu0 0
    %842 = vmatpush1.bf16.msra.mxu0 0
    %843 = vmatprep.subr.bf16.mxu0 0
    %844 = vmatpush1.bf16.msra.mxu0 0
    %845 = vmatprep.subr.bf16.mxu0 0
    %846 = vmatpush1.bf16.msra.mxu0 %v829
    %847 = vmatprep.subr.bf16.mxu0 0
    %848 = vmatpush2.bf16.msra.mxu0 0
    %849 = vmatprep.subr.bf16.mxu0 0
    %850 = vmatpush2.bf16.msra.mxu0 0
    %851 = vmatprep.subr.bf16.mxu0 0
    %852 = vmatpush2.bf16.msra.mxu0 0
    %853 = vmatprep.subr.bf16.mxu0 0
    %854 = vmatpush2.bf16.msra.mxu0 0
    %855 = vmatprep.subr.bf16.mxu0 0
    %856 = vmatpush2.bf16.msra.mxu0 0
    %857 = vmatprep.subr.bf16.mxu0 0
    %858 = vmatpush2.bf16.msra.mxu0 0
    %859 = vmatprep.subr.bf16.mxu0 0
    %860 = vmatpush2.bf16.msra.mxu0 0
    %861 = vmatprep.subr.bf16.mxu0 0
    %862 = vmatpush2.bf16.msra.mxu0 0
    %863 = vmatprep.mubr.bf16.mxu0 0
    %864 = vmatmul.mubr.bf16.gmra.mxu0 %v826
    %v865 = vpop.f32.mrf.mxu0
    %v866 = vadd.f32 0.0, %v865
    %v867 = vpop.f32.mrf.mxu0
    %v868 = vpop.f32.mrf.mxu0
    %v869 = vpop.f32.mrf.mxu0
    %870 = vdwg.mxu0
    %871 = vrot.lane.b32.xlu0 %v201, 104
    %v872 = vpop.permute.xlu0 %871
    %873 = vrot.lane.b32.xlu0 %v203, 72
    %v874 = vpop.permute.xlu0 %873
    %v876 = vsel %vm210, %v872, 0
    %v879 = vsel %vm210, %v874, 0
    %881 = vmatprep.subr.bf16.mxu0 0
    %882 = vmatpush1.bf16.xpose.msra.mxu0 0
    %883 = vmatprep.subr.bf16.mxu0 0
    %884 = vmatpush1.bf16.xpose.msra.mxu0 0
    %885 = vmatprep.subr.bf16.mxu0 0
    %886 = vmatpush1.bf16.xpose.msra.mxu0 0
    %887 = vmatprep.subr.bf16.mxu0 0
    %888 = vmatpush1.bf16.xpose.msra.mxu0 0
    %889 = vmatprep.subr.bf16.mxu0 0
    %890 = vmatpush1.bf16.xpose.msra.mxu0 0
    %891 = vmatprep.subr.bf16.mxu0 0
    %892 = vmatpush1.bf16.xpose.msra.mxu0 0
    %893 = vmatprep.subr.bf16.mxu0 0
    %894 = vmatpush1.bf16.xpose.msra.mxu0 0
    %895 = vmatprep.subr.bf16.mxu0 0
    %896 = vmatpush1.bf16.xpose.msra.mxu0 %v879
    %897 = vmatprep.subr.bf16.mxu0 0
    %898 = vmatpush2.bf16.xpose.msra.mxu0 0
    %899 = vmatprep.subr.bf16.mxu0 0
    %900 = vmatpush2.bf16.xpose.msra.mxu0 0
    %901 = vmatprep.subr.bf16.mxu0 0
    %902 = vmatpush2.bf16.xpose.msra.mxu0 0
    %903 = vmatprep.subr.bf16.mxu0 0
    %904 = vmatpush2.bf16.xpose.msra.mxu0 0
    %905 = vmatprep.subr.bf16.mxu0 0
    %906 = vmatpush2.bf16.xpose.msra.mxu0 0
    %907 = vmatprep.subr.bf16.mxu0 0
    %908 = vmatpush2.bf16.xpose.msra.mxu0 0
    %909 = vmatprep.subr.bf16.mxu0 0
    %910 = vmatpush2.bf16.xpose.msra.mxu0 0
    %911 = vmatprep.subr.bf16.mxu0 0
    %912 = vmatpush2.bf16.xpose.msra.mxu0 0
    %913 = vmatprep.mubr.bf16.mxu0 0
    %914 = vmatmul.mubr.bf16.gmra.mxu0 %v876
    %v915 = vpop.f32.mrf.mxu0
    %v916 = vadd.f32 0.0, %v915
    %v917 = vpop.f32.mrf.mxu0
    %v918 = vpop.f32.mrf.mxu0
    %v919 = vpop.f32.mrf.mxu0
    %920 = vdwg.mxu0
    %921 = vrot.lane.b32.xlu0 %v202, 104
    %v922 = vpop.permute.xlu0 %921
    %923 = vrot.lane.b32.xlu0 %v204, 72
    %v924 = vpop.permute.xlu0 %923
    %v926 = vsel %vm210, %v922, 0
    %v929 = vsel %vm210, %v924, 0
    %931 = vmatprep.subr.bf16.mxu0 0
    %932 = vmatpush1.bf16.xpose.msra.mxu0 0
    %933 = vmatprep.subr.bf16.mxu0 0
    %934 = vmatpush1.bf16.xpose.msra.mxu0 0
    %935 = vmatprep.subr.bf16.mxu0 0
    %936 = vmatpush1.bf16.xpose.msra.mxu0 0
    %937 = vmatprep.subr.bf16.mxu0 0
    %938 = vmatpush1.bf16.xpose.msra.mxu0 0
    %939 = vmatprep.subr.bf16.mxu0 0
    %940 = vmatpush1.bf16.xpose.msra.mxu0 0
    %941 = vmatprep.subr.bf16.mxu0 0
    %942 = vmatpush1.bf16.xpose.msra.mxu0 0
    %943 = vmatprep.subr.bf16.mxu0 0
    %944 = vmatpush1.bf16.xpose.msra.mxu0 0
    %945 = vmatprep.subr.bf16.mxu0 0
    %946 = vmatpush1.bf16.xpose.msra.mxu0 %v929
    %947 = vmatprep.subr.bf16.mxu0 0
    %948 = vmatpush2.bf16.xpose.msra.mxu0 0
    %949 = vmatprep.subr.bf16.mxu0 0
    %950 = vmatpush2.bf16.xpose.msra.mxu0 0
    %951 = vmatprep.subr.bf16.mxu0 0
    %952 = vmatpush2.bf16.xpose.msra.mxu0 0
    %953 = vmatprep.subr.bf16.mxu0 0
    %954 = vmatpush2.bf16.xpose.msra.mxu0 0
    %955 = vmatprep.subr.bf16.mxu0 0
    %956 = vmatpush2.bf16.xpose.msra.mxu0 0
    %957 = vmatprep.subr.bf16.mxu0 0
    %958 = vmatpush2.bf16.xpose.msra.mxu0 0
    %959 = vmatprep.subr.bf16.mxu0 0
    %960 = vmatpush2.bf16.xpose.msra.mxu0 0
    %961 = vmatprep.subr.bf16.mxu0 0
    %962 = vmatpush2.bf16.xpose.msra.mxu0 0
    %963 = vmatprep.mubr.bf16.mxu0 0
    %964 = vmatmul.mubr.bf16.gmra.mxu0 %v926
    %v965 = vpop.f32.mrf.mxu0
    %v966 = vadd.f32 0.0, %v965
    %v967 = vpop.f32.mrf.mxu0
    %v968 = vpop.f32.mrf.mxu0
    %v969 = vpop.f32.mrf.mxu0
    %970 = vdwg.mxu0
    %v971 = vsel %vm210, %v916, -inf
    %972 = vmax.xlane.f32.xlu0 %v971
    %v973 = vpop.xlane.xlu0 %972
    %v974 = vsel %vm210, %v966, -inf
    %975 = vmax.xlane.f32.xlu0 %v974
    %v976 = vpop.xlane.xlu0 %975
    %v977 = vsub.f32 %v916, %v973
    %v978 = vsub.f32 %v966, %v976
    %v979 = vmul.f32 %v977, 1.442695
    %v980 = vpow.pop %v979
    %v981 = vmul.f32 %v978, 1.442695
    %v982 = vpow.pop %v981
    %v983 = vsel %vm210, %v980, 0.0
    %984 = vadd.xlane.f32.xlu0 %v983
    %v985 = vpop.xlane.xlu0 %984
    %v986 = vsel %vm210, %v982, 0.0
    %987 = vadd.xlane.f32.xlu0 %v986
    %v988 = vpop.xlane.xlu0 %987
    %v989 = vrcp.pop %v985
    %v990 = vmul.f32 %v980, %v989
    %v991 = vrcp.pop %v988
    %v992 = vmul.f32 %v982, %v991
    %v993 = vpack.c.bf16 %v990, %v990
    %v994 = vpack.c.bf16 %v992, %v992
    %995 = vrot.lane.b32.xlu0 %v205, 40
    %v996 = vpop.permute.xlu0 %995
    %v998 = vsel %vm210, %v993, 0
    %v1001 = vsel %vm336, %v996, 0
    %1003 = vmatprep.subr.bf16.mxu0 0
    %1004 = vmatpush1.bf16.msra.mxu0 0
    %1005 = vmatprep.subr.bf16.mxu0 0
    %1006 = vmatpush1.bf16.msra.mxu0 0
    %1007 = vmatprep.subr.bf16.mxu0 0
    %1008 = vmatpush1.bf16.msra.mxu0 0
    %1009 = vmatprep.subr.bf16.mxu0 0
    %1010 = vmatpush1.bf16.msra.mxu0 0
    %1011 = vmatprep.subr.bf16.mxu0 0
    %1012 = vmatpush1.bf16.msra.mxu0 0
    %1013 = vmatprep.subr.bf16.mxu0 0
    %1014 = vmatpush1.bf16.msra.mxu0 0
    %1015 = vmatprep.subr.bf16.mxu0 0
    %1016 = vmatpush1.bf16.msra.mxu0 0
    %1017 = vmatprep.subr.bf16.mxu0 0
    %1018 = vmatpush1.bf16.msra.mxu0 %v1001
    %1019 = vmatprep.subr.bf16.mxu0 0
    %1020 = vmatpush2.bf16.msra.mxu0 0
    %1021 = vmatprep.subr.bf16.mxu0 0
    %1022 = vmatpush2.bf16.msra.mxu0 0
    %1023 = vmatprep.subr.bf16.mxu0 0
    %1024 = vmatpush2.bf16.msra.mxu0 0
    %1025 = vmatprep.subr.bf16.mxu0 0
    %1026 = vmatpush2.bf16.msra.mxu0 0
    %1027 = vmatprep.subr.bf16.mxu0 0
    %1028 = vmatpush2.bf16.msra.mxu0 0
    %1029 = vmatprep.subr.bf16.mxu0 0
    %1030 = vmatpush2.bf16.msra.mxu0 0
    %1031 = vmatprep.subr.bf16.mxu0 0
    %1032 = vmatpush2.bf16.msra.mxu0 0
    %1033 = vmatprep.subr.bf16.mxu0 0
    %1034 = vmatpush2.bf16.msra.mxu0 0
    %1035 = vmatprep.mubr.bf16.mxu0 0
    %1036 = vmatmul.mubr.bf16.gmra.mxu0 %v998
    %v1037 = vpop.f32.mrf.mxu0
    %v1038 = vadd.f32 0.0, %v1037
    %v1039 = vpop.f32.mrf.mxu0
    %v1040 = vpop.f32.mrf.mxu0
    %v1041 = vpop.f32.mrf.mxu0
    %1042 = vdwg.mxu0
    %1043 = vrot.lane.b32.xlu0 %v206, 40
    %v1044 = vpop.permute.xlu0 %1043
    %v1046 = vsel %vm210, %v994, 0
    %v1049 = vsel %vm336, %v1044, 0
    %1051 = vmatprep.subr.bf16.mxu0 0
    %1052 = vmatpush1.bf16.msra.mxu0 0
    %1053 = vmatprep.subr.bf16.mxu0 0
    %1054 = vmatpush1.bf16.msra.mxu0 0
    %1055 = vmatprep.subr.bf16.mxu0 0
    %1056 = vmatpush1.bf16.msra.mxu0 0
    %1057 = vmatprep.subr.bf16.mxu0 0
    %1058 = vmatpush1.bf16.msra.mxu0 0
    %1059 = vmatprep.subr.bf16.mxu0 0
    %1060 = vmatpush1.bf16.msra.mxu0 0
    %1061 = vmatprep.subr.bf16.mxu0 0
    %1062 = vmatpush1.bf16.msra.mxu0 0
    %1063 = vmatprep.subr.bf16.mxu0 0
    %1064 = vmatpush1.bf16.msra.mxu0 0
    %1065 = vmatprep.subr.bf16.mxu0 0
    %1066 = vmatpush1.bf16.msra.mxu0 %v1049
    %1067 = vmatprep.subr.bf16.mxu0 0
    %1068 = vmatpush2.bf16.msra.mxu0 0
    %1069 = vmatprep.subr.bf16.mxu0 0
    %1070 = vmatpush2.bf16.msra.mxu0 0
    %1071 = vmatprep.subr.bf16.mxu0 0
    %1072 = vmatpush2.bf16.msra.mxu0 0
    %1073 = vmatprep.subr.bf16.mxu0 0
    %1074 = vmatpush2.bf16.msra.mxu0 0
    %1075 = vmatprep.subr.bf16.mxu0 0
    %1076 = vmatpush2.bf16.msra.mxu0 0
    %1077 = vmatprep.subr.bf16.mxu0 0
    %1078 = vmatpush2.bf16.msra.mxu0 0
    %1079 = vmatprep.subr.bf16.mxu0 0
    %1080 = vmatpush2.bf16.msra.mxu0 0
    %1081 = vmatprep.subr.bf16.mxu0 0
    %1082 = vmatpush2.bf16.msra.mxu0 0
    %1083 = vmatprep.mubr.bf16.mxu0 0
    %1084 = vmatmul.mubr.bf16.gmra.mxu0 %v1046
    %v1085 = vpop.f32.mrf.mxu0
    %v1086 = vadd.f32 0.0, %v1085
    %v1087 = vpop.f32.mrf.mxu0
    %v1088 = vpop.f32.mrf.mxu0
    %v1089 = vpop.f32.mrf.mxu0
    %1090 = vdwg.mxu0
    %1093 = vrot.lane.b32.xlu0 %v598, 8
    %v1094 = vpop.permute.xlu0 %1093
    %1095 = vrot.lane.b32.xlu0 %v646, 8
    %v1096 = vpop.permute.xlu0 %1095
    %1101 = vrot.lane.b32.xlu0 %v818, 16
    %v1102 = vpop.permute.xlu0 %1101
    %1103 = vrot.lane.b32.xlu0 %v866, 16
    %v1104 = vpop.permute.xlu0 %1103
    %1109 = vrot.lane.b32.xlu0 %v1038, 24
    %v1110 = vpop.permute.xlu0 %1109
    %1111 = vrot.lane.b32.xlu0 %v1086, 24
    %v1112 = vpop.permute.xlu0 %1111
    %v1115 = vsel %vm210, %v375, %v1094
    %v1116 = vsel %vm210, %v424, %v1096
    %vm1117 = vcmask 130048
    %v1118 = vsel %vm1117, %v1115, %v1102
    %v1119 = vsel %vm1117, %v1116, %v1104
    %vm1120 = vcmask 195584
    %v1121 = vsel %vm1120, %v1118, %v1110
    %v1122 = vsel %vm1120, %v1119, %v1112
    %v1123 = vpack.c.bf16 %v1122, %v1121
    %v1124 = vld [vmem:[%s2] sm:$0xf]
    %v1125 = vld [vmem:[%s2 + $0xc] sm:$0xf]
    %v1126 = vld [vmem:[%s2 + $0x18] sm:$0xf]
    %v1127 = vld [vmem:[%s2 + $0x24] sm:$0xf]
    %v1128 = vld [vmem:[#allocation7 + $0xb] sm:$0x1]
    %v1129 = vlaneseq
    %v1130 = vshrl.u32 %v1129, 7
    %v1131 = vsub.s32 0, %v1130
    %v1132 = vrot.slane %v1128, %v1131
    %v1137 = vunpack.c.l.b16 %v1124
    %v1138 = vunpack.c.l.b16 %v1125
    %v1139 = vunpack.c.l.b16 %v1126
    %v1140 = vunpack.c.l.b16 %v1127
    %v1141 = vpack.c.b16 %v1138, %v1137
    %v1142 = vpack.c.b16 %v1140, %v1139
    %1143 = vrot.lane.b32.xlu0 %v1141, 32
    %v1144 = vpop.permute.xlu0 %1143
    %1145 = vrot.lane.b32.xlu0 %v1142, 32
    %v1146 = vpop.permute.xlu0 %1145
    %v1150 = vsel %vm69, %v1123, 0
    %1152 = vmatprep.subr.bf16.mxu0 0
    %1153 = vmatpush1.bf16.msra.mxu0 0
    %1154 = vmatprep.subr.bf16.mxu0 0
    %1155 = vmatpush1.bf16.msra.mxu0 0
    %1156 = vmatprep.subr.bf16.mxu0 0
    %1157 = vmatpush1.bf16.msra.mxu0 0
    %1158 = vmatprep.subr.bf16.mxu0 0
    %1159 = vmatpush1.bf16.msra.mxu0 0
    %1160 = vmatprep.subr.bf16.mxu0 0
    %1161 = vmatpush1.bf16.msra.mxu0 0
    %1162 = vmatprep.subr.bf16.mxu0 0
    %1163 = vmatpush1.bf16.msra.mxu0 0
    %1164 = vmatprep.subr.bf16.mxu0 0
    %1165 = vmatpush1.bf16.msra.mxu0 %v1146
    %1166 = vmatprep.subr.bf16.mxu0 0
    %1167 = vmatpush1.bf16.msra.mxu0 %v1144
    %1168 = vmatprep.subr.bf16.mxu0 0
    %1169 = vmatpush2.bf16.msra.mxu0 0
    %1170 = vmatprep.subr.bf16.mxu0 0
    %1171 = vmatpush2.bf16.msra.mxu0 0
    %1172 = vmatprep.subr.bf16.mxu0 0
    %1173 = vmatpush2.bf16.msra.mxu0 0
    %1174 = vmatprep.subr.bf16.mxu0 0
    %1175 = vmatpush2.bf16.msra.mxu0 0
    %1176 = vmatprep.subr.bf16.mxu0 0
    %1177 = vmatpush2.bf16.msra.mxu0 0
    %1178 = vmatprep.subr.bf16.mxu0 0
    %1179 = vmatpush2.bf16.msra.mxu0 0
    %1180 = vmatprep.subr.bf16.mxu0 0
    %1181 = vmatpush2.bf16.msra.mxu0 0
    %1182 = vmatprep.subr.bf16.mxu0 0
    %1183 = vmatpush2.bf16.msra.mxu0 0
    %1184 = vmatprep.mubr.bf16.mxu0 0
    %1185 = vmatmul.mubr.bf16.gmra.mxu0 %v1150
    %v1186 = vpop.f32.mrf.mxu0
    %v1187 = vadd.f32 %v1132, %v1186
    %v1188 = vpop.f32.mrf.mxu0
    %v1189 = vpop.f32.mrf.mxu0
    %v1190 = vadd.f32 %v1132, %v1189
    %v1191 = vpop.f32.mrf.mxu0
    %1192 = vdwg.mxu0
    %v1193 = vadd.f32 %v63, %v1187
    %v1194 = vadd.f32 %v64, %v1190
    %v1195 = vsel %vm69, %v1193, 0.0
    %1196 = vadd.xlane.f32.xlu0 %v1195
    %v1197 = vpop.xlane.xlu0 %1196
    %v1198 = vsel %vm69, %v1194, 0.0
    %1199 = vadd.xlane.f32.xlu0 %v1198
    %v1200 = vpop.xlane.xlu0 %1199
    %v1201 = vmul.f32 %v1197, %v76
    %v1202 = vmul.f32 %v1200, %v76
    %v1203 = vsub.f32 %v1193, %v1201
    %v1204 = vsub.f32 %v1194, %v1202
    %v1205 = vmul.f32 %v1203, %v1203
    %v1206 = vmul.f32 %v1204, %v1204
    %v1207 = vsel %vm69, %v1205, 0.0
    %1208 = vadd.xlane.f32.xlu0 %v1207
    %v1209 = vpop.xlane.xlu0 %1208
    %v1210 = vsel %vm69, %v1206, 0.0
    %1211 = vadd.xlane.f32.xlu0 %v1210
    %v1212 = vpop.xlane.xlu0 %1211
    %v1213 = vmul.f32 %v1209, %v76
    %v1214 = vmul.f32 %v1212, %v76
    %v1215 = vadd.f32 %v1213, 1e-05
    %v1216 = vadd.f32 %v1214, 1e-05
    %v1217 = vrsqrt.pop %v1215
    %v1218 = vrsqrt.pop %v1216
    %v1219 = vmul.f32 %v1203, %v1217
    %v1220 = vmul.f32 %v1204, %v1218
    %v1221 = vld [vmem:[#allocation7 + $0x2] sm:$0x1]
    %v1222 = vlaneseq
    %v1223 = vshrl.u32 %v1222, 7
    %v1224 = vsub.s32 0, %v1223
    %v1225 = vrot.slane %v1221, %v1224
    %v1226 = vmul.f32 %v1219, %v1225
    %v1227 = vmul.f32 %v1220, %v1225
    %v1228 = vld [vmem:[#allocation7 + $0x3] sm:$0x1]
    %v1229 = vlaneseq
    %v1230 = vshrl.u32 %v1229, 7
    %v1231 = vsub.s32 0, %v1230
    %v1232 = vrot.slane %v1228, %v1231
    %v1233 = vadd.f32 %v1226, %v1232
    %v1234 = vadd.f32 %v1227, %v1232
    %v1235 = vpack.c.bf16 %v1234, %v1233
    %v1236 = vld [vmem:[%s2 + $0x4] sm:$0xf]
    %v1237 = vld [vmem:[%s2 + $0x10] sm:$0xf]
    %v1238 = vld [vmem:[%s2 + $0x1c] sm:$0xf]
    %v1239 = vld [vmem:[%s2 + $0x28] sm:$0xf]
    %v1240 = vld [vmem:[#allocation7 + $0xc] sm:$0x1]
    %v1241 = vlaneseq
    %v1242 = vshrl.u32 %v1241, 7
    %v1243 = vsub.s32 0, %v1242
    %v1244 = vrot.slane %v1240, %v1243
    %v1249 = vunpack.c.l.b16 %v1236
    %v1250 = vunpack.c.l.b16 %v1237
    %v1251 = vunpack.c.l.b16 %v1238
    %v1252 = vunpack.c.l.b16 %v1239
    %v1253 = vpack.c.b16 %v1250, %v1249
    %v1254 = vpack.c.b16 %v1252, %v1251
    %v1258 = vsel %vm69, %v1235, 0
    %1260 = vmatprep.subr.bf16.mxu0 0
    %1261 = vmatpush1.bf16.msra.mxu0 0
    %1262 = vmatprep.subr.bf16.mxu0 0
    %1263 = vmatpush1.bf16.msra.mxu0 0
    %1264 = vmatprep.subr.bf16.mxu0 0
    %1265 = vmatpush1.bf16.msra.mxu0 0
    %1266 = vmatprep.subr.bf16.mxu0 0
    %1267 = vmatpush1.bf16.msra.mxu0 0
    %1268 = vmatprep.subr.bf16.mxu0 0
    %1269 = vmatpush1.bf16.msra.mxu0 0
    %1270 = vmatprep.subr.bf16.mxu0 0
    %1271 = vmatpush1.bf16.msra.mxu0 0
    %1272 = vmatprep.subr.bf16.mxu0 0
    %1273 = vmatpush1.bf16.msra.mxu0 %v1254
    %1274 = vmatprep.subr.bf16.mxu0 0
    %1275 = vmatpush1.bf16.msra.mxu0 %v1253
    %1276 = vmatprep.subr.bf16.mxu0 0
    %1277 = vmatpush2.bf16.msra.mxu0 0
    %1278 = vmatprep.subr.bf16.mxu0 0
    %1279 = vmatpush2.bf16.msra.mxu0 0
    %1280 = vmatprep.subr.bf16.mxu0 0
    %1281 = vmatpush2.bf16.msra.mxu0 0
    %1282 = vmatprep.subr.bf16.mxu0 0
    %1283 = vmatpush2.bf16.msra.mxu0 0
    %1284 = vmatprep.subr.bf16.mxu0 0
    %1285 = vmatpush2.bf16.msra.mxu0 0
    %1286 = vmatprep.subr.bf16.mxu0 0
    %1287 = vmatpush2.bf16.msra.mxu0 0
    %1288 = vmatprep.subr.bf16.mxu0 0
    %1289 = vmatpush2.bf16.msra.mxu0 0
    %1290 = vmatprep.subr.bf16.mxu0 0
    %1291 = vmatpush2.bf16.msra.mxu0 0
    %1292 = vmatprep.mubr.bf16.mxu0 0
    %1293 = vmatmul.mubr.bf16.gmra.mxu0 %v1258
    %v1294 = vpop.f32.mrf.mxu0
    %v1295 = vadd.f32 %v1244, %v1294
    %v1296 = vpop.f32.mrf.mxu0
    %v1297 = vpop.f32.mrf.mxu0
    %v1298 = vadd.f32 %v1244, %v1297
    %v1299 = vpop.f32.mrf.mxu0
    %1300 = vdwg.mxu0
    %v1301 = vpack.c.bf16 %v66, %v65
    %v1302 = vpack.c.bf16 %v68, %v67
    %1303 = vrot.lane.b32.xlu0 %v1253, 96
    %v1304 = vpop.permute.xlu0 %1303
    %1305 = vrot.lane.b32.xlu0 %v1254, 96
    %v1306 = vpop.permute.xlu0 %1305
    %v1310 = vsel %vm69, %v1301, 0
    %v1313 = vsel %vm69, %v1302, 0
    %1315 = vmatprep.subr.bf16.mxu0 0
    %1316 = vmatpush1.bf16.msra.mxu0 0
    %1317 = vmatprep.subr.bf16.mxu0 0
    %1318 = vmatpush1.bf16.msra.mxu0 0
    %1319 = vmatprep.subr.bf16.mxu0 0
    %1320 = vmatpush1.bf16.msra.mxu0 0
    %1321 = vmatprep.subr.bf16.mxu0 0
    %1322 = vmatpush1.bf16.msra.mxu0 0
    %1323 = vmatprep.subr.bf16.mxu0 0
    %1324 = vmatpush1.bf16.msra.mxu0 0
    %1325 = vmatprep.subr.bf16.mxu0 0
    %1326 = vmatpush1.bf16.msra.mxu0 0
    %1327 = vmatprep.subr.bf16.mxu0 0
    %1328 = vmatpush1.bf16.msra.mxu0 %v1306
    %1329 = vmatprep.subr.bf16.mxu0 0
    %1330 = vmatpush1.bf16.msra.mxu0 %v1304
    %1331 = vmatprep.subr.bf16.mxu0 0
    %1332 = vmatpush2.bf16.msra.mxu0 0
    %1333 = vmatprep.subr.bf16.mxu0 0
    %1334 = vmatpush2.bf16.msra.mxu0 0
    %1335 = vmatprep.subr.bf16.mxu0 0
    %1336 = vmatpush2.bf16.msra.mxu0 0
    %1337 = vmatprep.subr.bf16.mxu0 0
    %1338 = vmatpush2.bf16.msra.mxu0 0
    %1339 = vmatprep.subr.bf16.mxu0 0
    %1340 = vmatpush2.bf16.msra.mxu0 0
    %1341 = vmatprep.subr.bf16.mxu0 0
    %1342 = vmatpush2.bf16.msra.mxu0 0
    %1343 = vmatprep.subr.bf16.mxu0 0
    %1344 = vmatpush2.bf16.msra.mxu0 0
    %1345 = vmatprep.subr.bf16.mxu0 0
    %1346 = vmatpush2.bf16.msra.mxu0 0
    %1347 = vmatprep.mubr.bf16.mxu0 0
    %1348 = vmatmul.mubr.bf16.gmra.mxu0 %v1310
    %v1349 = vpop.f32.mrf.mxu0
    %v1350 = vadd.f32 0.0, %v1349
    %v1351 = vpop.f32.mrf.mxu0
    %v1352 = vpop.f32.mrf.mxu0
    %v1353 = vadd.f32 0.0, %v1352
    %v1354 = vpop.f32.mrf.mxu0
    %1355 = vmatprep.mubr.bf16.mxu0 0
    %1356 = vmatmul.mubr.bf16.gmra.mxu0 %v1313
    %v1357 = vpop.f32.mrf.mxu0
    %v1358 = vadd.f32 0.0, %v1357
    %v1359 = vpop.f32.mrf.mxu0
    %v1360 = vpop.f32.mrf.mxu0
    %v1361 = vadd.f32 0.0, %v1360
    %v1362 = vpop.f32.mrf.mxu0
    %1363 = vdwg.mxu0
    %v1364 = vld [vmem:[#allocation7 + $0xd] sm:$0x1]
    %v1365 = vlaneseq
    %v1366 = vshrl.u32 %v1365, 7
    %v1367 = vsub.s32 0, %v1366
    %v1368 = vrot.slane %v1364, %v1367
    %v1369 = vadd.f32 %v1350, %v1368
    %v1370 = vadd.f32 %v1353, %v1368
    %v1371 = vadd.f32 %v1358, %v1368
    %v1372 = vadd.f32 %v1361, %v1368
    %v1373 = vld [vmem:[#allocation7 + $0xe] sm:$0x1]
    %v1374 = vlaneseq
    %v1375 = vshrl.u32 %v1374, 7
    %v1376 = vsub.s32 0, %v1375
    %v1377 = vrot.slane %v1373, %v1376
    %1379 = vrot.lane.b32.xlu0 %v1377, 32
    %v1380 = vpop.permute.xlu0 %1379
    %v1382 = vadd.f32 %v1350, %v1380
    %v1383 = vadd.f32 %v1353, %v1380
    %v1384 = vadd.f32 %v1358, %v1380
    %v1385 = vadd.f32 %v1361, %v1380
    %v1386 = vpack.c.bf16 %v1295, %v1295
    %v1387 = vpack.c.bf16 %v1298, %v1298
    %v1388 = vpack.c.bf16 %v1370, %v1369
    %v1389 = vpack.c.bf16 %v1372, %v1371
    %v1390 = vpack.c.bf16 %v1383, %v1382
    %v1391 = vpack.c.bf16 %v1385, %v1384
    %v1393 = vsel %vm210, %v1386, 0
    %v1396 = vsel %vm210, %v1388, 0
    %1398 = vmatprep.subr.bf16.mxu0 0
    %1399 = vmatpush1.bf16.xpose.msra.mxu0 0
    %1400 = vmatprep.subr.bf16.mxu0 0
    %1401 = vmatpush1.bf16.xpose.msra.mxu0 0
    %1402 = vmatprep.subr.bf16.mxu0 0
    %1403 = vmatpush1.bf16.xpose.msra.mxu0 0
    %1404 = vmatprep.subr.bf16.mxu0 0
    %1405 = vmatpush1.bf16.xpose.msra.mxu0 0
    %1406 = vmatprep.subr.bf16.mxu0 0
    %1407 = vmatpush1.bf16.xpose.msra.mxu0 0
    %1408 = vmatprep.subr.bf16.mxu0 0
    %1409 = vmatpush1.bf16.xpose.msra.mxu0 0
    %1410 = vmatprep.subr.bf16.mxu0 0
    %1411 = vmatpush1.bf16.xpose.msra.mxu0 0
    %1412 = vmatprep.subr.bf16.mxu0 0
    %1413 = vmatpush1.bf16.xpose.msra.mxu0 %v1396
    %1414 = vmatprep.subr.bf16.mxu0 0
    %1415 = vmatpush2.bf16.xpose.msra.mxu0 0
    %1416 = vmatprep.subr.bf16.mxu0 0
    %1417 = vmatpush2.bf16.xpose.msra.mxu0 0
    %1418 = vmatprep.subr.bf16.mxu0 0
    %1419 = vmatpush2.bf16.xpose.msra.mxu0 0
    %1420 = vmatprep.subr.bf16.mxu0 0
    %1421 = vmatpush2.bf16.xpose.msra.mxu0 0
    %1422 = vmatprep.subr.bf16.mxu0 0
    %1423 = vmatpush2.bf16.xpose.msra.mxu0 0
    %1424 = vmatprep.subr.bf16.mxu0 0
    %1425 = vmatpush2.bf16.xpose.msra.mxu0 0
    %1426 = vmatprep.subr.bf16.mxu0 0
    %1427 = vmatpush2.bf16.xpose.msra.mxu0 0
    %1428 = vmatprep.subr.bf16.mxu0 0
    %1429 = vmatpush2.bf16.xpose.msra.mxu0 0
    %1430 = vmatprep.mubr.bf16.mxu0 0
    %1431 = vmatmul.mubr.bf16.gmra.mxu0 %v1393
    %v1432 = vpop.f32.mrf.mxu0
    %v1433 = vadd.f32 0.0, %v1432
    %v1434 = vpop.f32.mrf.mxu0
    %v1435 = vpop.f32.mrf.mxu0
    %v1436 = vpop.f32.mrf.mxu0
    %1437 = vdwg.mxu0
    %v1439 = vsel %vm210, %v1387, 0
    %v1442 = vsel %vm210, %v1389, 0
    %1444 = vmatprep.subr.bf16.mxu0 0
    %1445 = vmatpush1.bf16.xpose.msra.mxu0 0
    %1446 = vmatprep.subr.bf16.mxu0 0
    %1447 = vmatpush1.bf16.xpose.msra.mxu0 0
    %1448 = vmatprep.subr.bf16.mxu0 0
    %1449 = vmatpush1.bf16.xpose.msra.mxu0 0
    %1450 = vmatprep.subr.bf16.mxu0 0
    %1451 = vmatpush1.bf16.xpose.msra.mxu0 0
    %1452 = vmatprep.subr.bf16.mxu0 0
    %1453 = vmatpush1.bf16.xpose.msra.mxu0 0
    %1454 = vmatprep.subr.bf16.mxu0 0
    %1455 = vmatpush1.bf16.xpose.msra.mxu0 0
    %1456 = vmatprep.subr.bf16.mxu0 0
    %1457 = vmatpush1.bf16.xpose.msra.mxu0 0
    %1458 = vmatprep.subr.bf16.mxu0 0
    %1459 = vmatpush1.bf16.xpose.msra.mxu0 %v1442
    %1460 = vmatprep.subr.bf16.mxu0 0
    %1461 = vmatpush2.bf16.xpose.msra.mxu0 0
    %1462 = vmatprep.subr.bf16.mxu0 0
    %1463 = vmatpush2.bf16.xpose.msra.mxu0 0
    %1464 = vmatprep.subr.bf16.mxu0 0
    %1465 = vmatpush2.bf16.xpose.msra.mxu0 0
    %1466 = vmatprep.subr.bf16.mxu0 0
    %1467 = vmatpush2.bf16.xpose.msra.mxu0 0
    %1468 = vmatprep.subr.bf16.mxu0 0
    %1469 = vmatpush2.bf16.xpose.msra.mxu0 0
    %1470 = vmatprep.subr.bf16.mxu0 0
    %1471 = vmatpush2.bf16.xpose.msra.mxu0 0
    %1472 = vmatprep.subr.bf16.mxu0 0
    %1473 = vmatpush2.bf16.xpose.msra.mxu0 0
    %1474 = vmatprep.subr.bf16.mxu0 0
    %1475 = vmatpush2.bf16.xpose.msra.mxu0 0
    %1476 = vmatprep.mubr.bf16.mxu0 0
    %1477 = vmatmul.mubr.bf16.gmra.mxu0 %v1439
    %v1478 = vpop.f32.mrf.mxu0
    %v1479 = vadd.f32 0.0, %v1478
    %v1480 = vpop.f32.mrf.mxu0
    %v1481 = vpop.f32.mrf.mxu0
    %v1482 = vpop.f32.mrf.mxu0
    %1483 = vdwg.mxu0
    %v1484 = vsel %vm1117, %v1433, -inf
    %1485 = vmax.xlane.f32.xlu0 %v1484
    %v1486 = vpop.xlane.xlu0 %1485
    %v1487 = vsel %vm1117, %v1479, -inf
    %1488 = vmax.xlane.f32.xlu0 %v1487
    %v1489 = vpop.xlane.xlu0 %1488
    %v1490 = vsub.f32 %v1433, %v1486
    %v1491 = vsub.f32 %v1479, %v1489
    %v1492 = vmul.f32 %v1490, 1.442695
    %v1493 = vpow.pop %v1492
    %v1494 = vmul.f32 %v1491, 1.442695
    %v1495 = vpow.pop %v1494
    %v1496 = vsel %vm1117, %v1493, 0.0
    %1497 = vadd.xlane.f32.xlu0 %v1496
    %v1498 = vpop.xlane.xlu0 %1497
    %v1499 = vsel %vm1117, %v1495, 0.0
    %1500 = vadd.xlane.f32.xlu0 %v1499
    %v1501 = vpop.xlane.xlu0 %1500
    %v1502 = vrcp.pop %v1498
    %v1503 = vmul.f32 %v1493, %v1502
    %v1504 = vrcp.pop %v1501
    %v1505 = vmul.f32 %v1495, %v1504
    %v1506 = vpack.c.bf16 %v1503, %v1503
    %v1507 = vpack.c.bf16 %v1505, %v1505
    %1509 = vrot.lane.b32.xlu0 %v1390, 96
    %v1510 = vpop.permute.xlu0 %1509
    %v1513 = vsel %vm1117, %v1506, 0
    %1515 = vmatprep.subr.bf16.mxu0 0
    %1516 = vmatpush1.bf16.msra.mxu0 0
    %1517 = vmatprep.subr.bf16.mxu0 0
    %1518 = vmatpush1.bf16.msra.mxu0 0
    %1519 = vmatprep.subr.bf16.mxu0 0
    %1520 = vmatpush1.bf16.msra.mxu0 0
    %1521 = vmatprep.subr.bf16.mxu0 0
    %1522 = vmatpush1.bf16.msra.mxu0 0
    %1523 = vmatprep.subr.bf16.mxu0 0
    %1524 = vmatpush1.bf16.msra.mxu0 0
    %1525 = vmatprep.subr.bf16.mxu0 0
    %1526 = vmatpush1.bf16.msra.mxu0 0
    %1527 = vmatprep.subr.bf16.mxu0 0
    %1528 = vmatpush1.bf16.msra.mxu0 0
    %1529 = vmatprep.subr.bf16.mxu0 0
    %1530 = vmatpush1.bf16.msra.mxu0 %v1510
    %1531 = vmatprep.subr.bf16.mxu0 0
    %1532 = vmatpush2.bf16.msra.mxu0 0
    %1533 = vmatprep.subr.bf16.mxu0 0
    %1534 = vmatpush2.bf16.msra.mxu0 0
    %1535 = vmatprep.subr.bf16.mxu0 0
    %1536 = vmatpush2.bf16.msra.mxu0 0
    %1537 = vmatprep.subr.bf16.mxu0 0
    %1538 = vmatpush2.bf16.msra.mxu0 0
    %1539 = vmatprep.subr.bf16.mxu0 0
    %1540 = vmatpush2.bf16.msra.mxu0 0
    %1541 = vmatprep.subr.bf16.mxu0 0
    %1542 = vmatpush2.bf16.msra.mxu0 0
    %1543 = vmatprep.subr.bf16.mxu0 0
    %1544 = vmatpush2.bf16.msra.mxu0 0
    %1545 = vmatprep.subr.bf16.mxu0 0
    %1546 = vmatpush2.bf16.msra.mxu0 0
    %1547 = vmatprep.mubr.bf16.mxu0 0
    %1548 = vmatmul.mubr.bf16.gmra.mxu0 %v1513
    %v1549 = vpop.f32.mrf.mxu0
    %v1550 = vadd.f32 0.0, %v1549
    %v1551 = vpop.f32.mrf.mxu0
    %v1552 = vpop.f32.mrf.mxu0
    %v1553 = vpop.f32.mrf.mxu0
    %1554 = vdwg.mxu0
    %1556 = vrot.lane.b32.xlu0 %v1391, 96
    %v1557 = vpop.permute.xlu0 %1556
    %v1560 = vsel %vm1117, %v1507, 0
    %1562 = vmatprep.subr.bf16.mxu0 0
    %1563 = vmatpush1.bf16.msra.mxu0 0
    %1564 = vmatprep.subr.bf16.mxu0 0
    %1565 = vmatpush1.bf16.msra.mxu0 0
    %1566 = vmatprep.subr.bf16.mxu0 0
    %1567 = vmatpush1.bf16.msra.mxu0 0
    %1568 = vmatprep.subr.bf16.mxu0 0
    %1569 = vmatpush1.bf16.msra.mxu0 0
    %1570 = vmatprep.subr.bf16.mxu0 0
    %1571 = vmatpush1.bf16.msra.mxu0 0
    %1572 = vmatprep.subr.bf16.mxu0 0
    %1573 = vmatpush1.bf16.msra.mxu0 0
    %1574 = vmatprep.subr.bf16.mxu0 0
    %1575 = vmatpush1.bf16.msra.mxu0 0
    %1576 = vmatprep.subr.bf16.mxu0 0
    %1577 = vmatpush1.bf16.msra.mxu0 %v1557
    %1578 = vmatprep.subr.bf16.mxu0 0
    %1579 = vmatpush2.bf16.msra.mxu0 0
    %1580 = vmatprep.subr.bf16.mxu0 0
    %1581 = vmatpush2.bf16.msra.mxu0 0
    %1582 = vmatprep.subr.bf16.mxu0 0
    %1583 = vmatpush2.bf16.msra.mxu0 0
    %1584 = vmatprep.subr.bf16.mxu0 0
    %1585 = vmatpush2.bf16.msra.mxu0 0
    %1586 = vmatprep.subr.bf16.mxu0 0
    %1587 = vmatpush2.bf16.msra.mxu0 0
    %1588 = vmatprep.subr.bf16.mxu0 0
    %1589 = vmatpush2.bf16.msra.mxu0 0
    %1590 = vmatprep.subr.bf16.mxu0 0
    %1591 = vmatpush2.bf16.msra.mxu0 0
    %1592 = vmatprep.subr.bf16.mxu0 0
    %1593 = vmatpush2.bf16.msra.mxu0 0
    %1594 = vmatprep.mubr.bf16.mxu0 0
    %1595 = vmatmul.mubr.bf16.gmra.mxu0 %v1560
    %v1596 = vpop.f32.mrf.mxu0
    %v1597 = vadd.f32 0.0, %v1596
    %v1598 = vpop.f32.mrf.mxu0
    %v1599 = vpop.f32.mrf.mxu0
    %v1600 = vpop.f32.mrf.mxu0
    %1601 = vdwg.mxu0
    %1603 = vrot.lane.b32.xlu0 %v1386, 120
    %v1604 = vpop.permute.xlu0 %1603
    %1606 = vrot.lane.b32.xlu0 %v1388, 120
    %v1607 = vpop.permute.xlu0 %1606
    %v1609 = vsel %vm210, %v1604, 0
    %v1612 = vsel %vm210, %v1607, 0
    %1614 = vmatprep.subr.bf16.mxu0 0
    %1615 = vmatpush1.bf16.xpose.msra.mxu0 0
    %1616 = vmatprep.subr.bf16.mxu0 0
    %1617 = vmatpush1.bf16.xpose.msra.mxu0 0
    %1618 = vmatprep.subr.bf16.mxu0 0
    %1619 = vmatpush1.bf16.xpose.msra.mxu0 0
    %1620 = vmatprep.subr.bf16.mxu0 0
    %1621 = vmatpush1.bf16.xpose.msra.mxu0 0
    %1622 = vmatprep.subr.bf16.mxu0 0
    %1623 = vmatpush1.bf16.xpose.msra.mxu0 0
    %1624 = vmatprep.subr.bf16.mxu0 0
    %1625 = vmatpush1.bf16.xpose.msra.mxu0 0
    %1626 = vmatprep.subr.bf16.mxu0 0
    %1627 = vmatpush1.bf16.xpose.msra.mxu0 0
    %1628 = vmatprep.subr.bf16.mxu0 0
    %1629 = vmatpush1.bf16.xpose.msra.mxu0 %v1612
    %1630 = vmatprep.subr.bf16.mxu0 0
    %1631 = vmatpush2.bf16.xpose.msra.mxu0 0
    %1632 = vmatprep.subr.bf16.mxu0 0
    %1633 = vmatpush2.bf16.xpose.msra.mxu0 0
    %1634 = vmatprep.subr.bf16.mxu0 0
    %1635 = vmatpush2.bf16.xpose.msra.mxu0 0
    %1636 = vmatprep.subr.bf16.mxu0 0
    %1637 = vmatpush2.bf16.xpose.msra.mxu0 0
    %1638 = vmatprep.subr.bf16.mxu0 0
    %1639 = vmatpush2.bf16.xpose.msra.mxu0 0
    %1640 = vmatprep.subr.bf16.mxu0 0
    %1641 = vmatpush2.bf16.xpose.msra.mxu0 0
    %1642 = vmatprep.subr.bf16.mxu0 0
    %1643 = vmatpush2.bf16.xpose.msra.mxu0 0
    %1644 = vmatprep.subr.bf16.mxu0 0
    %1645 = vmatpush2.bf16.xpose.msra.mxu0 0
    %1646 = vmatprep.mubr.bf16.mxu0 0
    %1647 = vmatmul.mubr.bf16.gmra.mxu0 %v1609
    %v1648 = vpop.f32.mrf.mxu0
    %v1649 = vadd.f32 0.0, %v1648
    %v1650 = vpop.f32.mrf.mxu0
    %v1651 = vpop.f32.mrf.mxu0
    %v1652 = vpop.f32.mrf.mxu0
    %1653 = vdwg.mxu0
    %1655 = vrot.lane.b32.xlu0 %v1387, 120
    %v1656 = vpop.permute.xlu0 %1655
    %1658 = vrot.lane.b32.xlu0 %v1389, 120
    %v1659 = vpop.permute.xlu0 %1658
    %v1661 = vsel %vm210, %v1656, 0
    %v1664 = vsel %vm210, %v1659, 0
    %1666 = vmatprep.subr.bf16.mxu0 0
    %1667 = vmatpush1.bf16.xpose.msra.mxu0 0
    %1668 = vmatprep.subr.bf16.mxu0 0
    %1669 = vmatpush1.bf16.xpose.msra.mxu0 0
    %1670 = vmatprep.subr.bf16.mxu0 0
    %1671 = vmatpush1.bf16.xpose.msra.mxu0 0
    %1672 = vmatprep.subr.bf16.mxu0 0
    %1673 = vmatpush1.bf16.xpose.msra.mxu0 0
    %1674 = vmatprep.subr.bf16.mxu0 0
    %1675 = vmatpush1.bf16.xpose.msra.mxu0 0
    %1676 = vmatprep.subr.bf16.mxu0 0
    %1677 = vmatpush1.bf16.xpose.msra.mxu0 0
    %1678 = vmatprep.subr.bf16.mxu0 0
    %1679 = vmatpush1.bf16.xpose.msra.mxu0 0
    %1680 = vmatprep.subr.bf16.mxu0 0
    %1681 = vmatpush1.bf16.xpose.msra.mxu0 %v1664
    %1682 = vmatprep.subr.bf16.mxu0 0
    %1683 = vmatpush2.bf16.xpose.msra.mxu0 0
    %1684 = vmatprep.subr.bf16.mxu0 0
    %1685 = vmatpush2.bf16.xpose.msra.mxu0 0
    %1686 = vmatprep.subr.bf16.mxu0 0
    %1687 = vmatpush2.bf16.xpose.msra.mxu0 0
    %1688 = vmatprep.subr.bf16.mxu0 0
    %1689 = vmatpush2.bf16.xpose.msra.mxu0 0
    %1690 = vmatprep.subr.bf16.mxu0 0
    %1691 = vmatpush2.bf16.xpose.msra.mxu0 0
    %1692 = vmatprep.subr.bf16.mxu0 0
    %1693 = vmatpush2.bf16.xpose.msra.mxu0 0
    %1694 = vmatprep.subr.bf16.mxu0 0
    %1695 = vmatpush2.bf16.xpose.msra.mxu0 0
    %1696 = vmatprep.subr.bf16.mxu0 0
    %1697 = vmatpush2.bf16.xpose.msra.mxu0 0
    %1698 = vmatprep.mubr.bf16.mxu0 0
    %1699 = vmatmul.mubr.bf16.gmra.mxu0 %v1661
    %v1700 = vpop.f32.mrf.mxu0
    %v1701 = vadd.f32 0.0, %v1700
    %v1702 = vpop.f32.mrf.mxu0
    %v1703 = vpop.f32.mrf.mxu0
    %v1704 = vpop.f32.mrf.mxu0
    %1705 = vdwg.mxu0
    %v1706 = vsel %vm1117, %v1649, -inf
    %1707 = vmax.xlane.f32.xlu0 %v1706
    %v1708 = vpop.xlane.xlu0 %1707
    %v1709 = vsel %vm1117, %v1701, -inf
    %1710 = vmax.xlane.f32.xlu0 %v1709
    %v1711 = vpop.xlane.xlu0 %1710
    %v1712 = vsub.f32 %v1649, %v1708
    %v1713 = vsub.f32 %v1701, %v1711
    %v1714 = vmul.f32 %v1712, 1.442695
    %v1715 = vpow.pop %v1714
    %v1716 = vmul.f32 %v1713, 1.442695
    %v1717 = vpow.pop %v1716
    %v1718 = vsel %vm1117, %v1715, 0.0
    %1719 = vadd.xlane.f32.xlu0 %v1718
    %v1720 = vpop.xlane.xlu0 %1719
    %v1721 = vsel %vm1117, %v1717, 0.0
    %1722 = vadd.xlane.f32.xlu0 %v1721
    %v1723 = vpop.xlane.xlu0 %1722
    %v1724 = vrcp.pop %v1720
    %v1725 = vmul.f32 %v1715, %v1724
    %v1726 = vrcp.pop %v1723
    %v1727 = vmul.f32 %v1717, %v1726
    %v1728 = vpack.c.bf16 %v1725, %v1725
    %v1729 = vpack.c.bf16 %v1727, %v1727
    %1730 = vrot.lane.b32.xlu0 %v1390, 88
    %v1731 = vpop.permute.xlu0 %1730
    %v1734 = vsel %vm1117, %v1728, 0
    %1736 = vmatprep.subr.bf16.mxu0 0
    %1737 = vmatpush1.bf16.msra.mxu0 0
    %1738 = vmatprep.subr.bf16.mxu0 0
    %1739 = vmatpush1.bf16.msra.mxu0 0
    %1740 = vmatprep.subr.bf16.mxu0 0
    %1741 = vmatpush1.bf16.msra.mxu0 0
    %1742 = vmatprep.subr.bf16.mxu0 0
    %1743 = vmatpush1.bf16.msra.mxu0 0
    %1744 = vmatprep.subr.bf16.mxu0 0
    %1745 = vmatpush1.bf16.msra.mxu0 0
    %1746 = vmatprep.subr.bf16.mxu0 0
    %1747 = vmatpush1.bf16.msra.mxu0 0
    %1748 = vmatprep.subr.bf16.mxu0 0
    %1749 = vmatpush1.bf16.msra.mxu0 0
    %1750 = vmatprep.subr.bf16.mxu0 0
    %1751 = vmatpush1.bf16.msra.mxu0 %v1731
    %1752 = vmatprep.subr.bf16.mxu0 0
    %1753 = vmatpush2.bf16.msra.mxu0 0
    %1754 = vmatprep.subr.bf16.mxu0 0
    %1755 = vmatpush2.bf16.msra.mxu0 0
    %1756 = vmatprep.subr.bf16.mxu0 0
    %1757 = vmatpush2.bf16.msra.mxu0 0
    %1758 = vmatprep.subr.bf16.mxu0 0
    %1759 = vmatpush2.bf16.msra.mxu0 0
    %1760 = vmatprep.subr.bf16.mxu0 0
    %1761 = vmatpush2.bf16.msra.mxu0 0
    %1762 = vmatprep.subr.bf16.mxu0 0
    %1763 = vmatpush2.bf16.msra.mxu0 0
    %1764 = vmatprep.subr.bf16.mxu0 0
    %1765 = vmatpush2.bf16.msra.mxu0 0
    %1766 = vmatprep.subr.bf16.mxu0 0
    %1767 = vmatpush2.bf16.msra.mxu0 0
    %1768 = vmatprep.mubr.bf16.mxu0 0
    %1769 = vmatmul.mubr.bf16.gmra.mxu0 %v1734
    %v1770 = vpop.f32.mrf.mxu0
    %v1771 = vadd.f32 0.0, %v1770
    %v1772 = vpop.f32.mrf.mxu0
    %v1773 = vpop.f32.mrf.mxu0
    %v1774 = vpop.f32.mrf.mxu0
    %1775 = vdwg.mxu0
    %1776 = vrot.lane.b32.xlu0 %v1391, 88
    %v1777 = vpop.permute.xlu0 %1776
    %v1780 = vsel %vm1117, %v1729, 0
    %1782 = vmatprep.subr.bf16.mxu0 0
    %1783 = vmatpush1.bf16.msra.mxu0 0
    %1784 = vmatprep.subr.bf16.mxu0 0
    %1785 = vmatpush1.bf16.msra.mxu0 0
    %1786 = vmatprep.subr.bf16.mxu0 0
    %1787 = vmatpush1.bf16.msra.mxu0 0
    %1788 = vmatprep.subr.bf16.mxu0 0
    %1789 = vmatpush1.bf16.msra.mxu0 0
    %1790 = vmatprep.subr.bf16.mxu0 0
    %1791 = vmatpush1.bf16.msra.mxu0 0
    %1792 = vmatprep.subr.bf16.mxu0 0
    %1793 = vmatpush1.bf16.msra.mxu0 0
    %1794 = vmatprep.subr.bf16.mxu0 0
    %1795 = vmatpush1.bf16.msra.mxu0 0
    %1796 = vmatprep.subr.bf16.mxu0 0
    %1797 = vmatpush1.bf16.msra.mxu0 %v1777
    %1798 = vmatprep.subr.bf16.mxu0 0
    %1799 = vmatpush2.bf16.msra.mxu0 0
    %1800 = vmatprep.subr.bf16.mxu0 0
    %1801 = vmatpush2.bf16.msra.mxu0 0
    %1802 = vmatprep.subr.bf16.mxu0 0
    %1803 = vmatpush2.bf16.msra.mxu0 0
    %1804 = vmatprep.subr.bf16.mxu0 0
    %1805 = vmatpush2.bf16.msra.mxu0 0
    %1806 = vmatprep.subr.bf16.mxu0 0
    %1807 = vmatpush2.bf16.msra.mxu0 0
    %1808 = vmatprep.subr.bf16.mxu0 0
    %1809 = vmatpush2.bf16.msra.mxu0 0
    %1810 = vmatprep.subr.bf16.mxu0 0
    %1811 = vmatpush2.bf16.msra.mxu0 0
    %1812 = vmatprep.subr.bf16.mxu0 0
    %1813 = vmatpush2.bf16.msra.mxu0 0
    %1814 = vmatprep.mubr.bf16.mxu0 0
    %1815 = vmatmul.mubr.bf16.gmra.mxu0 %v1780
    %v1816 = vpop.f32.mrf.mxu0
    %v1817 = vadd.f32 0.0, %v1816
    %v1818 = vpop.f32.mrf.mxu0
    %v1819 = vpop.f32.mrf.mxu0
    %v1820 = vpop.f32.mrf.mxu0
    %1821 = vdwg.mxu0
    %1822 = vrot.lane.b32.xlu0 %v1386, 112
    %v1823 = vpop.permute.xlu0 %1822
    %1824 = vrot.lane.b32.xlu0 %v1388, 112
    %v1825 = vpop.permute.xlu0 %1824
    %v1827 = vsel %vm210, %v1823, 0
    %v1830 = vsel %vm210, %v1825, 0
    %1832 = vmatprep.subr.bf16.mxu0 0
    %1833 = vmatpush1.bf16.xpose.msra.mxu0 0
    %1834 = vmatprep.subr.bf16.mxu0 0
    %1835 = vmatpush1.bf16.xpose.msra.mxu0 0
    %1836 = vmatprep.subr.bf16.mxu0 0
    %1837 = vmatpush1.bf16.xpose.msra.mxu0 0
    %1838 = vmatprep.subr.bf16.mxu0 0
    %1839 = vmatpush1.bf16.xpose.msra.mxu0 0
    %1840 = vmatprep.subr.bf16.mxu0 0
    %1841 = vmatpush1.bf16.xpose.msra.mxu0 0
    %1842 = vmatprep.subr.bf16.mxu0 0
    %1843 = vmatpush1.bf16.xpose.msra.mxu0 0
    %1844 = vmatprep.subr.bf16.mxu0 0
    %1845 = vmatpush1.bf16.xpose.msra.mxu0 0
    %1846 = vmatprep.subr.bf16.mxu0 0
    %1847 = vmatpush1.bf16.xpose.msra.mxu0 %v1830
    %1848 = vmatprep.subr.bf16.mxu0 0
    %1849 = vmatpush2.bf16.xpose.msra.mxu0 0
    %1850 = vmatprep.subr.bf16.mxu0 0
    %1851 = vmatpush2.bf16.xpose.msra.mxu0 0
    %1852 = vmatprep.subr.bf16.mxu0 0
    %1853 = vmatpush2.bf16.xpose.msra.mxu0 0
    %1854 = vmatprep.subr.bf16.mxu0 0
    %1855 = vmatpush2.bf16.xpose.msra.mxu0 0
    %1856 = vmatprep.subr.bf16.mxu0 0
    %1857 = vmatpush2.bf16.xpose.msra.mxu0 0
    %1858 = vmatprep.subr.bf16.mxu0 0
    %1859 = vmatpush2.bf16.xpose.msra.mxu0 0
    %1860 = vmatprep.subr.bf16.mxu0 0
    %1861 = vmatpush2.bf16.xpose.msra.mxu0 0
    %1862 = vmatprep.subr.bf16.mxu0 0
    %1863 = vmatpush2.bf16.xpose.msra.mxu0 0
    %1864 = vmatprep.mubr.bf16.mxu0 0
    %1865 = vmatmul.mubr.bf16.gmra.mxu0 %v1827
    %v1866 = vpop.f32.mrf.mxu0
    %v1867 = vadd.f32 0.0, %v1866
    %v1868 = vpop.f32.mrf.mxu0
    %v1869 = vpop.f32.mrf.mxu0
    %v1870 = vpop.f32.mrf.mxu0
    %1871 = vdwg.mxu0
    %1872 = vrot.lane.b32.xlu0 %v1387, 112
    %v1873 = vpop.permute.xlu0 %1872
    %1874 = vrot.lane.b32.xlu0 %v1389, 112
    %v1875 = vpop.permute.xlu0 %1874
    %v1877 = vsel %vm210, %v1873, 0
    %v1880 = vsel %vm210, %v1875, 0
    %1882 = vmatprep.subr.bf16.mxu0 0
    %1883 = vmatpush1.bf16.xpose.msra.mxu0 0
    %1884 = vmatprep.subr.bf16.mxu0 0
    %1885 = vmatpush1.bf16.xpose.msra.mxu0 0
    %1886 = vmatprep.subr.bf16.mxu0 0
    %1887 = vmatpush1.bf16.xpose.msra.mxu0 0
    %1888 = vmatprep.subr.bf16.mxu0 0
    %1889 = vmatpush1.bf16.xpose.msra.mxu0 0
    %1890 = vmatprep.subr.bf16.mxu0 0
    %1891 = vmatpush1.bf16.xpose.msra.mxu0 0
    %1892 = vmatprep.subr.bf16.mxu0 0
    %1893 = vmatpush1.bf16.xpose.msra.mxu0 0
    %1894 = vmatprep.subr.bf16.mxu0 0
    %1895 = vmatpush1.bf16.xpose.msra.mxu0 0
    %1896 = vmatprep.subr.bf16.mxu0 0
    %1897 = vmatpush1.bf16.xpose.msra.mxu0 %v1880
    %1898 = vmatprep.subr.bf16.mxu0 0
    %1899 = vmatpush2.bf16.xpose.msra.mxu0 0
    %1900 = vmatprep.subr.bf16.mxu0 0
    %1901 = vmatpush2.bf16.xpose.msra.mxu0 0
    %1902 = vmatprep.subr.bf16.mxu0 0
    %1903 = vmatpush2.bf16.xpose.msra.mxu0 0
    %1904 = vmatprep.subr.bf16.mxu0 0
    %1905 = vmatpush2.bf16.xpose.msra.mxu0 0
    %1906 = vmatprep.subr.bf16.mxu0 0
    %1907 = vmatpush2.bf16.xpose.msra.mxu0 0
    %1908 = vmatprep.subr.bf16.mxu0 0
    %1909 = vmatpush2.bf16.xpose.msra.mxu0 0
    %1910 = vmatprep.subr.bf16.mxu0 0
    %1911 = vmatpush2.bf16.xpose.msra.mxu0 0
    %1912 = vmatprep.subr.bf16.mxu0 0
    %1913 = vmatpush2.bf16.xpose.msra.mxu0 0
    %1914 = vmatprep.mubr.bf16.mxu0 0
    %1915 = vmatmul.mubr.bf16.gmra.mxu0 %v1877
    %v1916 = vpop.f32.mrf.mxu0
    %v1917 = vadd.f32 0.0, %v1916
    %v1918 = vpop.f32.mrf.mxu0
    %v1919 = vpop.f32.mrf.mxu0
    %v1920 = vpop.f32.mrf.mxu0
    %1921 = vdwg.mxu0
    %v1922 = vsel %vm1117, %v1867, -inf
    %1923 = vmax.xlane.f32.xlu0 %v1922
    %v1924 = vpop.xlane.xlu0 %1923
    %v1925 = vsel %vm1117, %v1917, -inf
    %1926 = vmax.xlane.f32.xlu0 %v1925
    %v1927 = vpop.xlane.xlu0 %1926
    %v1928 = vsub.f32 %v1867, %v1924
    %v1929 = vsub.f32 %v1917, %v1927
    %v1930 = vmul.f32 %v1928, 1.442695
    %v1931 = vpow.pop %v1930
    %v1932 = vmul.f32 %v1929, 1.442695
    %v1933 = vpow.pop %v1932
    %v1934 = vsel %vm1117, %v1931, 0.0
    %1935 = vadd.xlane.f32.xlu0 %v1934
    %v1936 = vpop.xlane.xlu0 %1935
    %v1937 = vsel %vm1117, %v1933, 0.0
    %1938 = vadd.xlane.f32.xlu0 %v1937
    %v1939 = vpop.xlane.xlu0 %1938
    %v1940 = vrcp.pop %v1936
    %v1941 = vmul.f32 %v1931, %v1940
    %v1942 = vrcp.pop %v1939
    %v1943 = vmul.f32 %v1933, %v1942
    %v1944 = vpack.c.bf16 %v1941, %v1941
    %v1945 = vpack.c.bf16 %v1943, %v1943
    %1946 = vrot.lane.b32.xlu0 %v1390, 80
    %v1947 = vpop.permute.xlu0 %1946
    %v1950 = vsel %vm1117, %v1944, 0
    %1952 = vmatprep.subr.bf16.mxu0 0
    %1953 = vmatpush1.bf16.msra.mxu0 0
    %1954 = vmatprep.subr.bf16.mxu0 0
    %1955 = vmatpush1.bf16.msra.mxu0 0
    %1956 = vmatprep.subr.bf16.mxu0 0
    %1957 = vmatpush1.bf16.msra.mxu0 0
    %1958 = vmatprep.subr.bf16.mxu0 0
    %1959 = vmatpush1.bf16.msra.mxu0 0
    %1960 = vmatprep.subr.bf16.mxu0 0
    %1961 = vmatpush1.bf16.msra.mxu0 0
    %1962 = vmatprep.subr.bf16.mxu0 0
    %1963 = vmatpush1.bf16.msra.mxu0 0
    %1964 = vmatprep.subr.bf16.mxu0 0
    %1965 = vmatpush1.bf16.msra.mxu0 0
    %1966 = vmatprep.subr.bf16.mxu0 0
    %1967 = vmatpush1.bf16.msra.mxu0 %v1947
    %1968 = vmatprep.subr.bf16.mxu0 0
    %1969 = vmatpush2.bf16.msra.mxu0 0
    %1970 = vmatprep.subr.bf16.mxu0 0
    %1971 = vmatpush2.bf16.msra.mxu0 0
    %1972 = vmatprep.subr.bf16.mxu0 0
    %1973 = vmatpush2.bf16.msra.mxu0 0
    %1974 = vmatprep.subr.bf16.mxu0 0
    %1975 = vmatpush2.bf16.msra.mxu0 0
    %1976 = vmatprep.subr.bf16.mxu0 0
    %1977 = vmatpush2.bf16.msra.mxu0 0
    %1978 = vmatprep.subr.bf16.mxu0 0
    %1979 = vmatpush2.bf16.msra.mxu0 0
    %1980 = vmatprep.subr.bf16.mxu0 0
    %1981 = vmatpush2.bf16.msra.mxu0 0
    %1982 = vmatprep.subr.bf16.mxu0 0
    %1983 = vmatpush2.bf16.msra.mxu0 0
    %1984 = vmatprep.mubr.bf16.mxu0 0
    %1985 = vmatmul.mubr.bf16.gmra.mxu0 %v1950
    %v1986 = vpop.f32.mrf.mxu0
    %v1987 = vadd.f32 0.0, %v1986
    %v1988 = vpop.f32.mrf.mxu0
    %v1989 = vpop.f32.mrf.mxu0
    %v1990 = vpop.f32.mrf.mxu0
    %1991 = vdwg.mxu0
    %1992 = vrot.lane.b32.xlu0 %v1391, 80
    %v1993 = vpop.permute.xlu0 %1992
    %v1996 = vsel %vm1117, %v1945, 0
    %1998 = vmatprep.subr.bf16.mxu0 0
    %1999 = vmatpush1.bf16.msra.mxu0 0
    %2000 = vmatprep.subr.bf16.mxu0 0
    %2001 = vmatpush1.bf16.msra.mxu0 0
    %2002 = vmatprep.subr.bf16.mxu0 0
    %2003 = vmatpush1.bf16.msra.mxu0 0
    %2004 = vmatprep.subr.bf16.mxu0 0
    %2005 = vmatpush1.bf16.msra.mxu0 0
    %2006 = vmatprep.subr.bf16.mxu0 0
    %2007 = vmatpush1.bf16.msra.mxu0 0
    %2008 = vmatprep.subr.bf16.mxu0 0
    %2009 = vmatpush1.bf16.msra.mxu0 0
    %2010 = vmatprep.subr.bf16.mxu0 0
    %2011 = vmatpush1.bf16.msra.mxu0 0
    %2012 = vmatprep.subr.bf16.mxu0 0
    %2013 = vmatpush1.bf16.msra.mxu0 %v1993
    %2014 = vmatprep.subr.bf16.mxu0 0
    %2015 = vmatpush2.bf16.msra.mxu0 0
    %2016 = vmatprep.subr.bf16.mxu0 0
    %2017 = vmatpush2.bf16.msra.mxu0 0
    %2018 = vmatprep.subr.bf16.mxu0 0
    %2019 = vmatpush2.bf16.msra.mxu0 0
    %2020 = vmatprep.subr.bf16.mxu0 0
    %2021 = vmatpush2.bf16.msra.mxu0 0
    %2022 = vmatprep.subr.bf16.mxu0 0
    %2023 = vmatpush2.bf16.msra.mxu0 0
    %2024 = vmatprep.subr.bf16.mxu0 0
    %2025 = vmatpush2.bf16.msra.mxu0 0
    %2026 = vmatprep.subr.bf16.mxu0 0
    %2027 = vmatpush2.bf16.msra.mxu0 0
    %2028 = vmatprep.subr.bf16.mxu0 0
    %2029 = vmatpush2.bf16.msra.mxu0 0
    %2030 = vmatprep.mubr.bf16.mxu0 0
    %2031 = vmatmul.mubr.bf16.gmra.mxu0 %v1996
    %v2032 = vpop.f32.mrf.mxu0
    %v2033 = vadd.f32 0.0, %v2032
    %v2034 = vpop.f32.mrf.mxu0
    %v2035 = vpop.f32.mrf.mxu0
    %v2036 = vpop.f32.mrf.mxu0
    %2037 = vdwg.mxu0
    %2038 = vrot.lane.b32.xlu0 %v1386, 104
    %v2039 = vpop.permute.xlu0 %2038
    %2040 = vrot.lane.b32.xlu0 %v1388, 104
    %v2041 = vpop.permute.xlu0 %2040
    %v2043 = vsel %vm210, %v2039, 0
    %v2046 = vsel %vm210, %v2041, 0
    %2048 = vmatprep.subr.bf16.mxu0 0
    %2049 = vmatpush1.bf16.xpose.msra.mxu0 0
    %2050 = vmatprep.subr.bf16.mxu0 0
    %2051 = vmatpush1.bf16.xpose.msra.mxu0 0
    %2052 = vmatprep.subr.bf16.mxu0 0
    %2053 = vmatpush1.bf16.xpose.msra.mxu0 0
    %2054 = vmatprep.subr.bf16.mxu0 0
    %2055 = vmatpush1.bf16.xpose.msra.mxu0 0
    %2056 = vmatprep.subr.bf16.mxu0 0
    %2057 = vmatpush1.bf16.xpose.msra.mxu0 0
    %2058 = vmatprep.subr.bf16.mxu0 0
    %2059 = vmatpush1.bf16.xpose.msra.mxu0 0
    %2060 = vmatprep.subr.bf16.mxu0 0
    %2061 = vmatpush1.bf16.xpose.msra.mxu0 0
    %2062 = vmatprep.subr.bf16.mxu0 0
    %2063 = vmatpush1.bf16.xpose.msra.mxu0 %v2046
    %2064 = vmatprep.subr.bf16.mxu0 0
    %2065 = vmatpush2.bf16.xpose.msra.mxu0 0
    %2066 = vmatprep.subr.bf16.mxu0 0
    %2067 = vmatpush2.bf16.xpose.msra.mxu0 0
    %2068 = vmatprep.subr.bf16.mxu0 0
    %2069 = vmatpush2.bf16.xpose.msra.mxu0 0
    %2070 = vmatprep.subr.bf16.mxu0 0
    %2071 = vmatpush2.bf16.xpose.msra.mxu0 0
    %2072 = vmatprep.subr.bf16.mxu0 0
    %2073 = vmatpush2.bf16.xpose.msra.mxu0 0
    %2074 = vmatprep.subr.bf16.mxu0 0
    %2075 = vmatpush2.bf16.xpose.msra.mxu0 0
    %2076 = vmatprep.subr.bf16.mxu0 0
    %2077 = vmatpush2.bf16.xpose.msra.mxu0 0
    %2078 = vmatprep.subr.bf16.mxu0 0
    %2079 = vmatpush2.bf16.xpose.msra.mxu0 0
    %2080 = vmatprep.mubr.bf16.mxu0 0
    %2081 = vmatmul.mubr.bf16.gmra.mxu0 %v2043
    %v2082 = vpop.f32.mrf.mxu0
    %v2083 = vadd.f32 0.0, %v2082
    %v2084 = vpop.f32.mrf.mxu0
    %v2085 = vpop.f32.mrf.mxu0
    %v2086 = vpop.f32.mrf.mxu0
    %2087 = vdwg.mxu0
    %2088 = vrot.lane.b32.xlu0 %v1387, 104
    %v2089 = vpop.permute.xlu0 %2088
    %2090 = vrot.lane.b32.xlu0 %v1389, 104
    %v2091 = vpop.permute.xlu0 %2090
    %v2093 = vsel %vm210, %v2089, 0
    %v2096 = vsel %vm210, %v2091, 0
    %2098 = vmatprep.subr.bf16.mxu0 0
    %2099 = vmatpush1.bf16.xpose.msra.mxu0 0
    %2100 = vmatprep.subr.bf16.mxu0 0
    %2101 = vmatpush1.bf16.xpose.msra.mxu0 0
    %2102 = vmatprep.subr.bf16.mxu0 0
    %2103 = vmatpush1.bf16.xpose.msra.mxu0 0
    %2104 = vmatprep.subr.bf16.mxu0 0
    %2105 = vmatpush1.bf16.xpose.msra.mxu0 0
    %2106 = vmatprep.subr.bf16.mxu0 0
    %2107 = vmatpush1.bf16.xpose.msra.mxu0 0
    %2108 = vmatprep.subr.bf16.mxu0 0
    %2109 = vmatpush1.bf16.xpose.msra.mxu0 0
    %2110 = vmatprep.subr.bf16.mxu0 0
    %2111 = vmatpush1.bf16.xpose.msra.mxu0 0
    %2112 = vmatprep.subr.bf16.mxu0 0
    %2113 = vmatpush1.bf16.xpose.msra.mxu0 %v2096
    %2114 = vmatprep.subr.bf16.mxu0 0
    %2115 = vmatpush2.bf16.xpose.msra.mxu0 0
    %2116 = vmatprep.subr.bf16.mxu0 0
    %2117 = vmatpush2.bf16.xpose.msra.mxu0 0
    %2118 = vmatprep.subr.bf16.mxu0 0
    %2119 = vmatpush2.bf16.xpose.msra.mxu0 0
    %2120 = vmatprep.subr.bf16.mxu0 0
    %2121 = vmatpush2.bf16.xpose.msra.mxu0 0
    %2122 = vmatprep.subr.bf16.mxu0 0
    %2123 = vmatpush2.bf16.xpose.msra.mxu0 0
    %2124 = vmatprep.subr.bf16.mxu0 0
    %2125 = vmatpush2.bf16.xpose.msra.mxu0 0
    %2126 = vmatprep.subr.bf16.mxu0 0
    %2127 = vmatpush2.bf16.xpose.msra.mxu0 0
    %2128 = vmatprep.subr.bf16.mxu0 0
    %2129 = vmatpush2.bf16.xpose.msra.mxu0 0
    %2130 = vmatprep.mubr.bf16.mxu0 0
    %2131 = vmatmul.mubr.bf16.gmra.mxu0 %v2093
    %v2132 = vpop.f32.mrf.mxu0
    %v2133 = vadd.f32 0.0, %v2132
    %v2134 = vpop.f32.mrf.mxu0
    %v2135 = vpop.f32.mrf.mxu0
    %v2136 = vpop.f32.mrf.mxu0
    %2137 = vdwg.mxu0
    %v2138 = vsel %vm1117, %v2083, -inf
    %2139 = vmax.xlane.f32.xlu0 %v2138
    %v2140 = vpop.xlane.xlu0 %2139
    %v2141 = vsel %vm1117, %v2133, -inf
    %2142 = vmax.xlane.f32.xlu0 %v2141
    %v2143 = vpop.xlane.xlu0 %2142
    %v2144 = vsub.f32 %v2083, %v2140
    %v2145 = vsub.f32 %v2133, %v2143
    %v2146 = vmul.f32 %v2144, 1.442695
    %v2147 = vpow.pop %v2146
    %v2148 = vmul.f32 %v2145, 1.442695
    %v2149 = vpow.pop %v2148
    %v2150 = vsel %vm1117, %v2147, 0.0
    %2151 = vadd.xlane.f32.xlu0 %v2150
    %v2152 = vpop.xlane.xlu0 %2151
    %v2153 = vsel %vm1117, %v2149, 0.0
    %2154 = vadd.xlane.f32.xlu0 %v2153
    %v2155 = vpop.xlane.xlu0 %2154
    %v2156 = vrcp.pop %v2152
    %v2157 = vmul.f32 %v2147, %v2156
    %v2158 = vrcp.pop %v2155
    %v2159 = vmul.f32 %v2149, %v2158
    %v2160 = vpack.c.bf16 %v2157, %v2157
    %v2161 = vpack.c.bf16 %v2159, %v2159
    %2162 = vrot.lane.b32.xlu0 %v1390, 72
    %v2163 = vpop.permute.xlu0 %2162
    %v2166 = vsel %vm1117, %v2160, 0
    %2168 = vmatprep.subr.bf16.mxu0 0
    %2169 = vmatpush1.bf16.msra.mxu0 0
    %2170 = vmatprep.subr.bf16.mxu0 0
    %2171 = vmatpush1.bf16.msra.mxu0 0
    %2172 = vmatprep.subr.bf16.mxu0 0
    %2173 = vmatpush1.bf16.msra.mxu0 0
    %2174 = vmatprep.subr.bf16.mxu0 0
    %2175 = vmatpush1.bf16.msra.mxu0 0
    %2176 = vmatprep.subr.bf16.mxu0 0
    %2177 = vmatpush1.bf16.msra.mxu0 0
    %2178 = vmatprep.subr.bf16.mxu0 0
    %2179 = vmatpush1.bf16.msra.mxu0 0
    %2180 = vmatprep.subr.bf16.mxu0 0
    %2181 = vmatpush1.bf16.msra.mxu0 0
    %2182 = vmatprep.subr.bf16.mxu0 0
    %2183 = vmatpush1.bf16.msra.mxu0 %v2163
    %2184 = vmatprep.subr.bf16.mxu0 0
    %2185 = vmatpush2.bf16.msra.mxu0 0
    %2186 = vmatprep.subr.bf16.mxu0 0
    %2187 = vmatpush2.bf16.msra.mxu0 0
    %2188 = vmatprep.subr.bf16.mxu0 0
    %2189 = vmatpush2.bf16.msra.mxu0 0
    %2190 = vmatprep.subr.bf16.mxu0 0
    %2191 = vmatpush2.bf16.msra.mxu0 0
    %2192 = vmatprep.subr.bf16.mxu0 0
    %2193 = vmatpush2.bf16.msra.mxu0 0
    %2194 = vmatprep.subr.bf16.mxu0 0
    %2195 = vmatpush2.bf16.msra.mxu0 0
    %2196 = vmatprep.subr.bf16.mxu0 0
    %2197 = vmatpush2.bf16.msra.mxu0 0
    %2198 = vmatprep.subr.bf16.mxu0 0
    %2199 = vmatpush2.bf16.msra.mxu0 0
    %2200 = vmatprep.mubr.bf16.mxu0 0
    %2201 = vmatmul.mubr.bf16.gmra.mxu0 %v2166
    %v2202 = vpop.f32.mrf.mxu0
    %v2203 = vadd.f32 0.0, %v2202
    %v2204 = vpop.f32.mrf.mxu0
    %v2205 = vpop.f32.mrf.mxu0
    %v2206 = vpop.f32.mrf.mxu0
    %2207 = vdwg.mxu0
    %2208 = vrot.lane.b32.xlu0 %v1391, 72
    %v2209 = vpop.permute.xlu0 %2208
    %v2212 = vsel %vm1117, %v2161, 0
    %2214 = vmatprep.subr.bf16.mxu0 0
    %2215 = vmatpush1.bf16.msra.mxu0 0
    %2216 = vmatprep.subr.bf16.mxu0 0
    %2217 = vmatpush1.bf16.msra.mxu0 0
    %2218 = vmatprep.subr.bf16.mxu0 0
    %2219 = vmatpush1.bf16.msra.mxu0 0
    %2220 = vmatprep.subr.bf16.mxu0 0
    %2221 = vmatpush1.bf16.msra.mxu0 0
    %2222 = vmatprep.subr.bf16.mxu0 0
    %2223 = vmatpush1.bf16.msra.mxu0 0
    %2224 = vmatprep.subr.bf16.mxu0 0
    %2225 = vmatpush1.bf16.msra.mxu0 0
    %2226 = vmatprep.subr.bf16.mxu0 0
    %2227 = vmatpush1.bf16.msra.mxu0 0
    %2228 = vmatprep.subr.bf16.mxu0 0
    %2229 = vmatpush1.bf16.msra.mxu0 %v2209
    %2230 = vmatprep.subr.bf16.mxu0 0
    %2231 = vmatpush2.bf16.msra.mxu0 0
    %2232 = vmatprep.subr.bf16.mxu0 0
    %2233 = vmatpush2.bf16.msra.mxu0 0
    %2234 = vmatprep.subr.bf16.mxu0 0
    %2235 = vmatpush2.bf16.msra.mxu0 0
    %2236 = vmatprep.subr.bf16.mxu0 0
    %2237 = vmatpush2.bf16.msra.mxu0 0
    %2238 = vmatprep.subr.bf16.mxu0 0
    %2239 = vmatpush2.bf16.msra.mxu0 0
    %2240 = vmatprep.subr.bf16.mxu0 0
    %2241 = vmatpush2.bf16.msra.mxu0 0
    %2242 = vmatprep.subr.bf16.mxu0 0
    %2243 = vmatpush2.bf16.msra.mxu0 0
    %2244 = vmatprep.subr.bf16.mxu0 0
    %2245 = vmatpush2.bf16.msra.mxu0 0
    %2246 = vmatprep.mubr.bf16.mxu0 0
    %2247 = vmatmul.mubr.bf16.gmra.mxu0 %v2212
    %v2248 = vpop.f32.mrf.mxu0
    %v2249 = vadd.f32 0.0, %v2248
    %v2250 = vpop.f32.mrf.mxu0
    %v2251 = vpop.f32.mrf.mxu0
    %v2252 = vpop.f32.mrf.mxu0
    %2253 = vdwg.mxu0
    %2256 = vrot.lane.b32.xlu0 %v1771, 8
    %v2257 = vpop.permute.xlu0 %2256
    %2258 = vrot.lane.b32.xlu0 %v1817, 8
    %v2259 = vpop.permute.xlu0 %2258
    %2264 = vrot.lane.b32.xlu0 %v1987, 16
    %v2265 = vpop.permute.xlu0 %2264
    %2266 = vrot.lane.b32.xlu0 %v2033, 16
    %v2267 = vpop.permute.xlu0 %2266
    %2272 = vrot.lane.b32.xlu0 %v2203, 24
    %v2273 = vpop.permute.xlu0 %2272
    %2274 = vrot.lane.b32.xlu0 %v2249, 24
    %v2275 = vpop.permute.xlu0 %2274
    %v2278 = vsel %vm210, %v1550, %v2257
    %v2279 = vsel %vm210, %v1597, %v2259
    %v2280 = vsel %vm1117, %v2278, %v2265
    %v2281 = vsel %vm1117, %v2279, %v2267
    %v2282 = vsel %vm1120, %v2280, %v2273
    %v2283 = vsel %vm1120, %v2281, %v2275
    %v2284 = vpack.c.bf16 %v2283, %v2282
    %v2285 = vld [vmem:[%s2 + $0x4] sm:$0xf]
    %v2286 = vld [vmem:[%s2 + $0x10] sm:$0xf]
    %v2287 = vld [vmem:[%s2 + $0x1c] sm:$0xf]
    %v2288 = vld [vmem:[%s2 + $0x28] sm:$0xf]
    %v2289 = vld [vmem:[#allocation7 + $0xf] sm:$0x1]
    %v2290 = vlaneseq
    %v2291 = vshrl.u32 %v2290, 7
    %v2292 = vsub.s32 0, %v2291
    %v2293 = vrot.slane %v2289, %v2292
    %v2298 = vunpack.c.l.b16 %v2285
    %v2299 = vunpack.c.l.b16 %v2286
    %v2300 = vunpack.c.l.b16 %v2287
    %v2301 = vunpack.c.l.b16 %v2288
    %v2302 = vpack.c.b16 %v2299, %v2298
    %v2303 = vpack.c.b16 %v2301, %v2300
    %2304 = vrot.lane.b32.xlu0 %v2302, 32
    %v2305 = vpop.permute.xlu0 %2304
    %2306 = vrot.lane.b32.xlu0 %v2303, 32
    %v2307 = vpop.permute.xlu0 %2306
    %v2311 = vsel %vm69, %v2284, 0
    %2313 = vmatprep.subr.bf16.mxu0 0
    %2314 = vmatpush1.bf16.msra.mxu0 0
    %2315 = vmatprep.subr.bf16.mxu0 0
    %2316 = vmatpush1.bf16.msra.mxu0 0
    %2317 = vmatprep.subr.bf16.mxu0 0
    %2318 = vmatpush1.bf16.msra.mxu0 0
    %2319 = vmatprep.subr.bf16.mxu0 0
    %2320 = vmatpush1.bf16.msra.mxu0 0
    %2321 = vmatprep.subr.bf16.mxu0 0
    %2322 = vmatpush1.bf16.msra.mxu0 0
    %2323 = vmatprep.subr.bf16.mxu0 0
    %2324 = vmatpush1.bf16.msra.mxu0 0
    %2325 = vmatprep.subr.bf16.mxu0 0
    %2326 = vmatpush1.bf16.msra.mxu0 %v2307
    %2327 = vmatprep.subr.bf16.mxu0 0
    %2328 = vmatpush1.bf16.msra.mxu0 %v2305
    %2329 = vmatprep.subr.bf16.mxu0 0
    %2330 = vmatpush2.bf16.msra.mxu0 0
    %2331 = vmatprep.subr.bf16.mxu0 0
    %2332 = vmatpush2.bf16.msra.mxu0 0
    %2333 = vmatprep.subr.bf16.mxu0 0
    %2334 = vmatpush2.bf16.msra.mxu0 0
    %2335 = vmatprep.subr.bf16.mxu0 0
    %2336 = vmatpush2.bf16.msra.mxu0 0
    %2337 = vmatprep.subr.bf16.mxu0 0
    %2338 = vmatpush2.bf16.msra.mxu0 0
    %2339 = vmatprep.subr.bf16.mxu0 0
    %2340 = vmatpush2.bf16.msra.mxu0 0
    %2341 = vmatprep.subr.bf16.mxu0 0
    %2342 = vmatpush2.bf16.msra.mxu0 0
    %2343 = vmatprep.subr.bf16.mxu0 0
    %2344 = vmatpush2.bf16.msra.mxu0 0
    %2345 = vmatprep.mubr.bf16.mxu0 0
    %2346 = vmatmul.mubr.bf16.gmra.mxu0 %v2311
    %v2347 = vpop.f32.mrf.mxu0
    %v2348 = vadd.f32 %v2293, %v2347
    %v2349 = vpop.f32.mrf.mxu0
    %v2350 = vpop.f32.mrf.mxu0
    %v2351 = vadd.f32 %v2293, %v2350
    %v2352 = vpop.f32.mrf.mxu0
    %2353 = vdwg.mxu0
    %v2354 = vld [vmem:[%s2 + $0x8] sm:$0xf]
    %v2355 = vld [vmem:[%s2 + $0x14] sm:$0xf]
    %v2356 = vld [vmem:[%s2 + $0x20] sm:$0xf]
    %v2357 = vld [vmem:[%s2 + $0x2c] sm:$0xf]
    %v2358 = vpack.c.bf16 %v2351, %v2348
    %v2363 = vunpack.c.l.b16 %v2354
    %v2364 = vunpack.c.l.b16 %v2355
    %v2365 = vunpack.c.l.b16 %v2356
    %v2366 = vunpack.c.l.b16 %v2357
    %v2367 = vpack.c.b16 %v2364, %v2363
    %v2368 = vpack.c.b16 %v2366, %v2365
    %2369 = vrot.lane.b32.xlu0 %v2367, 96
    %v2370 = vpop.permute.xlu0 %2369
    %2371 = vrot.lane.b32.xlu0 %v2368, 96
    %v2372 = vpop.permute.xlu0 %2371
    %v2376 = vsel %vm69, %v2358, 0
    %2378 = vmatprep.subr.bf16.mxu0 0
    %2379 = vmatpush1.bf16.msra.mxu0 0
    %2380 = vmatprep.subr.bf16.mxu0 0
    %2381 = vmatpush1.bf16.msra.mxu0 0
    %2382 = vmatprep.subr.bf16.mxu0 0
    %2383 = vmatpush1.bf16.msra.mxu0 0
    %2384 = vmatprep.subr.bf16.mxu0 0
    %2385 = vmatpush1.bf16.msra.mxu0 0
    %2386 = vmatprep.subr.bf16.mxu0 0
    %2387 = vmatpush1.bf16.msra.mxu0 0
    %2388 = vmatprep.subr.bf16.mxu0 0
    %2389 = vmatpush1.bf16.msra.mxu0 0
    %2390 = vmatprep.subr.bf16.mxu0 0
    %2391 = vmatpush1.bf16.msra.mxu0 %v2372
    %2392 = vmatprep.subr.bf16.mxu0 0
    %2393 = vmatpush1.bf16.msra.mxu0 %v2370
    %2394 = vmatprep.subr.bf16.mxu0 0
    %2395 = vmatpush2.bf16.msra.mxu0 0
    %2396 = vmatprep.subr.bf16.mxu0 0
    %2397 = vmatpush2.bf16.msra.mxu0 0
    %2398 = vmatprep.subr.bf16.mxu0 0
    %2399 = vmatpush2.bf16.msra.mxu0 0
    %2400 = vmatprep.subr.bf16.mxu0 0
    %2401 = vmatpush2.bf16.msra.mxu0 0
    %2402 = vmatprep.subr.bf16.mxu0 0
    %2403 = vmatpush2.bf16.msra.mxu0 0
    %2404 = vmatprep.subr.bf16.mxu0 0
    %2405 = vmatpush2.bf16.msra.mxu0 0
    %2406 = vmatprep.subr.bf16.mxu0 0
    %2407 = vmatpush2.bf16.msra.mxu0 0
    %2408 = vmatprep.subr.bf16.mxu0 0
    %2409 = vmatpush2.bf16.msra.mxu0 0
    %2410 = vmatprep.mubr.bf16.mxu0 0
    %2411 = vmatmul.mubr.bf16.gmra.mxu0 %v2376
    %v2412 = vpop.f32.mrf.mxu0
    %v2413 = vadd.f32 0.0, %v2412
    %v2414 = vpop.f32.mrf.mxu0
    %v2415 = vpop.f32.mrf.mxu0
    %v2416 = vadd.f32 0.0, %v2415
    %v2417 = vpop.f32.mrf.mxu0
    %2418 = vdwg.mxu0
    %2421 = vmatprep.subr.bf16.mxu0 0
    %2422 = vmatpush1.bf16.msra.mxu0 0
    %2423 = vmatprep.subr.bf16.mxu0 0
    %2424 = vmatpush1.bf16.msra.mxu0 0
    %2425 = vmatprep.subr.bf16.mxu0 0
    %2426 = vmatpush1.bf16.msra.mxu0 0
    %2427 = vmatprep.subr.bf16.mxu0 0
    %2428 = vmatpush1.bf16.msra.mxu0 0
    %2429 = vmatprep.subr.bf16.mxu0 0
    %2430 = vmatpush1.bf16.msra.mxu0 0
    %2431 = vmatprep.subr.bf16.mxu0 0
    %2432 = vmatpush1.bf16.msra.mxu0 0
    %2433 = vmatprep.subr.bf16.mxu0 0
    %2434 = vmatpush1.bf16.msra.mxu0 %v2368
    %2435 = vmatprep.subr.bf16.mxu0 0
    %2436 = vmatpush1.bf16.msra.mxu0 %v2367
    %2437 = vmatprep.subr.bf16.mxu0 0
    %2438 = vmatpush2.bf16.msra.mxu0 0
    %2439 = vmatprep.subr.bf16.mxu0 0
    %2440 = vmatpush2.bf16.msra.mxu0 0
    %2441 = vmatprep.subr.bf16.mxu0 0
    %2442 = vmatpush2.bf16.msra.mxu0 0
    %2443 = vmatprep.subr.bf16.mxu0 0
    %2444 = vmatpush2.bf16.msra.mxu0 0
    %2445 = vmatprep.subr.bf16.mxu0 0
    %2446 = vmatpush2.bf16.msra.mxu0 0
    %2447 = vmatprep.subr.bf16.mxu0 0
    %2448 = vmatpush2.bf16.msra.mxu0 0
    %2449 = vmatprep.subr.bf16.mxu0 0
    %2450 = vmatpush2.bf16.msra.mxu0 0
    %2451 = vmatprep.subr.bf16.mxu0 0
    %2452 = vmatpush2.bf16.msra.mxu0 0
    %2453 = vmatprep.mubr.bf16.mxu0 0
    %2454 = vmatmul.mubr.bf16.gmra.mxu0 %v1258
    %v2455 = vpop.f32.mrf.mxu0
    %v2456 = vadd.f32 %v2413, %v2455
    %v2457 = vpop.f32.mrf.mxu0
    %v2458 = vpop.f32.mrf.mxu0
    %v2459 = vadd.f32 %v2416, %v2458
    %v2460 = vpop.f32.mrf.mxu0
    %2461 = vdwg.mxu0
    %v2462 = vld [vmem:[#allocation7 + $0x10] sm:$0x1]
    %v2463 = vlaneseq
    %v2464 = vshrl.u32 %v2463, 7
    %v2465 = vsub.s32 0, %v2464
    %v2466 = vrot.slane %v2462, %v2465
    %v2467 = vadd.f32 %v2456, %v2466
    %v2468 = vadd.f32 %v2459, %v2466
    %v2469 = vxor.u32 %v2467, 2147483648
    %v2470 = vxor.u32 %v2468, 2147483648
    %v2471 = vmul.f32 %v2469, 1.442695
    %v2472 = vpow.pop %v2471
    %v2473 = vmul.f32 %v2470, 1.442695
    %v2474 = vpow.pop %v2473
    %v2475 = vadd.f32 %v2472, 1.0
    %v2476 = vadd.f32 %v2474, 1.0
    %v2477 = vrcp.pop %v2475
    %v2478 = vmul.f32 1.0, %v2477
    %v2479 = vrcp.pop %v2476
    %v2480 = vmul.f32 1.0, %v2479
    %v2481 = vmul.f32 %v2478, %v1233
    %v2482 = vmul.f32 %v2480, %v1234
    %v2483 = vsub.f32 1.0, %v2478
    %v2484 = vsub.f32 1.0, %v2480
    %v2485 = vmul.f32 %v2483, %v2348
    %v2486 = vmul.f32 %v2484, %v2351
    %v2487 = vadd.f32 %v2481, %v2485
    %v2488 = vadd.f32 %v2482, %v2486
    %v2489 = vsel %vm69, %v2487, 0.0
    %2490 = vadd.xlane.f32.xlu0 %v2489
    %v2491 = vpop.xlane.xlu0 %2490
    %v2492 = vsel %vm69, %v2488, 0.0
    %2493 = vadd.xlane.f32.xlu0 %v2492
    %v2494 = vpop.xlane.xlu0 %2493
    %v2495 = vmul.f32 %v2491, %v76
    %v2496 = vmul.f32 %v2494, %v76
    %v2497 = vsub.f32 %v2487, %v2495
    %v2498 = vsub.f32 %v2488, %v2496
    %v2499 = vmul.f32 %v2497, %v2497
    %v2500 = vmul.f32 %v2498, %v2498
    %v2501 = vsel %vm69, %v2499, 0.0
    %2502 = vadd.xlane.f32.xlu0 %v2501
    %v2503 = vpop.xlane.xlu0 %2502
    %v2504 = vsel %vm69, %v2500, 0.0
    %2505 = vadd.xlane.f32.xlu0 %v2504
    %v2506 = vpop.xlane.xlu0 %2505
    %v2507 = vmul.f32 %v2503, %v76
    %v2508 = vmul.f32 %v2506, %v76
    %v2509 = vadd.f32 %v2507, 1e-05
    %v2510 = vadd.f32 %v2508, 1e-05
    %v2511 = vrsqrt.pop %v2509
    %v2512 = vrsqrt.pop %v2510
    %v2513 = vmul.f32 %v2497, %v2511
    %v2514 = vmul.f32 %v2498, %v2512
    %v2515 = vld [vmem:[#allocation7 + $0x6] sm:$0x1]
    %v2516 = vlaneseq
    %v2517 = vshrl.u32 %v2516, 7
    %v2518 = vsub.s32 0, %v2517
    %v2519 = vrot.slane %v2515, %v2518
    %v2520 = vmul.f32 %v2513, %v2519
    %v2521 = vmul.f32 %v2514, %v2519
    %v2522 = vld [vmem:[#allocation7 + $0x7] sm:$0x1]
    %v2523 = vlaneseq
    %v2524 = vshrl.u32 %v2523, 7
    %v2525 = vsub.s32 0, %v2524
    %v2526 = vrot.slane %v2522, %v2525
    %v2527 = vadd.f32 %v2520, %v2526
    %v2528 = vadd.f32 %v2521, %v2526
    %v2529 = vadd.f32 %v1193, %v2527
    %v2530 = vadd.f32 %v1194, %v2528
    %v2531 = vsel %vm69, %v2529, 0.0
    %2532 = vadd.xlane.f32.xlu0 %v2531
    %v2533 = vpop.xlane.xlu0 %2532
    %v2534 = vsel %vm69, %v2530, 0.0
    %2535 = vadd.xlane.f32.xlu0 %v2534
    %v2536 = vpop.xlane.xlu0 %2535
    %v2537 = vmul.f32 %v2533, %v76
    %v2538 = vmul.f32 %v2536, %v76
    %v2539 = vsub.f32 %v2529, %v2537
    %v2540 = vsub.f32 %v2530, %v2538
    %v2541 = vmul.f32 %v2539, %v2539
    %v2542 = vmul.f32 %v2540, %v2540
    %v2543 = vsel %vm69, %v2541, 0.0
    %2544 = vadd.xlane.f32.xlu0 %v2543
    %v2545 = vpop.xlane.xlu0 %2544
    %v2546 = vsel %vm69, %v2542, 0.0
    %2547 = vadd.xlane.f32.xlu0 %v2546
    %v2548 = vpop.xlane.xlu0 %2547
    %v2549 = vmul.f32 %v2545, %v76
    %v2550 = vmul.f32 %v2548, %v76
    %v2551 = vadd.f32 %v2549, 1e-05
    %v2552 = vadd.f32 %v2550, 1e-05
    %v2553 = vrsqrt.pop %v2551
    %v2554 = vrsqrt.pop %v2552
    %v2555 = vmul.f32 %v2539, %v2553
    %v2556 = vmul.f32 %v2540, %v2554
    %v2557 = vld [vmem:[#allocation7 + $0x4] sm:$0x1]
    %v2558 = vlaneseq
    %v2559 = vshrl.u32 %v2558, 7
    %v2560 = vsub.s32 0, %v2559
    %v2561 = vrot.slane %v2557, %v2560
    %v2562 = vmul.f32 %v2555, %v2561
    %v2563 = vmul.f32 %v2556, %v2561
    %v2564 = vld [vmem:[#allocation7 + $0x5] sm:$0x1]
    %v2565 = vlaneseq
    %v2566 = vshrl.u32 %v2565, 7
    %v2567 = vsub.s32 0, %v2566
    %v2568 = vrot.slane %v2564, %v2567
    %v2569 = vadd.f32 %v2562, %v2568
    %v2570 = vadd.f32 %v2563, %v2568
    %v2571 = vld [vmem:[#allocation7 + $0x11] sm:$0x1]
    %v2572 = vld [vmem:[#allocation7 + $0x12] sm:$0x1]
    %2574 = vrot.lane.b32.xlu0 %v2572, 32
    %v2575 = vpop.permute.xlu0 %2574
    %v2577 = vsel %vm69, %v2571, %v2575
    %v2578 = vpack.c.bf16 %v2570, %v2569
    %v2579 = vlaneseq
    %v2580 = vshrl.u32 %v2579, 7
    %v2581 = vsub.s32 0, %v2580
    %v2582 = vrot.slane %v2577, %v2581
    %2583 = vrot.lane.b32.xlu0 %v2367, 64
    %v2584 = vpop.permute.xlu0 %2583
    %2585 = vrot.lane.b32.xlu0 %v2368, 64
    %v2586 = vpop.permute.xlu0 %2585
    %v2590 = vsel %vm69, %v2578, 0
    %2592 = vmatprep.subr.bf16.mxu0 0
    %2593 = vmatpush1.bf16.msra.mxu0 0
    %2594 = vmatprep.subr.bf16.mxu0 0
    %2595 = vmatpush1.bf16.msra.mxu0 0
    %2596 = vmatprep.subr.bf16.mxu0 0
    %2597 = vmatpush1.bf16.msra.mxu0 0
    %2598 = vmatprep.subr.bf16.mxu0 0
    %2599 = vmatpush1.bf16.msra.mxu0 0
    %2600 = vmatprep.subr.bf16.mxu0 0
    %2601 = vmatpush1.bf16.msra.mxu0 0
    %2602 = vmatprep.subr.bf16.mxu0 0
    %2603 = vmatpush1.bf16.msra.mxu0 0
    %2604 = vmatprep.subr.bf16.mxu0 0
    %2605 = vmatpush1.bf16.msra.mxu0 %v2586
    %2606 = vmatprep.subr.bf16.mxu0 0
    %2607 = vmatpush1.bf16.msra.mxu0 %v2584
    %2608 = vmatprep.subr.bf16.mxu0 0
    %2609 = vmatpush2.bf16.msra.mxu0 0
    %2610 = vmatprep.subr.bf16.mxu0 0
    %2611 = vmatpush2.bf16.msra.mxu0 0
    %2612 = vmatprep.subr.bf16.mxu0 0
    %2613 = vmatpush2.bf16.msra.mxu0 0
    %2614 = vmatprep.subr.bf16.mxu0 0
    %2615 = vmatpush2.bf16.msra.mxu0 0
    %2616 = vmatprep.subr.bf16.mxu0 0
    %2617 = vmatpush2.bf16.msra.mxu0 0
    %2618 = vmatprep.subr.bf16.mxu0 0
    %2619 = vmatpush2.bf16.msra.mxu0 0
    %2620 = vmatprep.subr.bf16.mxu0 0
    %2621 = vmatpush2.bf16.msra.mxu0 0
    %2622 = vmatprep.subr.bf16.mxu0 0
    %2623 = vmatpush2.bf16.msra.mxu0 0
    %2624 = vmatprep.mubr.bf16.mxu0 0
    %2625 = vmatmul.mubr.bf16.gmra.mxu0 %v2590
    %v2626 = vpop.f32.mrf.mxu0
    %v2627 = vadd.f32 %v2582, %v2626
    %v2628 = vpop.f32.mrf.mxu0
    %v2629 = vpop.f32.mrf.mxu0
    %v2630 = vadd.f32 %v2582, %v2629
    %v2631 = vpop.f32.mrf.mxu0
    %2632 = vdwg.mxu0
    %v2633 = vmul.f32 %v2627, 0.5
    %v2634 = vmul.f32 %v2630, 0.5
    %v2635 = vmul.f32 %v2627, 0.70710677
    %v2636 = vmul.f32 %v2630, 0.70710677
    %v2637 = vand.u32 2147483647, %v2635
    %v2638 = vand.u32 2147483647, %v2636
    %v2639 = vmul.f32 %v2637, 0.3275911
    %v2640 = vmul.f32 %v2638, 0.3275911
    %v2641 = vadd.f32 %v2639, 1.0
    %v2642 = vadd.f32 %v2640, 1.0
    %v2643 = vrcp.pop %v2641
    %v2644 = vmul.f32 1.0, %v2643
    %v2645 = vrcp.pop %v2642
    %v2646 = vmul.f32 1.0, %v2645
    %v2647 = vmul.f32 %v2644, 1.0614054
    %v2648 = vmul.f32 %v2646, 1.0614054
    %v2649 = vadd.f32 %v2647, -1.4531521
    %v2650 = vadd.f32 %v2648, -1.4531521
    %v2651 = vmul.f32 %v2649, %v2644
    %v2652 = vmul.f32 %v2650, %v2646
    %v2653 = vadd.f32 %v2651, 1.4214138
    %v2654 = vadd.f32 %v2652, 1.4214138
    %v2655 = vmul.f32 %v2653, %v2644
    %v2656 = vmul.f32 %v2654, %v2646
    %v2657 = vadd.f32 %v2655, -0.28449672
    %v2658 = vadd.f32 %v2656, -0.28449672
    %v2659 = vmul.f32 %v2657, %v2644
    %v2660 = vmul.f32 %v2658, %v2646
    %v2661 = vadd.f32 %v2659, 0.2548296
    %v2662 = vadd.f32 %v2660, 0.2548296
    %v2663 = vmul.f32 %v2661, %v2644
    %v2664 = vmul.f32 %v2662, %v2646
    %v2665 = vsub.f32 0.0, %v2637
    %v2666 = vsub.f32 0.0, %v2638
    %v2667 = vmul.f32 %v2665, %v2637
    %v2668 = vmul.f32 %v2666, %v2638
    %v2669 = vmul.f32 %v2667, 1.442695
    %v2670 = vpow.pop %v2669
    %v2671 = vmul.f32 %v2668, 1.442695
    %v2672 = vpow.pop %v2671
    %v2673 = vmul.f32 %v2663, %v2670
    %v2674 = vmul.f32 %v2664, %v2672
    %v2675 = vsub.f32 1.0, %v2673
    %v2676 = vsub.f32 1.0, %v2674
    %vm2677 = vcmp.ge.f32.partialorder %v2635, 0.0
    %vm2678 = vcmp.ge.f32.partialorder %v2636, 0.0
    %v2679 = vsub.f32 0.0, %v2675
    %v2680 = vsub.f32 0.0, %v2676
    %v2681 = vsel %vm2677, %v2675, %v2679
    %v2682 = vsel %vm2678, %v2676, %v2680
    %v2683 = vadd.f32 %v2681, 1.0
    %v2684 = vadd.f32 %v2682, 1.0
    %v2685 = vmul.f32 %v2633, %v2683
    %v2686 = vmul.f32 %v2634, %v2684
    %v2687 = vpack.c.bf16 %v2686, %v2685
    %v2688 = vld [vmem:[%s3] sm:$0xf]
    %v2689 = vld [vmem:[%s3 + $0x4] sm:$0xf]
    %v2690 = vld [vmem:[%s3 + $0x8] sm:$0xf]
    %v2691 = vld [vmem:[%s3 + $0xc] sm:$0xf]
    %v2692 = vld [vmem:[%s3 + $0x10] sm:$0xf]
    %v2693 = vld [vmem:[%s3 + $0x14] sm:$0xf]
    %v2694 = vld [vmem:[%s3 + $0x18] sm:$0xf]
    %v2695 = vld [vmem:[%s3 + $0x1c] sm:$0xf]
    %v2696 = vld [vmem:[#allocation7 + $0x13] sm:$0x1]
    %v2697 = vlaneseq
    %v2698 = vshrl.u32 %v2697, 7
    %v2699 = vsub.s32 0, %v2698
    %v2700 = vrot.slane %v2696, %v2699
    %v2709 = vunpack.c.l.b16 %v2688
    %v2710 = vunpack.c.l.b16 %v2689
    %v2711 = vunpack.c.l.b16 %v2690
    %v2712 = vunpack.c.l.b16 %v2691
    %v2713 = vunpack.c.l.b16 %v2692
    %v2714 = vunpack.c.l.b16 %v2693
    %v2715 = vunpack.c.l.b16 %v2694
    %v2716 = vunpack.c.l.b16 %v2695
    %v2717 = vpack.c.b16 %v2710, %v2709
    %v2718 = vpack.c.b16 %v2712, %v2711
    %v2719 = vpack.c.b16 %v2714, %v2713
    %v2720 = vpack.c.b16 %v2716, %v2715
    %vm2725 = vcmask 523264
    %v2727 = vsel %vm2725, %v2687, 0
    %2729 = vmatprep.subr.bf16.mxu0 0
    %2730 = vmatpush1.bf16.msra.mxu0 0
    %2731 = vmatprep.subr.bf16.mxu0 0
    %2732 = vmatpush1.bf16.msra.mxu0 0
    %2733 = vmatprep.subr.bf16.mxu0 0
    %2734 = vmatpush1.bf16.msra.mxu0 0
    %2735 = vmatprep.subr.bf16.mxu0 0
    %2736 = vmatpush1.bf16.msra.mxu0 0
    %2737 = vmatprep.subr.bf16.mxu0 0
    %2738 = vmatpush1.bf16.msra.mxu0 %v2720
    %2739 = vmatprep.subr.bf16.mxu0 0
    %2740 = vmatpush1.bf16.msra.mxu0 %v2719
    %2741 = vmatprep.subr.bf16.mxu0 0
    %2742 = vmatpush1.bf16.msra.mxu0 %v2718
    %2743 = vmatprep.subr.bf16.mxu0 0
    %2744 = vmatpush1.bf16.msra.mxu0 %v2717
    %2745 = vmatprep.subr.bf16.mxu0 0
    %2746 = vmatpush2.bf16.msra.mxu0 0
    %2747 = vmatprep.subr.bf16.mxu0 0
    %2748 = vmatpush2.bf16.msra.mxu0 0
    %2749 = vmatprep.subr.bf16.mxu0 0
    %2750 = vmatpush2.bf16.msra.mxu0 0
    %2751 = vmatprep.subr.bf16.mxu0 0
    %2752 = vmatpush2.bf16.msra.mxu0 0
    %2753 = vmatprep.subr.bf16.mxu0 0
    %2754 = vmatpush2.bf16.msra.mxu0 0
    %2755 = vmatprep.subr.bf16.mxu0 0
    %2756 = vmatpush2.bf16.msra.mxu0 0
    %2757 = vmatprep.subr.bf16.mxu0 0
    %2758 = vmatpush2.bf16.msra.mxu0 0
    %2759 = vmatprep.subr.bf16.mxu0 0
    %2760 = vmatpush2.bf16.msra.mxu0 0
    %2761 = vmatprep.mubr.bf16.mxu0 0
    %2762 = vmatmul.mubr.bf16.gmra.mxu0 %v2727
    %v2763 = vpop.f32.mrf.mxu0
    %v2764 = vadd.f32 %v2700, %v2763
    %v2765 = vpop.f32.mrf.mxu0
    %v2766 = vpop.f32.mrf.mxu0
    %v2767 = vadd.f32 %v2700, %v2766
    %v2768 = vpop.f32.mrf.mxu0
    %2769 = vdwg.mxu0
    %v2770 = vadd.f32 %v2529, %v2764
    %v2771 = vadd.f32 %v2530, %v2767
    %2772 = vst.msk [vmem:[#allocation8] sm:$0xff] %vm69, %v2770
    %2773 = vst.msk [vmem:[#allocation8 + $0x8] sm:$0xff] %vm69, %v2771
    // Predicated region
    $region34: #{fwd.1} parent=1 // pred_check
      _
    $region35: #{fwd.1} parent=1 // pred_check_branch
      %2775 = sbr.rel (0) target = $region37
    $region36: #{fwd.1} parent=1 // pred_region
      %s2777 = ssub.s32 256, 256
      %2778 = vsyncadd [#allocation4], %s2777
      %s2779 = sshll.u32 [#allocation8], 4
      %s2780 = int_to_ptr.vmem [resolvable:$true] %s2779
      %2785 = dma.vmem_to_hbm [thread:$0]  %s2780, 256, %s5, [#allocation4], 128, 128, 8
    $region37: #{fwd.1} parent=1 // pred_fallthru
      _
    // Predicated region
    $region38: #{fwd.1} parent=1 // pred_check
      _
    $region39: #{fwd.1} parent=1 // pred_check_branch
      %2787 = sbr.rel (0) target = $region41
    $region40: #{fwd.1} parent=1 // pred_region
      %2788 = dma.done [#allocation4], 256
    $region41: #{fwd.1} parent=1 // pred_fallthru
      _
    %2789 = vsyncpa [#allocation3], 1
    %2790 = vsyncpa [#allocation6], 1
    %2791 = vsyncpa [#allocation4], 1

</llo_original>
